<compile_context>
chip_gen: v7x
topology: tpu7x:2x2x1
jax: 0.10.0
libtpu: 0.0.40
codegen_flags: <defaults>
</compile_context>

<pallas_src>
import math
import functools

import numpy as np
import jax
import jax.numpy as jnp
from jax import lax
from jax.experimental import pallas as pl
from jax.experimental.pallas import tpu as pltpu


def _layernorm(x, w, b, eps=1e-5):
    mu = jnp.mean(x, axis=-1, keepdims=True)
    var = jnp.mean((x - mu) ** 2, axis=-1, keepdims=True)
    return (x - mu) * lax.rsqrt(var + eps) * w + b


# ------------------------------ kernel ------------------------------
def encoder_layer_kernel(
    x_ref,                       # (Bt, S, D) f32
    wqkv_ref, bqkv_ref,          # (D, 3D) bf16, (1, 3D) f32  (scale folded into Q)
    wo_ref, bo_ref,              # (D, D)  bf16, (1, D)  f32
    ln1w_ref, ln1b_ref,          # (1, D) f32
    w1_ref, b1_ref,              # (D, F) bf16, (1, F) f32
    w2_ref, b2_ref,              # (F, D) bf16, (1, D) f32
    ln2w_ref, ln2b_ref,          # (1, D) f32
    out_ref,                     # (Bt, S, D) f32
    *, nhead,
):
    Bt, S, D = x_ref.shape
    hd = D // nhead
    N = Bt * S

    # Fold the batch tile into the matmul row dimension (bigger MXU M dim).
    x = x_ref[...].astype(jnp.float32).reshape(N, D)

    # ---- fused QKV projection: one lane-dense bf16 matmul, f32 accumulate ----
    qkv = jnp.dot(x.astype(jnp.bfloat16), wqkv_ref[...],
                  preferred_element_type=jnp.float32) + bqkv_ref[...]   # (N, 3D)

    # ---- per-head attention (scale already folded into the Q weights) ----
    # Per-head loop keeps only one head's (Bt,S,S) scores live and fuses p@v
    # right after the softmax.
    o_heads = []
    for h in range(nhead):
        lo = h * hd
        q = qkv[:, lo:lo + hd].reshape(Bt, S, hd).astype(jnp.bfloat16)
        k = qkv[:, D + lo:D + lo + hd].reshape(Bt, S, hd).astype(jnp.bfloat16)
        v = qkv[:, 2 * D + lo:2 * D + lo + hd].reshape(Bt, S, hd).astype(jnp.bfloat16)

        s = jnp.einsum("bqd,bkd->bqk", q, k,
                       preferred_element_type=jnp.float32)              # (Bt,S,S)
        s = s - jnp.max(s, axis=-1, keepdims=True)
        p = jnp.exp(s)
        p = p * pl.reciprocal(jnp.sum(p, axis=-1, keepdims=True), approx=True)
        o = jnp.einsum("bqk,bkd->bqd", p.astype(jnp.bfloat16), v,
                       preferred_element_type=jnp.float32)              # (Bt,S,hd)
        o_heads.append(o.reshape(N, hd))

    # head -> lane concat, then one full-contraction (K = D) output projection
    o = jnp.concatenate(o_heads, axis=-1)                               # (N, D)
    attn = jnp.dot(o.astype(jnp.bfloat16), wo_ref[...],
                   preferred_element_type=jnp.float32) + bo_ref[...]    # (N, D)

    # dropout1 == identity (eval mode)
    x = _layernorm(x + attn, ln1w_ref[...], ln1b_ref[...])

    # ---- feed-forward block (default n_ff_layers == 2) ----
    h1 = jnp.dot(x.astype(jnp.bfloat16), w1_ref[...],
                 preferred_element_type=jnp.float32) + b1_ref[...]      # (N, F)
    h1 = jnp.maximum(h1, 0.0)
    ff = jnp.dot(h1.astype(jnp.bfloat16), w2_ref[...],
                 preferred_element_type=jnp.float32) + b2_ref[...]      # (N, D)

    # dropout2 == identity (eval mode)
    x = _layernorm(x + ff, ln2w_ref[...], ln2b_ref[...])

    out_ref[...] = x.reshape(Bt, S, D).astype(out_ref.dtype)


# ------------------------------ tiling heuristics ------------------------------
def _workingset_bytes(block_b, S, D, F):
    """Rough per-grid-step VMEM working set (bf16 weights, f32 activations)."""
    N = block_b * S
    w = 2 * (3 * D * D + D * D + D * F + F * D)       # bf16 weights
    b = 4 * (3 * D + D + F + D + 4 * D)               # f32 biases + LN params
    act = 4 * N * (D + 3 * D + D + D + F)             # x, qkv, o, x1, ffn hidden
    act += 4 * 2 * block_b * S * S                    # one head's scores + probs
    io = 4 * 2 * 2 * N * D                            # double-buffered x / out tiles
    return w + b + act + io


def _choose_block_b(B, S, D, F, budget_bytes=28 * 2**20):
    """Largest batch tile whose working set fits ~half of v7x VMEM, while
    keeping >= 2 grid steps so the 'parallel' axis can shard over 2 TCs."""
    for d in range(B, 0, -1):
        if B % d != 0:
            continue
        if B >= 2 and B // d < 2:
            continue
        if _workingset_bytes(d, S, D, F) <= budget_bytes:
            return d
    return 1


# ------------------------------ wrapper ------------------------------
def run_encoder_layer(x, kparams, nhead, *, single_buffer_weights=True):
    B, S, D = x.shape
    F = kparams["w1"].shape[1]

    block_b = _choose_block_b(B, S, D, F)
    grid = (B // block_b,)

    # Constant-index weight blocks do not need double buffering.
    weight_mode = pl.Buffered(1) if single_buffer_weights else None

    def weight_spec(a):
        nd = a.ndim
        return pl.BlockSpec(a.shape, lambda b, _n=nd: (0,) * _n,
                            pipeline_mode=weight_mode)

    args = [
        x,
        kparams["wqkv"], kparams["bqkv"], kparams["wo"], kparams["bo"],
        kparams["ln1w"], kparams["ln1b"],
        kparams["w1"], kparams["b1"], kparams["w2"], kparams["b2"],
        kparams["ln2w"], kparams["ln2b"],
    ]
    in_specs = [pl.BlockSpec((block_b, S, D), lambda b: (b, 0, 0))]
    in_specs += [weight_spec(a) for a in args[1:]]

    ws = _workingset_bytes(block_b, S, D, F)
    vmem_limit = int(min(max(2 * ws, 32 * 2**20), 60 * 2**20))  # v7x-safe cap

    call = pl.pallas_call(
        functools.partial(encoder_layer_kernel, nhead=nhead),
        out_shape=jax.ShapeDtypeStruct((B, S, D), jnp.float32),
        grid=grid,
        in_specs=in_specs,
        out_specs=pl.BlockSpec((block_b, S, D), lambda b: (b, 0, 0)),
        compiler_params=pltpu.CompilerParams(
            dimension_semantics=("parallel",),
            vmem_limit_bytes=vmem_limit,
        ),
    )
    return call(*args)


def encoder_layer(x, kparams, nhead):
    try:
        out = run_encoder_layer(x, kparams, nhead, single_buffer_weights=True)
        return jax.block_until_ready(out)
    except Exception:
        # Fallback if pl.Buffered(1) single-buffering is unsupported here.
        out = run_encoder_layer(x, kparams, nhead, single_buffer_weights=False)
        return jax.block_until_ready(out)


# -------------- host-side weight preparation (layout plumbing) --------------
def prepare_params(p, nhead):
    """PyTorch-style params -> kernel layout: fused [in, out] QKV weights (bf16,
    attention scale folded into Q), pre-transposed bf16 matmul weights, f32
    biases / LayerNorm params."""
    D = p["opw"].shape[0]
    hd = D // nhead
    scale = 1.0 / math.sqrt(hd)

    ipw, ipb = p["ipw"], p["ipb"]                       # (3D, D), (3D,)
    wq = ipw[:D].T * scale                              # fold 1/sqrt(hd) into Q
    wk = ipw[D:2 * D].T
    wv = ipw[2 * D:].T
    wqkv = jnp.concatenate([wq, wk, wv], axis=1).astype(jnp.bfloat16)   # (D, 3D)
    bqkv = jnp.concatenate([ipb[:D] * scale, ipb[D:]]).reshape(1, 3 * D)

    return {
        "wqkv": wqkv, "bqkv": bqkv,
        "wo": p["opw"].T.astype(jnp.bfloat16), "bo": p["opb"].reshape(1, D),
        "ln1w": p["ln1w"].reshape(1, D), "ln1b": p["ln1b"].reshape(1, D),
        "w1": p["w1"].T.astype(jnp.bfloat16), "b1": p["b1"].reshape(1, -1),
        "w2": p["w2"].T.astype(jnp.bfloat16), "b2": p["b2"].reshape(1, -1),
        "ln2w": p["ln2w"].reshape(1, D), "ln2b": p["ln2b"].reshape(1, D),
    }


# -------------- plain-JAX reference (PyTorch semantics, eval mode) --------------
def reference_layer(x, p, nhead):
    B, S, D = x.shape
    hd = D // nhead
    scale = 1.0 / math.sqrt(hd)
    qkv = x @ p["ipw"].T + p["ipb"]
    q, k, v = qkv[..., 0:D], qkv[..., D:2 * D], qkv[..., 2 * D:]
    qh = q.reshape(B, S, nhead, hd).transpose(0, 2, 1, 3)
    kh = k.reshape(B, S, nhead, hd).transpose(0, 2, 1, 3)
    vh = v.reshape(B, S, nhead, hd).transpose(0, 2, 1, 3)
    s = jnp.einsum("bhqd,bhkd->bhqk", qh, kh) * scale
    pr = jax.nn.softmax(s, axis=-1)
    a = jnp.einsum("bhqk,bhkd->bhqd", pr, vh).transpose(0, 2, 1, 3).reshape(B, S, D)
    a = a @ p["opw"].T + p["opb"]
    x = _layernorm(x + a, p["ln1w"], p["ln1b"])
    ff = jnp.maximum(x @ p["w1"].T + p["b1"], 0.0)
    ff = ff @ p["w2"].T + p["b2"]
    return _layernorm(x + ff, p["ln2w"], p["ln2b"])


# ------------------------------ params ------------------------------
def make_params(key, d_model, dim_ff):
    ks = iter(jax.random.split(key, 16))

    def w(shape, s=0.05):
        return jax.random.normal(next(ks), shape, jnp.float32) * s

    return {
        "ipw": w((3 * d_model, d_model)),
        "ipb": w((3 * d_model,), 0.01),
        "opw": w((d_model, d_model)),
        "opb": w((d_model,), 0.01),
        "ln1w": jnp.ones((d_model,), jnp.float32),
        "ln1b": jnp.zeros((d_model,), jnp.float32),
        "w1": w((dim_ff, d_model)),
        "b1": w((dim_ff,), 0.01),
        "w2": w((d_model, dim_ff)),
        "b2": w((d_model,), 0.01),
        "ln2w": jnp.ones((d_model,), jnp.float32),
        "ln2b": jnp.zeros((d_model,), jnp.float32),
    }


if __name__ == "__main__":
    B, S = 2, 8
    d_model, nhead, dim_ff = 32, 4, 64

    key = jax.random.PRNGKey(0)
    kx, kp = jax.random.split(key)
    x = jax.random.normal(kx, (B, S, d_model), jnp.float32)

    torch_params = make_params(kp, d_model, dim_ff)
    kernel_params = prepare_params(torch_params, nhead)

    out = encoder_layer(x, kernel_params, nhead)
    out = jax.block_until_ready(out)

    ref = reference_layer(x, torch_params, nhead)
    # bf16 matmul operands (f32 accumulation) + approx EUP reciprocal in the
    # softmax -> slightly looser tolerance than a pure-f32 comparison.
    np.testing.assert_allclose(np.asarray(out), np.asarray(ref), rtol=3e-2, atol=3e-2)

    print("KERNEL_OK")
</pallas_src>

<mosaic_0001>
module attributes {stable_mosaic.version = 11 : i64} {
  func.func @encoder_layer_kernel(%arg0: i32, %arg1: memref<1x8x32xf32, #tpu.memory_space<vmem>>, %arg2: memref<32x96xbf16, #tpu.memory_space<vmem>>, %arg3: memref<1x96xf32, #tpu.memory_space<vmem>>, %arg4: memref<32x32xbf16, #tpu.memory_space<vmem>>, %arg5: memref<1x32xf32, #tpu.memory_space<vmem>>, %arg6: memref<1x32xf32, #tpu.memory_space<vmem>>, %arg7: memref<1x32xf32, #tpu.memory_space<vmem>>, %arg8: memref<32x64xbf16, #tpu.memory_space<vmem>>, %arg9: memref<1x64xf32, #tpu.memory_space<vmem>>, %arg10: memref<64x32xbf16, #tpu.memory_space<vmem>>, %arg11: memref<1x32xf32, #tpu.memory_space<vmem>>, %arg12: memref<1x32xf32, #tpu.memory_space<vmem>>, %arg13: memref<1x32xf32, #tpu.memory_space<vmem>>, %arg14: memref<1x8x32xf32, #tpu.memory_space<vmem>>) attributes {dimension_semantics = [#tpu.dimension_semantics<parallel>], iteration_bounds = array<i64: 2>, scalar_prefetch = 0 : i64, scratch_operands = 0 : i64, tpu.core_type = #tpu.core_type<tc>, window_params = [{transform_indices = @transform_0, window_bounds = array<i64: 1, 8, 32>}, {pipeline_mode = #tpu.pipeline_mode<synchronous>, transform_indices = @transform_1, window_bounds = array<i64: 32, 96>}, {pipeline_mode = #tpu.pipeline_mode<synchronous>, transform_indices = @transform_2, window_bounds = array<i64: 1, 96>}, {pipeline_mode = #tpu.pipeline_mode<synchronous>, transform_indices = @transform_3, window_bounds = array<i64: 32, 32>}, {pipeline_mode = #tpu.pipeline_mode<synchronous>, transform_indices = @transform_4, window_bounds = array<i64: 1, 32>}, {pipeline_mode = #tpu.pipeline_mode<synchronous>, transform_indices = @transform_5, window_bounds = array<i64: 1, 32>}, {pipeline_mode = #tpu.pipeline_mode<synchronous>, transform_indices = @transform_6, window_bounds = array<i64: 1, 32>}, {pipeline_mode = #tpu.pipeline_mode<synchronous>, transform_indices = @transform_7, window_bounds = array<i64: 32, 64>}, {pipeline_mode = #tpu.pipeline_mode<synchronous>, transform_indices = @transform_8, window_bounds = array<i64: 1, 64>}, {pipeline_mode = #tpu.pipeline_mode<synchronous>, transform_indices = @transform_9, window_bounds = array<i64: 64, 32>}, {pipeline_mode = #tpu.pipeline_mode<synchronous>, transform_indices = @transform_10, window_bounds = array<i64: 1, 32>}, {pipeline_mode = #tpu.pipeline_mode<synchronous>, transform_indices = @transform_11, window_bounds = array<i64: 1, 32>}, {pipeline_mode = #tpu.pipeline_mode<synchronous>, transform_indices = @transform_12, window_bounds = array<i64: 1, 32>}, {transform_indices = @transform_13, window_bounds = array<i64: 1, 8, 32>}]} {
    %c0 = arith.constant 0 : index
    %c0_0 = arith.constant 0 : index
    %c0_1 = arith.constant 0 : index
    %0 = vector.load %arg1[%c0, %c0_0, %c0_1] : memref<1x8x32xf32, #tpu.memory_space<vmem>>, vector<1x8x32xf32>
    %1 = vector.shape_cast %0 : vector<1x8x32xf32> to vector<8x32xf32>
    %2 = arith.truncf %1 : vector<8x32xf32> to vector<8x32xbf16>
    %c0_2 = arith.constant 0 : index
    %c0_3 = arith.constant 0 : index
    %3 = vector.load %arg2[%c0_2, %c0_3] : memref<32x96xbf16, #tpu.memory_space<vmem>>, vector<32x96xbf16>
    %cst = arith.constant dense<0.000000e+00> : vector<8x96xf32>
    %4 = tpu.matmul %2, %3, %cst {dimension_numbers = #tpu.dot_dimension_numbers<[1], [0], [0], [1], [0, 0, 1, 1], [], []>} : vector<8x32xbf16>, vector<32x96xbf16>, vector<8x96xf32> -> vector<8x96xf32>
    %c0_4 = arith.constant 0 : index
    %c0_5 = arith.constant 0 : index
    %5 = vector.load %arg3[%c0_4, %c0_5] : memref<1x96xf32, #tpu.memory_space<vmem>>, vector<1x96xf32>
    %6 = vector.broadcast %5 : vector<1x96xf32> to vector<8x96xf32>
    %7 = arith.addf %4, %6 : vector<8x96xf32>
    %8 = vector.extract_strided_slice %7 {offsets = [0, 0], sizes = [8, 8], strides = [1, 1]} : vector<8x96xf32> to vector<8x8xf32>
    %9 = vector.shape_cast %8 : vector<8x8xf32> to vector<1x8x8xf32>
    %10 = arith.truncf %9 : vector<1x8x8xf32> to vector<1x8x8xbf16>
    %11 = vector.extract_strided_slice %7 {offsets = [0, 32], sizes = [8, 8], strides = [1, 1]} : vector<8x96xf32> to vector<8x8xf32>
    %12 = vector.shape_cast %11 : vector<8x8xf32> to vector<1x8x8xf32>
    %13 = arith.truncf %12 : vector<1x8x8xf32> to vector<1x8x8xbf16>
    %14 = vector.extract_strided_slice %7 {offsets = [0, 64], sizes = [8, 8], strides = [1, 1]} : vector<8x96xf32> to vector<8x8xf32>
    %15 = vector.shape_cast %14 : vector<8x8xf32> to vector<1x8x8xf32>
    %16 = arith.truncf %15 : vector<1x8x8xf32> to vector<1x8x8xbf16>
    "tpu.trace_start"() <{level = 10 : i32, message = "bqd,bkd->bqk"}> : () -> ()
    %cst_6 = arith.constant dense<0.000000e+00> : vector<1x8x8xf32>
    %17 = tpu.matmul %10, %13, %cst_6 {dimension_numbers = #tpu.dot_dimension_numbers<[2], [2], [1], [1], [0, 0, 0, 1, 1, 1], [0], [0]>} : vector<1x8x8xbf16>, vector<1x8x8xbf16>, vector<1x8x8xf32> -> vector<1x8x8xf32>
    "tpu.trace_stop"() : () -> ()
    %cst_7 = arith.constant dense<0xFF800000> : vector<1x8xf32>
    %18 = vector.multi_reduction <maximumf>, %17, %cst_7 [2] : vector<1x8x8xf32> to vector<1x8xf32>
    %19 = vector.shape_cast %18 : vector<1x8xf32> to vector<1x8x1xf32>
    %20 = vector.broadcast %19 : vector<1x8x1xf32> to vector<1x8x8xf32>
    %21 = arith.subf %17, %20 : vector<1x8x8xf32>
    %22 = math.exp %21 : vector<1x8x8xf32>
    %cst_8 = arith.constant dense<0.000000e+00> : vector<1x8xf32>
    %23 = vector.multi_reduction <add>, %22, %cst_8 [2] : vector<1x8x8xf32> to vector<1x8xf32>
    %24 = vector.shape_cast %23 : vector<1x8xf32> to vector<1x8x1xf32>
    %25 = tpu.reciprocal %24 {approx = true} : vector<1x8x1xf32> -> vector<1x8x1xf32>
    %26 = vector.broadcast %25 : vector<1x8x1xf32> to vector<1x8x8xf32>
    %27 = arith.mulf %22, %26 : vector<1x8x8xf32>
    %28 = arith.truncf %27 : vector<1x8x8xf32> to vector<1x8x8xbf16>
    "tpu.trace_start"() <{level = 10 : i32, message = "bqk,bkd->bqd"}> : () -> ()
    %cst_9 = arith.constant dense<0.000000e+00> : vector<1x8x8xf32>
    %29 = tpu.matmul %28, %16, %cst_9 {dimension_numbers = #tpu.dot_dimension_numbers<[2], [1], [1], [2], [0, 0, 0, 1, 1, 2], [0], [0]>} : vector<1x8x8xbf16>, vector<1x8x8xbf16>, vector<1x8x8xf32> -> vector<1x8x8xf32>
    "tpu.trace_stop"() : () -> ()
    %30 = vector.shape_cast %29 : vector<1x8x8xf32> to vector<8x8xf32>
    %31 = vector.extract_strided_slice %7 {offsets = [0, 8], sizes = [8, 8], strides = [1, 1]} : vector<8x96xf32> to vector<8x8xf32>
    %32 = vector.shape_cast %31 : vector<8x8xf32> to vector<1x8x8xf32>
    %33 = arith.truncf %32 : vector<1x8x8xf32> to vector<1x8x8xbf16>
    %34 = vector.extract_strided_slice %7 {offsets = [0, 40], sizes = [8, 8], strides = [1, 1]} : vector<8x96xf32> to vector<8x8xf32>
    %35 = vector.shape_cast %34 : vector<8x8xf32> to vector<1x8x8xf32>
    %36 = arith.truncf %35 : vector<1x8x8xf32> to vector<1x8x8xbf16>
    %37 = vector.extract_strided_slice %7 {offsets = [0, 72], sizes = [8, 8], strides = [1, 1]} : vector<8x96xf32> to vector<8x8xf32>
    %38 = vector.shape_cast %37 : vector<8x8xf32> to vector<1x8x8xf32>
    %39 = arith.truncf %38 : vector<1x8x8xf32> to vector<1x8x8xbf16>
    "tpu.trace_start"() <{level = 10 : i32, message = "bqd,bkd->bqk"}> : () -> ()
    %cst_10 = arith.constant dense<0.000000e+00> : vector<1x8x8xf32>
    %40 = tpu.matmul %33, %36, %cst_10 {dimension_numbers = #tpu.dot_dimension_numbers<[2], [2], [1], [1], [0, 0, 0, 1, 1, 1], [0], [0]>} : vector<1x8x8xbf16>, vector<1x8x8xbf16>, vector<1x8x8xf32> -> vector<1x8x8xf32>
    "tpu.trace_stop"() : () -> ()
    %cst_11 = arith.constant dense<0xFF800000> : vector<1x8xf32>
    %41 = vector.multi_reduction <maximumf>, %40, %cst_11 [2] : vector<1x8x8xf32> to vector<1x8xf32>
    %42 = vector.shape_cast %41 : vector<1x8xf32> to vector<1x8x1xf32>
    %43 = vector.broadcast %42 : vector<1x8x1xf32> to vector<1x8x8xf32>
    %44 = arith.subf %40, %43 : vector<1x8x8xf32>
    %45 = math.exp %44 : vector<1x8x8xf32>
    %cst_12 = arith.constant dense<0.000000e+00> : vector<1x8xf32>
    %46 = vector.multi_reduction <add>, %45, %cst_12 [2] : vector<1x8x8xf32> to vector<1x8xf32>
    %47 = vector.shape_cast %46 : vector<1x8xf32> to vector<1x8x1xf32>
    %48 = tpu.reciprocal %47 {approx = true} : vector<1x8x1xf32> -> vector<1x8x1xf32>
    %49 = vector.broadcast %48 : vector<1x8x1xf32> to vector<1x8x8xf32>
    %50 = arith.mulf %45, %49 : vector<1x8x8xf32>
    %51 = arith.truncf %50 : vector<1x8x8xf32> to vector<1x8x8xbf16>
    "tpu.trace_start"() <{level = 10 : i32, message = "bqk,bkd->bqd"}> : () -> ()
    %cst_13 = arith.constant dense<0.000000e+00> : vector<1x8x8xf32>
    %52 = tpu.matmul %51, %39, %cst_13 {dimension_numbers = #tpu.dot_dimension_numbers<[2], [1], [1], [2], [0, 0, 0, 1, 1, 2], [0], [0]>} : vector<1x8x8xbf16>, vector<1x8x8xbf16>, vector<1x8x8xf32> -> vector<1x8x8xf32>
    "tpu.trace_stop"() : () -> ()
    %53 = vector.shape_cast %52 : vector<1x8x8xf32> to vector<8x8xf32>
    %54 = vector.extract_strided_slice %7 {offsets = [0, 16], sizes = [8, 8], strides = [1, 1]} : vector<8x96xf32> to vector<8x8xf32>
    %55 = vector.shape_cast %54 : vector<8x8xf32> to vector<1x8x8xf32>
    %56 = arith.truncf %55 : vector<1x8x8xf32> to vector<1x8x8xbf16>
    %57 = vector.extract_strided_slice %7 {offsets = [0, 48], sizes = [8, 8], strides = [1, 1]} : vector<8x96xf32> to vector<8x8xf32>
    %58 = vector.shape_cast %57 : vector<8x8xf32> to vector<1x8x8xf32>
    %59 = arith.truncf %58 : vector<1x8x8xf32> to vector<1x8x8xbf16>
    %60 = vector.extract_strided_slice %7 {offsets = [0, 80], sizes = [8, 8], strides = [1, 1]} : vector<8x96xf32> to vector<8x8xf32>
    %61 = vector.shape_cast %60 : vector<8x8xf32> to vector<1x8x8xf32>
    %62 = arith.truncf %61 : vector<1x8x8xf32> to vector<1x8x8xbf16>
    "tpu.trace_start"() <{level = 10 : i32, message = "bqd,bkd->bqk"}> : () -> ()
    %cst_14 = arith.constant dense<0.000000e+00> : vector<1x8x8xf32>
    %63 = tpu.matmul %56, %59, %cst_14 {dimension_numbers = #tpu.dot_dimension_numbers<[2], [2], [1], [1], [0, 0, 0, 1, 1, 1], [0], [0]>} : vector<1x8x8xbf16>, vector<1x8x8xbf16>, vector<1x8x8xf32> -> vector<1x8x8xf32>
    "tpu.trace_stop"() : () -> ()
    %cst_15 = arith.constant dense<0xFF800000> : vector<1x8xf32>
    %64 = vector.multi_reduction <maximumf>, %63, %cst_15 [2] : vector<1x8x8xf32> to vector<1x8xf32>
    %65 = vector.shape_cast %64 : vector<1x8xf32> to vector<1x8x1xf32>
    %66 = vector.broadcast %65 : vector<1x8x1xf32> to vector<1x8x8xf32>
    %67 = arith.subf %63, %66 : vector<1x8x8xf32>
    %68 = math.exp %67 : vector<1x8x8xf32>
    %cst_16 = arith.constant dense<0.000000e+00> : vector<1x8xf32>
    %69 = vector.multi_reduction <add>, %68, %cst_16 [2] : vector<1x8x8xf32> to vector<1x8xf32>
    %70 = vector.shape_cast %69 : vector<1x8xf32> to vector<1x8x1xf32>
    %71 = tpu.reciprocal %70 {approx = true} : vector<1x8x1xf32> -> vector<1x8x1xf32>
    %72 = vector.broadcast %71 : vector<1x8x1xf32> to vector<1x8x8xf32>
    %73 = arith.mulf %68, %72 : vector<1x8x8xf32>
    %74 = arith.truncf %73 : vector<1x8x8xf32> to vector<1x8x8xbf16>
    "tpu.trace_start"() <{level = 10 : i32, message = "bqk,bkd->bqd"}> : () -> ()
    %cst_17 = arith.constant dense<0.000000e+00> : vector<1x8x8xf32>
    %75 = tpu.matmul %74, %62, %cst_17 {dimension_numbers = #tpu.dot_dimension_numbers<[2], [1], [1], [2], [0, 0, 0, 1, 1, 2], [0], [0]>} : vector<1x8x8xbf16>, vector<1x8x8xbf16>, vector<1x8x8xf32> -> vector<1x8x8xf32>
    "tpu.trace_stop"() : () -> ()
    %76 = vector.shape_cast %75 : vector<1x8x8xf32> to vector<8x8xf32>
    %77 = vector.extract_strided_slice %7 {offsets = [0, 24], sizes = [8, 8], strides = [1, 1]} : vector<8x96xf32> to vector<8x8xf32>
    %78 = vector.shape_cast %77 : vector<8x8xf32> to vector<1x8x8xf32>
    %79 = arith.truncf %78 : vector<1x8x8xf32> to vector<1x8x8xbf16>
    %80 = vector.extract_strided_slice %7 {offsets = [0, 56], sizes = [8, 8], strides = [1, 1]} : vector<8x96xf32> to vector<8x8xf32>
    %81 = vector.shape_cast %80 : vector<8x8xf32> to vector<1x8x8xf32>
    %82 = arith.truncf %81 : vector<1x8x8xf32> to vector<1x8x8xbf16>
    %83 = vector.extract_strided_slice %7 {offsets = [0, 88], sizes = [8, 8], strides = [1, 1]} : vector<8x96xf32> to vector<8x8xf32>
    %84 = vector.shape_cast %83 : vector<8x8xf32> to vector<1x8x8xf32>
    %85 = arith.truncf %84 : vector<1x8x8xf32> to vector<1x8x8xbf16>
    "tpu.trace_start"() <{level = 10 : i32, message = "bqd,bkd->bqk"}> : () -> ()
    %cst_18 = arith.constant dense<0.000000e+00> : vector<1x8x8xf32>
    %86 = tpu.matmul %79, %82, %cst_18 {dimension_numbers = #tpu.dot_dimension_numbers<[2], [2], [1], [1], [0, 0, 0, 1, 1, 1], [0], [0]>} : vector<1x8x8xbf16>, vector<1x8x8xbf16>, vector<1x8x8xf32> -> vector<1x8x8xf32>
    "tpu.trace_stop"() : () -> ()
    %cst_19 = arith.constant dense<0xFF800000> : vector<1x8xf32>
    %87 = vector.multi_reduction <maximumf>, %86, %cst_19 [2] : vector<1x8x8xf32> to vector<1x8xf32>
    %88 = vector.shape_cast %87 : vector<1x8xf32> to vector<1x8x1xf32>
    %89 = vector.broadcast %88 : vector<1x8x1xf32> to vector<1x8x8xf32>
    %90 = arith.subf %86, %89 : vector<1x8x8xf32>
    %91 = math.exp %90 : vector<1x8x8xf32>
    %cst_20 = arith.constant dense<0.000000e+00> : vector<1x8xf32>
    %92 = vector.multi_reduction <add>, %91, %cst_20 [2] : vector<1x8x8xf32> to vector<1x8xf32>
    %93 = vector.shape_cast %92 : vector<1x8xf32> to vector<1x8x1xf32>
    %94 = tpu.reciprocal %93 {approx = true} : vector<1x8x1xf32> -> vector<1x8x1xf32>
    %95 = vector.broadcast %94 : vector<1x8x1xf32> to vector<1x8x8xf32>
    %96 = arith.mulf %91, %95 : vector<1x8x8xf32>
    %97 = arith.truncf %96 : vector<1x8x8xf32> to vector<1x8x8xbf16>
    "tpu.trace_start"() <{level = 10 : i32, message = "bqk,bkd->bqd"}> : () -> ()
    %cst_21 = arith.constant dense<0.000000e+00> : vector<1x8x8xf32>
    %98 = tpu.matmul %97, %85, %cst_21 {dimension_numbers = #tpu.dot_dimension_numbers<[2], [1], [1], [2], [0, 0, 0, 1, 1, 2], [0], [0]>} : vector<1x8x8xbf16>, vector<1x8x8xbf16>, vector<1x8x8xf32> -> vector<1x8x8xf32>
    "tpu.trace_stop"() : () -> ()
    %99 = vector.shape_cast %98 : vector<1x8x8xf32> to vector<8x8xf32>
    %100 = tpu.concatenate %30, %53, %76, %99 in 1 : vector<8x8xf32>, vector<8x8xf32>, vector<8x8xf32>, vector<8x8xf32> -> vector<8x32xf32>
    %101 = arith.truncf %100 : vector<8x32xf32> to vector<8x32xbf16>
    %c0_22 = arith.constant 0 : index
    %c0_23 = arith.constant 0 : index
    %102 = vector.load %arg4[%c0_22, %c0_23] : memref<32x32xbf16, #tpu.memory_space<vmem>>, vector<32x32xbf16>
    %cst_24 = arith.constant dense<0.000000e+00> : vector<8x32xf32>
    %103 = tpu.matmul %101, %102, %cst_24 {dimension_numbers = #tpu.dot_dimension_numbers<[1], [0], [0], [1], [0, 0, 1, 1], [], []>} : vector<8x32xbf16>, vector<32x32xbf16>, vector<8x32xf32> -> vector<8x32xf32>
    %c0_25 = arith.constant 0 : index
    %c0_26 = arith.constant 0 : index
    %104 = vector.load %arg5[%c0_25, %c0_26] : memref<1x32xf32, #tpu.memory_space<vmem>>, vector<1x32xf32>
    %105 = vector.broadcast %104 : vector<1x32xf32> to vector<8x32xf32>
    %106 = arith.addf %103, %105 : vector<8x32xf32>
    %107 = arith.addf %1, %106 : vector<8x32xf32>
    %c0_27 = arith.constant 0 : index
    %c0_28 = arith.constant 0 : index
    %108 = vector.load %arg6[%c0_27, %c0_28] : memref<1x32xf32, #tpu.memory_space<vmem>>, vector<1x32xf32>
    %c0_29 = arith.constant 0 : index
    %c0_30 = arith.constant 0 : index
    %109 = vector.load %arg7[%c0_29, %c0_30] : memref<1x32xf32, #tpu.memory_space<vmem>>, vector<1x32xf32>
    %cst_31 = arith.constant dense<0.000000e+00> : vector<8xf32>
    %110 = vector.multi_reduction <add>, %107, %cst_31 [1] : vector<8x32xf32> to vector<8xf32>
    %111 = vector.shape_cast %110 : vector<8xf32> to vector<8x1xf32>
    %cst_32 = arith.constant 3.200000e+01 : f32
    %112 = vector.broadcast %cst_32 : f32 to vector<8x1xf32>
    %113 = arith.divf %111, %112 : vector<8x1xf32>
    %114 = vector.broadcast %113 : vector<8x1xf32> to vector<8x32xf32>
    %115 = arith.subf %107, %114 : vector<8x32xf32>
    %116 = arith.mulf %115, %115 : vector<8x32xf32>
    %cst_33 = arith.constant dense<0.000000e+00> : vector<8xf32>
    %117 = vector.multi_reduction <add>, %116, %cst_33 [1] : vector<8x32xf32> to vector<8xf32>
    %118 = vector.shape_cast %117 : vector<8xf32> to vector<8x1xf32>
    %cst_34 = arith.constant 3.200000e+01 : f32
    %119 = vector.broadcast %cst_34 : f32 to vector<8x1xf32>
    %120 = arith.divf %118, %119 : vector<8x1xf32>
    %121 = vector.broadcast %113 : vector<8x1xf32> to vector<8x32xf32>
    %122 = arith.subf %107, %121 : vector<8x32xf32>
    %cst_35 = arith.constant 9.99999974E-6 : f32
    %123 = vector.broadcast %cst_35 : f32 to vector<8x1xf32>
    %124 = arith.addf %120, %123 : vector<8x1xf32>
    %125 = math.rsqrt %124 : vector<8x1xf32>
    %126 = vector.broadcast %125 : vector<8x1xf32> to vector<8x32xf32>
    %127 = arith.mulf %122, %126 : vector<8x32xf32>
    %128 = vector.broadcast %108 : vector<1x32xf32> to vector<8x32xf32>
    %129 = arith.mulf %127, %128 : vector<8x32xf32>
    %130 = vector.broadcast %109 : vector<1x32xf32> to vector<8x32xf32>
    %131 = arith.addf %129, %130 : vector<8x32xf32>
    %132 = arith.truncf %131 : vector<8x32xf32> to vector<8x32xbf16>
    %c0_36 = arith.constant 0 : index
    %c0_37 = arith.constant 0 : index
    %133 = vector.load %arg8[%c0_36, %c0_37] : memref<32x64xbf16, #tpu.memory_space<vmem>>, vector<32x64xbf16>
    %cst_38 = arith.constant dense<0.000000e+00> : vector<8x64xf32>
    %134 = tpu.matmul %132, %133, %cst_38 {dimension_numbers = #tpu.dot_dimension_numbers<[1], [0], [0], [1], [0, 0, 1, 1], [], []>} : vector<8x32xbf16>, vector<32x64xbf16>, vector<8x64xf32> -> vector<8x64xf32>
    %c0_39 = arith.constant 0 : index
    %c0_40 = arith.constant 0 : index
    %135 = vector.load %arg9[%c0_39, %c0_40] : memref<1x64xf32, #tpu.memory_space<vmem>>, vector<1x64xf32>
    %136 = vector.broadcast %135 : vector<1x64xf32> to vector<8x64xf32>
    %137 = arith.addf %134, %136 : vector<8x64xf32>
    %cst_41 = arith.constant 0.000000e+00 : f32
    %138 = vector.broadcast %cst_41 : f32 to vector<8x64xf32>
    %139 = arith.maximumf %137, %138 : vector<8x64xf32>
    %140 = arith.truncf %139 : vector<8x64xf32> to vector<8x64xbf16>
    %c0_42 = arith.constant 0 : index
    %c0_43 = arith.constant 0 : index
    %141 = vector.load %arg10[%c0_42, %c0_43] : memref<64x32xbf16, #tpu.memory_space<vmem>>, vector<64x32xbf16>
    %cst_44 = arith.constant dense<0.000000e+00> : vector<8x32xf32>
    %142 = tpu.matmul %140, %141, %cst_44 {dimension_numbers = #tpu.dot_dimension_numbers<[1], [0], [0], [1], [0, 0, 1, 1], [], []>} : vector<8x64xbf16>, vector<64x32xbf16>, vector<8x32xf32> -> vector<8x32xf32>
    %c0_45 = arith.constant 0 : index
    %c0_46 = arith.constant 0 : index
    %143 = vector.load %arg11[%c0_45, %c0_46] : memref<1x32xf32, #tpu.memory_space<vmem>>, vector<1x32xf32>
    %144 = vector.broadcast %143 : vector<1x32xf32> to vector<8x32xf32>
    %145 = arith.addf %142, %144 : vector<8x32xf32>
    %146 = arith.addf %131, %145 : vector<8x32xf32>
    %c0_47 = arith.constant 0 : index
    %c0_48 = arith.constant 0 : index
    %147 = vector.load %arg12[%c0_47, %c0_48] : memref<1x32xf32, #tpu.memory_space<vmem>>, vector<1x32xf32>
    %c0_49 = arith.constant 0 : index
    %c0_50 = arith.constant 0 : index
    %148 = vector.load %arg13[%c0_49, %c0_50] : memref<1x32xf32, #tpu.memory_space<vmem>>, vector<1x32xf32>
    %cst_51 = arith.constant dense<0.000000e+00> : vector<8xf32>
    %149 = vector.multi_reduction <add>, %146, %cst_51 [1] : vector<8x32xf32> to vector<8xf32>
    %150 = vector.shape_cast %149 : vector<8xf32> to vector<8x1xf32>
    %cst_52 = arith.constant 3.200000e+01 : f32
    %151 = vector.broadcast %cst_52 : f32 to vector<8x1xf32>
    %152 = arith.divf %150, %151 : vector<8x1xf32>
    %153 = vector.broadcast %152 : vector<8x1xf32> to vector<8x32xf32>
    %154 = arith.subf %146, %153 : vector<8x32xf32>
    %155 = arith.mulf %154, %154 : vector<8x32xf32>
    %cst_53 = arith.constant dense<0.000000e+00> : vector<8xf32>
    %156 = vector.multi_reduction <add>, %155, %cst_53 [1] : vector<8x32xf32> to vector<8xf32>
    %157 = vector.shape_cast %156 : vector<8xf32> to vector<8x1xf32>
    %cst_54 = arith.constant 3.200000e+01 : f32
    %158 = vector.broadcast %cst_54 : f32 to vector<8x1xf32>
    %159 = arith.divf %157, %158 : vector<8x1xf32>
    %160 = vector.broadcast %152 : vector<8x1xf32> to vector<8x32xf32>
    %161 = arith.subf %146, %160 : vector<8x32xf32>
    %cst_55 = arith.constant 9.99999974E-6 : f32
    %162 = vector.broadcast %cst_55 : f32 to vector<8x1xf32>
    %163 = arith.addf %159, %162 : vector<8x1xf32>
    %164 = math.rsqrt %163 : vector<8x1xf32>
    %165 = vector.broadcast %164 : vector<8x1xf32> to vector<8x32xf32>
    %166 = arith.mulf %161, %165 : vector<8x32xf32>
    %167 = vector.broadcast %147 : vector<1x32xf32> to vector<8x32xf32>
    %168 = arith.mulf %166, %167 : vector<8x32xf32>
    %169 = vector.broadcast %148 : vector<1x32xf32> to vector<8x32xf32>
    %170 = arith.addf %168, %169 : vector<8x32xf32>
    %171 = vector.shape_cast %170 : vector<8x32xf32> to vector<1x8x32xf32>
    %c0_56 = arith.constant 0 : index
    %c0_57 = arith.constant 0 : index
    %c0_58 = arith.constant 0 : index
    %172 = vector.load %arg14[%c0_56, %c0_57, %c0_58] : memref<1x8x32xf32, #tpu.memory_space<vmem>>, vector<1x8x32xf32>
    tpu.vector_store %arg14[%c0_56, %c0_57, %c0_58], %171 {strides = array<i32>} : memref<1x8x32xf32, #tpu.memory_space<vmem>>, vector<1x8x32xf32>,
    return
  }
  func.func @transform_0(%arg0: i32) -> (i32, i32, i32) {
    %c0_i32 = arith.constant 0 : i32
    %c0_i32_0 = arith.constant 0 : i32
    %c0_i32_1 = arith.constant 0 : i32
    return %arg0, %c0_i32, %c0_i32_0 : i32, i32, i32
  }
  func.func @transform_1(%arg0: i32) -> (i32, i32) {
    %c0_i32 = arith.constant 0 : i32
    %c0_i32_0 = arith.constant 0 : i32
    %c0_i32_1 = arith.constant 0 : i32
    return %c0_i32, %c0_i32_0 : i32, i32
  }
  func.func @transform_2(%arg0: i32) -> (i32, i32) {
    %c0_i32 = arith.constant 0 : i32
    %c0_i32_0 = arith.constant 0 : i32
    %c0_i32_1 = arith.constant 0 : i32
    return %c0_i32, %c0_i32_0 : i32, i32
  }
  func.func @transform_3(%arg0: i32) -> (i32, i32) {
    %c0_i32 = arith.constant 0 : i32
    %c0_i32_0 = arith.constant 0 : i32
    %c0_i32_1 = arith.constant 0 : i32
    return %c0_i32, %c0_i32_0 : i32, i32
  }
  func.func @transform_4(%arg0: i32) -> (i32, i32) {
    %c0_i32 = arith.constant 0 : i32
    %c0_i32_0 = arith.constant 0 : i32
    %c0_i32_1 = arith.constant 0 : i32
    return %c0_i32, %c0_i32_0 : i32, i32
  }
  func.func @transform_5(%arg0: i32) -> (i32, i32) {
    %c0_i32 = arith.constant 0 : i32
    %c0_i32_0 = arith.constant 0 : i32
    %c0_i32_1 = arith.constant 0 : i32
    return %c0_i32, %c0_i32_0 : i32, i32
  }
  func.func @transform_6(%arg0: i32) -> (i32, i32) {
    %c0_i32 = arith.constant 0 : i32
    %c0_i32_0 = arith.constant 0 : i32
    %c0_i32_1 = arith.constant 0 : i32
    return %c0_i32, %c0_i32_0 : i32, i32
  }
  func.func @transform_7(%arg0: i32) -> (i32, i32) {
    %c0_i32 = arith.constant 0 : i32
    %c0_i32_0 = arith.constant 0 : i32
    %c0_i32_1 = arith.constant 0 : i32
    return %c0_i32, %c0_i32_0 : i32, i32
  }
  func.func @transform_8(%arg0: i32) -> (i32, i32) {
    %c0_i32 = arith.constant 0 : i32
    %c0_i32_0 = arith.constant 0 : i32
    %c0_i32_1 = arith.constant 0 : i32
    return %c0_i32, %c0_i32_0 : i32, i32
  }
  func.func @transform_9(%arg0: i32) -> (i32, i32) {
    %c0_i32 = arith.constant 0 : i32
    %c0_i32_0 = arith.constant 0 : i32
    %c0_i32_1 = arith.constant 0 : i32
    return %c0_i32, %c0_i32_0 : i32, i32
  }
  func.func @transform_10(%arg0: i32) -> (i32, i32) {
    %c0_i32 = arith.constant 0 : i32
    %c0_i32_0 = arith.constant 0 : i32
    %c0_i32_1 = arith.constant 0 : i32
    return %c0_i32, %c0_i32_0 : i32, i32
  }
  func.func @transform_11(%arg0: i32) -> (i32, i32) {
    %c0_i32 = arith.constant 0 : i32
    %c0_i32_0 = arith.constant 0 : i32
    %c0_i32_1 = arith.constant 0 : i32
    return %c0_i32, %c0_i32_0 : i32, i32
  }
  func.func @transform_12(%arg0: i32) -> (i32, i32) {
    %c0_i32 = arith.constant 0 : i32
    %c0_i32_0 = arith.constant 0 : i32
    %c0_i32_1 = arith.constant 0 : i32
    return %c0_i32, %c0_i32_0 : i32, i32
  }
  func.func @transform_13(%arg0: i32) -> (i32, i32, i32) {
    %c0_i32 = arith.constant 0 : i32
    %c0_i32_0 = arith.constant 0 : i32
    %c0_i32_1 = arith.constant 0 : i32
    return %arg0, %c0_i32, %c0_i32_0 : i32, i32, i32
  }
}

module attributes {stable_mosaic.version = 11 : i64} {
  func.func @encoder_layer_kernel(%arg0: i32, %arg1: memref<1x8x32xf32, #tpu.memory_space<vmem>>, %arg2: memref<32x96xbf16, #tpu.memory_space<vmem>>, %arg3: memref<1x96xf32, #tpu.memory_space<vmem>>, %arg4: memref<32x32xbf16, #tpu.memory_space<vmem>>, %arg5: memref<1x32xf32, #tpu.memory_space<vmem>>, %arg6: memref<1x32xf32, #tpu.memory_space<vmem>>, %arg7: memref<1x32xf32, #tpu.memory_space<vmem>>, %arg8: memref<32x64xbf16, #tpu.memory_space<vmem>>, %arg9: memref<1x64xf32, #tpu.memory_space<vmem>>, %arg10: memref<64x32xbf16, #tpu.memory_space<vmem>>, %arg11: memref<1x32xf32, #tpu.memory_space<vmem>>, %arg12: memref<1x32xf32, #tpu.memory_space<vmem>>, %arg13: memref<1x32xf32, #tpu.memory_space<vmem>>, %arg14: memref<1x8x32xf32, #tpu.memory_space<vmem>>) attributes {dimension_semantics = [#tpu.dimension_semantics<parallel>], iteration_bounds = array<i64: 2>, scalar_prefetch = 0 : i64, scratch_operands = 0 : i64, tpu.core_type = #tpu.core_type<tc>, window_params = [{transform_indices = @transform_0, window_bounds = array<i64: 1, 8, 32>}, {pipeline_mode = #tpu.pipeline_mode<synchronous>, transform_indices = @transform_1, window_bounds = array<i64: 32, 96>}, {pipeline_mode = #tpu.pipeline_mode<synchronous>, transform_indices = @transform_2, window_bounds = array<i64: 1, 96>}, {pipeline_mode = #tpu.pipeline_mode<synchronous>, transform_indices = @transform_3, window_bounds = array<i64: 32, 32>}, {pipeline_mode = #tpu.pipeline_mode<synchronous>, transform_indices = @transform_4, window_bounds = array<i64: 1, 32>}, {pipeline_mode = #tpu.pipeline_mode<synchronous>, transform_indices = @transform_5, window_bounds = array<i64: 1, 32>}, {pipeline_mode = #tpu.pipeline_mode<synchronous>, transform_indices = @transform_6, window_bounds = array<i64: 1, 32>}, {pipeline_mode = #tpu.pipeline_mode<synchronous>, transform_indices = @transform_7, window_bounds = array<i64: 32, 64>}, {pipeline_mode = #tpu.pipeline_mode<synchronous>, transform_indices = @transform_8, window_bounds = array<i64: 1, 64>}, {pipeline_mode = #tpu.pipeline_mode<synchronous>, transform_indices = @transform_9, window_bounds = array<i64: 64, 32>}, {pipeline_mode = #tpu.pipeline_mode<synchronous>, transform_indices = @transform_10, window_bounds = array<i64: 1, 32>}, {pipeline_mode = #tpu.pipeline_mode<synchronous>, transform_indices = @transform_11, window_bounds = array<i64: 1, 32>}, {pipeline_mode = #tpu.pipeline_mode<synchronous>, transform_indices = @transform_12, window_bounds = array<i64: 1, 32>}, {transform_indices = @transform_13, window_bounds = array<i64: 1, 8, 32>}]} {
    %c0 = arith.constant 0 : index
    %c0_0 = arith.constant 0 : index
    %c0_1 = arith.constant 0 : index
    %0 = vector.load %arg1[%c0, %c0_0, %c0_1] : memref<1x8x32xf32, #tpu.memory_space<vmem>>, vector<1x8x32xf32>
    %1 = vector.shape_cast %0 : vector<1x8x32xf32> to vector<8x32xf32>
    %2 = arith.truncf %1 : vector<8x32xf32> to vector<8x32xbf16>
    %c0_2 = arith.constant 0 : index
    %c0_3 = arith.constant 0 : index
    %3 = vector.load %arg2[%c0_2, %c0_3] : memref<32x96xbf16, #tpu.memory_space<vmem>>, vector<32x96xbf16>
    %cst = arith.constant dense<0.000000e+00> : vector<8x96xf32>
    %4 = tpu.matmul %2, %3, %cst {dimension_numbers = #tpu.dot_dimension_numbers<[1], [0], [0], [1], [0, 0, 1, 1], [], []>} : vector<8x32xbf16>, vector<32x96xbf16>, vector<8x96xf32> -> vector<8x96xf32>
    %c0_4 = arith.constant 0 : index
    %c0_5 = arith.constant 0 : index
    %5 = vector.load %arg3[%c0_4, %c0_5] : memref<1x96xf32, #tpu.memory_space<vmem>>, vector<1x96xf32>
    %6 = vector.broadcast %5 : vector<1x96xf32> to vector<8x96xf32>
    %7 = arith.addf %4, %6 : vector<8x96xf32>
    %8 = vector.extract_strided_slice %7 {offsets = [0, 0], sizes = [8, 8], strides = [1, 1]} : vector<8x96xf32> to vector<8x8xf32>
    %9 = vector.shape_cast %8 : vector<8x8xf32> to vector<1x8x8xf32>
    %10 = arith.truncf %9 : vector<1x8x8xf32> to vector<1x8x8xbf16>
    %11 = vector.extract_strided_slice %7 {offsets = [0, 32], sizes = [8, 8], strides = [1, 1]} : vector<8x96xf32> to vector<8x8xf32>
    %12 = vector.shape_cast %11 : vector<8x8xf32> to vector<1x8x8xf32>
    %13 = arith.truncf %12 : vector<1x8x8xf32> to vector<1x8x8xbf16>
    %14 = vector.extract_strided_slice %7 {offsets = [0, 64], sizes = [8, 8], strides = [1, 1]} : vector<8x96xf32> to vector<8x8xf32>
    %15 = vector.shape_cast %14 : vector<8x8xf32> to vector<1x8x8xf32>
    %16 = arith.truncf %15 : vector<1x8x8xf32> to vector<1x8x8xbf16>
    "tpu.trace_start"() <{level = 10 : i32, message = "bqd,bkd->bqk"}> : () -> ()
    %cst_6 = arith.constant dense<0.000000e+00> : vector<1x8x8xf32>
    %17 = tpu.matmul %10, %13, %cst_6 {dimension_numbers = #tpu.dot_dimension_numbers<[2], [2], [1], [1], [0, 0, 0, 1, 1, 1], [0], [0]>} : vector<1x8x8xbf16>, vector<1x8x8xbf16>, vector<1x8x8xf32> -> vector<1x8x8xf32>
    "tpu.trace_stop"() : () -> ()
    %cst_7 = arith.constant dense<0xFF800000> : vector<1x8xf32>
    %18 = vector.multi_reduction <maximumf>, %17, %cst_7 [2] : vector<1x8x8xf32> to vector<1x8xf32>
    %19 = vector.shape_cast %18 : vector<1x8xf32> to vector<1x8x1xf32>
    %20 = vector.broadcast %19 : vector<1x8x1xf32> to vector<1x8x8xf32>
    %21 = arith.subf %17, %20 : vector<1x8x8xf32>
    %22 = math.exp %21 : vector<1x8x8xf32>
    %cst_8 = arith.constant dense<0.000000e+00> : vector<1x8xf32>
    %23 = vector.multi_reduction <add>, %22, %cst_8 [2] : vector<1x8x8xf32> to vector<1x8xf32>
    %24 = vector.shape_cast %23 : vector<1x8xf32> to vector<1x8x1xf32>
    %25 = tpu.reciprocal %24 {approx = true} : vector<1x8x1xf32> -> vector<1x8x1xf32>
    %26 = vector.broadcast %25 : vector<1x8x1xf32> to vector<1x8x8xf32>
    %27 = arith.mulf %22, %26 : vector<1x8x8xf32>
    %28 = arith.truncf %27 : vector<1x8x8xf32> to vector<1x8x8xbf16>
    "tpu.trace_start"() <{level = 10 : i32, message = "bqk,bkd->bqd"}> : () -> ()
    %cst_9 = arith.constant dense<0.000000e+00> : vector<1x8x8xf32>
    %29 = tpu.matmul %28, %16, %cst_9 {dimension_numbers = #tpu.dot_dimension_numbers<[2], [1], [1], [2], [0, 0, 0, 1, 1, 2], [0], [0]>} : vector<1x8x8xbf16>, vector<1x8x8xbf16>, vector<1x8x8xf32> -> vector<1x8x8xf32>
    "tpu.trace_stop"() : () -> ()
    %30 = vector.shape_cast %29 : vector<1x8x8xf32> to vector<8x8xf32>
    %31 = vector.extract_strided_slice %7 {offsets = [0, 8], sizes = [8, 8], strides = [1, 1]} : vector<8x96xf32> to vector<8x8xf32>
    %32 = vector.shape_cast %31 : vector<8x8xf32> to vector<1x8x8xf32>
    %33 = arith.truncf %32 : vector<1x8x8xf32> to vector<1x8x8xbf16>
    %34 = vector.extract_strided_slice %7 {offsets = [0, 40], sizes = [8, 8], strides = [1, 1]} : vector<8x96xf32> to vector<8x8xf32>
    %35 = vector.shape_cast %34 : vector<8x8xf32> to vector<1x8x8xf32>
    %36 = arith.truncf %35 : vector<1x8x8xf32> to vector<1x8x8xbf16>
    %37 = vector.extract_strided_slice %7 {offsets = [0, 72], sizes = [8, 8], strides = [1, 1]} : vector<8x96xf32> to vector<8x8xf32>
    %38 = vector.shape_cast %37 : vector<8x8xf32> to vector<1x8x8xf32>
    %39 = arith.truncf %38 : vector<1x8x8xf32> to vector<1x8x8xbf16>
    "tpu.trace_start"() <{level = 10 : i32, message = "bqd,bkd->bqk"}> : () -> ()
    %cst_10 = arith.constant dense<0.000000e+00> : vector<1x8x8xf32>
    %40 = tpu.matmul %33, %36, %cst_10 {dimension_numbers = #tpu.dot_dimension_numbers<[2], [2], [1], [1], [0, 0, 0, 1, 1, 1], [0], [0]>} : vector<1x8x8xbf16>, vector<1x8x8xbf16>, vector<1x8x8xf32> -> vector<1x8x8xf32>
    "tpu.trace_stop"() : () -> ()
    %cst_11 = arith.constant dense<0xFF800000> : vector<1x8xf32>
    %41 = vector.multi_reduction <maximumf>, %40, %cst_11 [2] : vector<1x8x8xf32> to vector<1x8xf32>
    %42 = vector.shape_cast %41 : vector<1x8xf32> to vector<1x8x1xf32>
    %43 = vector.broadcast %42 : vector<1x8x1xf32> to vector<1x8x8xf32>
    %44 = arith.subf %40, %43 : vector<1x8x8xf32>
    %45 = math.exp %44 : vector<1x8x8xf32>
    %cst_12 = arith.constant dense<0.000000e+00> : vector<1x8xf32>
    %46 = vector.multi_reduction <add>, %45, %cst_12 [2] : vector<1x8x8xf32> to vector<1x8xf32>
    %47 = vector.shape_cast %46 : vector<1x8xf32> to vector<1x8x1xf32>
    %48 = tpu.reciprocal %47 {approx = true} : vector<1x8x1xf32> -> vector<1x8x1xf32>
    %49 = vector.broadcast %48 : vector<1x8x1xf32> to vector<1x8x8xf32>
    %50 = arith.mulf %45, %49 : vector<1x8x8xf32>
    %51 = arith.truncf %50 : vector<1x8x8xf32> to vector<1x8x8xbf16>
    "tpu.trace_start"() <{level = 10 : i32, message = "bqk,bkd->bqd"}> : () -> ()
    %cst_13 = arith.constant dense<0.000000e+00> : vector<1x8x8xf32>
    %52 = tpu.matmul %51, %39, %cst_13 {dimension_numbers = #tpu.dot_dimension_numbers<[2], [1], [1], [2], [0, 0, 0, 1, 1, 2], [0], [0]>} : vector<1x8x8xbf16>, vector<1x8x8xbf16>, vector<1x8x8xf32> -> vector<1x8x8xf32>
    "tpu.trace_stop"() : () -> ()
    %53 = vector.shape_cast %52 : vector<1x8x8xf32> to vector<8x8xf32>
    %54 = vector.extract_strided_slice %7 {offsets = [0, 16], sizes = [8, 8], strides = [1, 1]} : vector<8x96xf32> to vector<8x8xf32>
    %55 = vector.shape_cast %54 : vector<8x8xf32> to vector<1x8x8xf32>
    %56 = arith.truncf %55 : vector<1x8x8xf32> to vector<1x8x8xbf16>
    %57 = vector.extract_strided_slice %7 {offsets = [0, 48], sizes = [8, 8], strides = [1, 1]} : vector<8x96xf32> to vector<8x8xf32>
    %58 = vector.shape_cast %57 : vector<8x8xf32> to vector<1x8x8xf32>
    %59 = arith.truncf %58 : vector<1x8x8xf32> to vector<1x8x8xbf16>
    %60 = vector.extract_strided_slice %7 {offsets = [0, 80], sizes = [8, 8], strides = [1, 1]} : vector<8x96xf32> to vector<8x8xf32>
    %61 = vector.shape_cast %60 : vector<8x8xf32> to vector<1x8x8xf32>
    %62 = arith.truncf %61 : vector<1x8x8xf32> to vector<1x8x8xbf16>
    "tpu.trace_start"() <{level = 10 : i32, message = "bqd,bkd->bqk"}> : () -> ()
    %cst_14 = arith.constant dense<0.000000e+00> : vector<1x8x8xf32>
    %63 = tpu.matmul %56, %59, %cst_14 {dimension_numbers = #tpu.dot_dimension_numbers<[2], [2], [1], [1], [0, 0, 0, 1, 1, 1], [0], [0]>} : vector<1x8x8xbf16>, vector<1x8x8xbf16>, vector<1x8x8xf32> -> vector<1x8x8xf32>
    "tpu.trace_stop"() : () -> ()
    %cst_15 = arith.constant dense<0xFF800000> : vector<1x8xf32>
    %64 = vector.multi_reduction <maximumf>, %63, %cst_15 [2] : vector<1x8x8xf32> to vector<1x8xf32>
    %65 = vector.shape_cast %64 : vector<1x8xf32> to vector<1x8x1xf32>
    %66 = vector.broadcast %65 : vector<1x8x1xf32> to vector<1x8x8xf32>
    %67 = arith.subf %63, %66 : vector<1x8x8xf32>
    %68 = math.exp %67 : vector<1x8x8xf32>
    %cst_16 = arith.constant dense<0.000000e+00> : vector<1x8xf32>
    %69 = vector.multi_reduction <add>, %68, %cst_16 [2] : vector<1x8x8xf32> to vector<1x8xf32>
    %70 = vector.shape_cast %69 : vector<1x8xf32> to vector<1x8x1xf32>
    %71 = tpu.reciprocal %70 {approx = true} : vector<1x8x1xf32> -> vector<1x8x1xf32>
    %72 = vector.broadcast %71 : vector<1x8x1xf32> to vector<1x8x8xf32>
    %73 = arith.mulf %68, %72 : vector<1x8x8xf32>
    %74 = arith.truncf %73 : vector<1x8x8xf32> to vector<1x8x8xbf16>
    "tpu.trace_start"() <{level = 10 : i32, message = "bqk,bkd->bqd"}> : () -> ()
    %cst_17 = arith.constant dense<0.000000e+00> : vector<1x8x8xf32>
    %75 = tpu.matmul %74, %62, %cst_17 {dimension_numbers = #tpu.dot_dimension_numbers<[2], [1], [1], [2], [0, 0, 0, 1, 1, 2], [0], [0]>} : vector<1x8x8xbf16>, vector<1x8x8xbf16>, vector<1x8x8xf32> -> vector<1x8x8xf32>
    "tpu.trace_stop"() : () -> ()
    %76 = vector.shape_cast %75 : vector<1x8x8xf32> to vector<8x8xf32>
    %77 = vector.extract_strided_slice %7 {offsets = [0, 24], sizes = [8, 8], strides = [1, 1]} : vector<8x96xf32> to vector<8x8xf32>
    %78 = vector.shape_cast %77 : vector<8x8xf32> to vector<1x8x8xf32>
    %79 = arith.truncf %78 : vector<1x8x8xf32> to vector<1x8x8xbf16>
    %80 = vector.extract_strided_slice %7 {offsets = [0, 56], sizes = [8, 8], strides = [1, 1]} : vector<8x96xf32> to vector<8x8xf32>
    %81 = vector.shape_cast %80 : vector<8x8xf32> to vector<1x8x8xf32>
    %82 = arith.truncf %81 : vector<1x8x8xf32> to vector<1x8x8xbf16>
    %83 = vector.extract_strided_slice %7 {offsets = [0, 88], sizes = [8, 8], strides = [1, 1]} : vector<8x96xf32> to vector<8x8xf32>
    %84 = vector.shape_cast %83 : vector<8x8xf32> to vector<1x8x8xf32>
    %85 = arith.truncf %84 : vector<1x8x8xf32> to vector<1x8x8xbf16>
    "tpu.trace_start"() <{level = 10 : i32, message = "bqd,bkd->bqk"}> : () -> ()
    %cst_18 = arith.constant dense<0.000000e+00> : vector<1x8x8xf32>
    %86 = tpu.matmul %79, %82, %cst_18 {dimension_numbers = #tpu.dot_dimension_numbers<[2], [2], [1], [1], [0, 0, 0, 1, 1, 1], [0], [0]>} : vector<1x8x8xbf16>, vector<1x8x8xbf16>, vector<1x8x8xf32> -> vector<1x8x8xf32>
    "tpu.trace_stop"() : () -> ()
    %cst_19 = arith.constant dense<0xFF800000> : vector<1x8xf32>
    %87 = vector.multi_reduction <maximumf>, %86, %cst_19 [2] : vector<1x8x8xf32> to vector<1x8xf32>
    %88 = vector.shape_cast %87 : vector<1x8xf32> to vector<1x8x1xf32>
    %89 = vector.broadcast %88 : vector<1x8x1xf32> to vector<1x8x8xf32>
    %90 = arith.subf %86, %89 : vector<1x8x8xf32>
    %91 = math.exp %90 : vector<1x8x8xf32>
    %cst_20 = arith.constant dense<0.000000e+00> : vector<1x8xf32>
    %92 = vector.multi_reduction <add>, %91, %cst_20 [2] : vector<1x8x8xf32> to vector<1x8xf32>
    %93 = vector.shape_cast %92 : vector<1x8xf32> to vector<1x8x1xf32>
    %94 = tpu.reciprocal %93 {approx = true} : vector<1x8x1xf32> -> vector<1x8x1xf32>
    %95 = vector.broadcast %94 : vector<1x8x1xf32> to vector<1x8x8xf32>
    %96 = arith.mulf %91, %95 : vector<1x8x8xf32>
    %97 = arith.truncf %96 : vector<1x8x8xf32> to vector<1x8x8xbf16>
    "tpu.trace_start"() <{level = 10 : i32, message = "bqk,bkd->bqd"}> : () -> ()
    %cst_21 = arith.constant dense<0.000000e+00> : vector<1x8x8xf32>
    %98 = tpu.matmul %97, %85, %cst_21 {dimension_numbers = #tpu.dot_dimension_numbers<[2], [1], [1], [2], [0, 0, 0, 1, 1, 2], [0], [0]>} : vector<1x8x8xbf16>, vector<1x8x8xbf16>, vector<1x8x8xf32> -> vector<1x8x8xf32>
    "tpu.trace_stop"() : () -> ()
    %99 = vector.shape_cast %98 : vector<1x8x8xf32> to vector<8x8xf32>
    %100 = tpu.concatenate %30, %53, %76, %99 in 1 : vector<8x8xf32>, vector<8x8xf32>, vector<8x8xf32>, vector<8x8xf32> -> vector<8x32xf32>
    %101 = arith.truncf %100 : vector<8x32xf32> to vector<8x32xbf16>
    %c0_22 = arith.constant 0 : index
    %c0_23 = arith.constant 0 : index
    %102 = vector.load %arg4[%c0_22, %c0_23] : memref<32x32xbf16, #tpu.memory_space<vmem>>, vector<32x32xbf16>
    %cst_24 = arith.constant dense<0.000000e+00> : vector<8x32xf32>
    %103 = tpu.matmul %101, %102, %cst_24 {dimension_numbers = #tpu.dot_dimension_numbers<[1], [0], [0], [1], [0, 0, 1, 1], [], []>} : vector<8x32xbf16>, vector<32x32xbf16>, vector<8x32xf32> -> vector<8x32xf32>
    %c0_25 = arith.constant 0 : index
    %c0_26 = arith.constant 0 : index
    %104 = vector.load %arg5[%c0_25, %c0_26] : memref<1x32xf32, #tpu.memory_space<vmem>>, vector<1x32xf32>
    %105 = vector.broadcast %104 : vector<1x32xf32> to vector<8x32xf32>
    %106 = arith.addf %103, %105 : vector<8x32xf32>
    %107 = arith.addf %1, %106 : vector<8x32xf32>
    %c0_27 = arith.constant 0 : index
    %c0_28 = arith.constant 0 : index
    %108 = vector.load %arg6[%c0_27, %c0_28] : memref<1x32xf32, #tpu.memory_space<vmem>>, vector<1x32xf32>
    %c0_29 = arith.constant 0 : index
    %c0_30 = arith.constant 0 : index
    %109 = vector.load %arg7[%c0_29, %c0_30] : memref<1x32xf32, #tpu.memory_space<vmem>>, vector<1x32xf32>
    %cst_31 = arith.constant dense<0.000000e+00> : vector<8xf32>
    %110 = vector.multi_reduction <add>, %107, %cst_31 [1] : vector<8x32xf32> to vector<8xf32>
    %111 = vector.shape_cast %110 : vector<8xf32> to vector<8x1xf32>
    %cst_32 = arith.constant 3.200000e+01 : f32
    %112 = vector.broadcast %cst_32 : f32 to vector<8x1xf32>
    %113 = arith.divf %111, %112 : vector<8x1xf32>
    %114 = vector.broadcast %113 : vector<8x1xf32> to vector<8x32xf32>
    %115 = arith.subf %107, %114 : vector<8x32xf32>
    %116 = arith.mulf %115, %115 : vector<8x32xf32>
    %cst_33 = arith.constant dense<0.000000e+00> : vector<8xf32>
    %117 = vector.multi_reduction <add>, %116, %cst_33 [1] : vector<8x32xf32> to vector<8xf32>
    %118 = vector.shape_cast %117 : vector<8xf32> to vector<8x1xf32>
    %cst_34 = arith.constant 3.200000e+01 : f32
    %119 = vector.broadcast %cst_34 : f32 to vector<8x1xf32>
    %120 = arith.divf %118, %119 : vector<8x1xf32>
    %121 = vector.broadcast %113 : vector<8x1xf32> to vector<8x32xf32>
    %122 = arith.subf %107, %121 : vector<8x32xf32>
    %cst_35 = arith.constant 9.99999974E-6 : f32
    %123 = vector.broadcast %cst_35 : f32 to vector<8x1xf32>
    %124 = arith.addf %120, %123 : vector<8x1xf32>
    %125 = math.rsqrt %124 : vector<8x1xf32>
    %126 = vector.broadcast %125 : vector<8x1xf32> to vector<8x32xf32>
    %127 = arith.mulf %122, %126 : vector<8x32xf32>
    %128 = vector.broadcast %108 : vector<1x32xf32> to vector<8x32xf32>
    %129 = arith.mulf %127, %128 : vector<8x32xf32>
    %130 = vector.broadcast %109 : vector<1x32xf32> to vector<8x32xf32>
    %131 = arith.addf %129, %130 : vector<8x32xf32>
    %132 = arith.truncf %131 : vector<8x32xf32> to vector<8x32xbf16>
    %c0_36 = arith.constant 0 : index
    %c0_37 = arith.constant 0 : index
    %133 = vector.load %arg8[%c0_36, %c0_37] : memref<32x64xbf16, #tpu.memory_space<vmem>>, vector<32x64xbf16>
    %cst_38 = arith.constant dense<0.000000e+00> : vector<8x64xf32>
    %134 = tpu.matmul %132, %133, %cst_38 {dimension_numbers = #tpu.dot_dimension_numbers<[1], [0], [0], [1], [0, 0, 1, 1], [], []>} : vector<8x32xbf16>, vector<32x64xbf16>, vector<8x64xf32> -> vector<8x64xf32>
    %c0_39 = arith.constant 0 : index
    %c0_40 = arith.constant 0 : index
    %135 = vector.load %arg9[%c0_39, %c0_40] : memref<1x64xf32, #tpu.memory_space<vmem>>, vector<1x64xf32>
    %136 = vector.broadcast %135 : vector<1x64xf32> to vector<8x64xf32>
    %137 = arith.addf %134, %136 : vector<8x64xf32>
    %cst_41 = arith.constant 0.000000e+00 : f32
    %138 = vector.broadcast %cst_41 : f32 to vector<8x64xf32>
    %139 = arith.maximumf %137, %138 : vector<8x64xf32>
    %140 = arith.truncf %139 : vector<8x64xf32> to vector<8x64xbf16>
    %c0_42 = arith.constant 0 : index
    %c0_43 = arith.constant 0 : index
    %141 = vector.load %arg10[%c0_42, %c0_43] : memref<64x32xbf16, #tpu.memory_space<vmem>>, vector<64x32xbf16>
    %cst_44 = arith.constant dense<0.000000e+00> : vector<8x32xf32>
    %142 = tpu.matmul %140, %141, %cst_44 {dimension_numbers = #tpu.dot_dimension_numbers<[1], [0], [0], [1], [0, 0, 1, 1], [], []>} : vector<8x64xbf16>, vector<64x32xbf16>, vector<8x32xf32> -> vector<8x32xf32>
    %c0_45 = arith.constant 0 : index
    %c0_46 = arith.constant 0 : index
    %143 = vector.load %arg11[%c0_45, %c0_46] : memref<1x32xf32, #tpu.memory_space<vmem>>, vector<1x32xf32>
    %144 = vector.broadcast %143 : vector<1x32xf32> to vector<8x32xf32>
    %145 = arith.addf %142, %144 : vector<8x32xf32>
    %146 = arith.addf %131, %145 : vector<8x32xf32>
    %c0_47 = arith.constant 0 : index
    %c0_48 = arith.constant 0 : index
    %147 = vector.load %arg12[%c0_47, %c0_48] : memref<1x32xf32, #tpu.memory_space<vmem>>, vector<1x32xf32>
    %c0_49 = arith.constant 0 : index
    %c0_50 = arith.constant 0 : index
    %148 = vector.load %arg13[%c0_49, %c0_50] : memref<1x32xf32, #tpu.memory_space<vmem>>, vector<1x32xf32>
    %cst_51 = arith.constant dense<0.000000e+00> : vector<8xf32>
    %149 = vector.multi_reduction <add>, %146, %cst_51 [1] : vector<8x32xf32> to vector<8xf32>
    %150 = vector.shape_cast %149 : vector<8xf32> to vector<8x1xf32>
    %cst_52 = arith.constant 3.200000e+01 : f32
    %151 = vector.broadcast %cst_52 : f32 to vector<8x1xf32>
    %152 = arith.divf %150, %151 : vector<8x1xf32>
    %153 = vector.broadcast %152 : vector<8x1xf32> to vector<8x32xf32>
    %154 = arith.subf %146, %153 : vector<8x32xf32>
    %155 = arith.mulf %154, %154 : vector<8x32xf32>
    %cst_53 = arith.constant dense<0.000000e+00> : vector<8xf32>
    %156 = vector.multi_reduction <add>, %155, %cst_53 [1] : vector<8x32xf32> to vector<8xf32>
    %157 = vector.shape_cast %156 : vector<8xf32> to vector<8x1xf32>
    %cst_54 = arith.constant 3.200000e+01 : f32
    %158 = vector.broadcast %cst_54 : f32 to vector<8x1xf32>
    %159 = arith.divf %157, %158 : vector<8x1xf32>
    %160 = vector.broadcast %152 : vector<8x1xf32> to vector<8x32xf32>
    %161 = arith.subf %146, %160 : vector<8x32xf32>
    %cst_55 = arith.constant 9.99999974E-6 : f32
    %162 = vector.broadcast %cst_55 : f32 to vector<8x1xf32>
    %163 = arith.addf %159, %162 : vector<8x1xf32>
    %164 = math.rsqrt %163 : vector<8x1xf32>
    %165 = vector.broadcast %164 : vector<8x1xf32> to vector<8x32xf32>
    %166 = arith.mulf %161, %165 : vector<8x32xf32>
    %167 = vector.broadcast %147 : vector<1x32xf32> to vector<8x32xf32>
    %168 = arith.mulf %166, %167 : vector<8x32xf32>
    %169 = vector.broadcast %148 : vector<1x32xf32> to vector<8x32xf32>
    %170 = arith.addf %168, %169 : vector<8x32xf32>
    %171 = vector.shape_cast %170 : vector<8x32xf32> to vector<1x8x32xf32>
    %c0_56 = arith.constant 0 : index
    %c0_57 = arith.constant 0 : index
    %c0_58 = arith.constant 0 : index
    %172 = vector.load %arg14[%c0_56, %c0_57, %c0_58] : memref<1x8x32xf32, #tpu.memory_space<vmem>>, vector<1x8x32xf32>
    tpu.vector_store %arg14[%c0_56, %c0_57, %c0_58], %171 {strides = array<i32>} : memref<1x8x32xf32, #tpu.memory_space<vmem>>, vector<1x8x32xf32>,
    return
  }
  func.func @transform_0(%arg0: i32) -> (i32, i32, i32) {
    %c0_i32 = arith.constant 0 : i32
    %c0_i32_0 = arith.constant 0 : i32
    %c0_i32_1 = arith.constant 0 : i32
    return %arg0, %c0_i32, %c0_i32_0 : i32, i32, i32
  }
  func.func @transform_1(%arg0: i32) -> (i32, i32) {
    %c0_i32 = arith.constant 0 : i32
    %c0_i32_0 = arith.constant 0 : i32
    %c0_i32_1 = arith.constant 0 : i32
    return %c0_i32, %c0_i32_0 : i32, i32
  }
  func.func @transform_2(%arg0: i32) -> (i32, i32) {
    %c0_i32 = arith.constant 0 : i32
    %c0_i32_0 = arith.constant 0 : i32
    %c0_i32_1 = arith.constant 0 : i32
    return %c0_i32, %c0_i32_0 : i32, i32
  }
  func.func @transform_3(%arg0: i32) -> (i32, i32) {
    %c0_i32 = arith.constant 0 : i32
    %c0_i32_0 = arith.constant 0 : i32
    %c0_i32_1 = arith.constant 0 : i32
    return %c0_i32, %c0_i32_0 : i32, i32
  }
  func.func @transform_4(%arg0: i32) -> (i32, i32) {
    %c0_i32 = arith.constant 0 : i32
    %c0_i32_0 = arith.constant 0 : i32
    %c0_i32_1 = arith.constant 0 : i32
    return %c0_i32, %c0_i32_0 : i32, i32
  }
  func.func @transform_5(%arg0: i32) -> (i32, i32) {
    %c0_i32 = arith.constant 0 : i32
    %c0_i32_0 = arith.constant 0 : i32
    %c0_i32_1 = arith.constant 0 : i32
    return %c0_i32, %c0_i32_0 : i32, i32
  }
  func.func @transform_6(%arg0: i32) -> (i32, i32) {
    %c0_i32 = arith.constant 0 : i32
    %c0_i32_0 = arith.constant 0 : i32
    %c0_i32_1 = arith.constant 0 : i32
    return %c0_i32, %c0_i32_0 : i32, i32
  }
  func.func @transform_7(%arg0: i32) -> (i32, i32) {
    %c0_i32 = arith.constant 0 : i32
    %c0_i32_0 = arith.constant 0 : i32
    %c0_i32_1 = arith.constant 0 : i32
    return %c0_i32, %c0_i32_0 : i32, i32
  }
  func.func @transform_8(%arg0: i32) -> (i32, i32) {
    %c0_i32 = arith.constant 0 : i32
    %c0_i32_0 = arith.constant 0 : i32
    %c0_i32_1 = arith.constant 0 : i32
    return %c0_i32, %c0_i32_0 : i32, i32
  }
  func.func @transform_9(%arg0: i32) -> (i32, i32) {
    %c0_i32 = arith.constant 0 : i32
    %c0_i32_0 = arith.constant 0 : i32
    %c0_i32_1 = arith.constant 0 : i32
    return %c0_i32, %c0_i32_0 : i32, i32
  }
  func.func @transform_10(%arg0: i32) -> (i32, i32) {
    %c0_i32 = arith.constant 0 : i32
    %c0_i32_0 = arith.constant 0 : i32
    %c0_i32_1 = arith.constant 0 : i32
    return %c0_i32, %c0_i32_0 : i32, i32
  }
  func.func @transform_11(%arg0: i32) -> (i32, i32) {
    %c0_i32 = arith.constant 0 : i32
    %c0_i32_0 = arith.constant 0 : i32
    %c0_i32_1 = arith.constant 0 : i32
    return %c0_i32, %c0_i32_0 : i32, i32
  }
  func.func @transform_12(%arg0: i32) -> (i32, i32) {
    %c0_i32 = arith.constant 0 : i32
    %c0_i32_0 = arith.constant 0 : i32
    %c0_i32_1 = arith.constant 0 : i32
    return %c0_i32, %c0_i32_0 : i32, i32
  }
  func.func @transform_13(%arg0: i32) -> (i32, i32, i32) {
    %c0_i32 = arith.constant 0 : i32
    %c0_i32_0 = arith.constant 0 : i32
    %c0_i32_1 = arith.constant 0 : i32
    return %arg0, %c0_i32, %c0_i32_0 : i32, i32, i32
  }
}

</mosaic_0001>

<llo_original>
// kernel: tpu_custom_call.1
$region0: #{tpu_custom_call.1}
  #allocation0 [shape = 'u32[]', space=smem, size = 0x4, offset = 0x4, fixed_abs, tag = 'smem constant byte address 0x4 - core index']
  #allocation1 [shape = 'u32[144,128]{1,0:T(1,128)}', space=vmem, size = 0x12000, scoped, tag = 'internal scratch']
  %s0 = inlined_call_operand.vmem [shape: f32[2,8,32], index: 0, kind: input, shape index: {}]
  %s1 = inlined_call_operand.vmem [shape: bf16[32,96], index: 1, kind: input, shape index: {}]
  %s2 = inlined_call_operand.vmem [shape: f32[1,96], index: 2, kind: input, shape index: {}]
  %s3 = inlined_call_operand.vmem [shape: bf16[32,32], index: 3, kind: input, shape index: {}]
  %s4 = inlined_call_operand.vmem [shape: f32[1,32], index: 4, kind: input, shape index: {}]
  %s5 = inlined_call_operand.vmem [shape: f32[1,32], index: 5, kind: input, shape index: {}]
  %s6 = inlined_call_operand.vmem [shape: f32[1,32], index: 6, kind: input, shape index: {}]
  %s7 = inlined_call_operand.hbm [shape: bf16[32,64], index: 7, kind: input, shape index: {}]
  %s8 = inlined_call_operand.vmem [shape: f32[1,64], index: 8, kind: input, shape index: {}]
  %s9 = inlined_call_operand.vmem [shape: bf16[64,32], index: 9, kind: input, shape index: {}]
  %s10 = inlined_call_operand.vmem [shape: f32[1,32], index: 10, kind: input, shape index: {}]
  %s11 = inlined_call_operand.vmem [shape: f32[1,32], index: 11, kind: input, shape index: {}]
  %s12 = inlined_call_operand.vmem [shape: f32[1,32], index: 12, kind: input, shape index: {}]
  %s13 = inlined_call_operand.hbm [shape: f32[2,8,32], index: 13, kind: output, shape index: {}]
  %s14 = sld [smem:[#allocation0]]
  $region89: #{tpu_custom_call.1} parent=0
    _
  %s16 = ssub.s32 1, %s14
  %s17 = scalar_select 0, %s16, %s14
  $region1: #{tpu_custom_call.1} parent=0
    #allocation2 [shape = 'u8[8192]{0}', space=vmem, size = 0x2000, scoped, tag = 'input window, operand 7, single buffered']
    #allocation3 [shape = 's32[2]{0}', space=sflag, size = 0x8, scoped, tag = 'scoped memory for tpu_custom_call.1']
    #allocation4 [shape = 's32[2]{0}', space=sflag, size = 0x8, scoped, tag = 'scoped memory for tpu_custom_call.1']
    #allocation5 [shape = 'u8[8192]{0}', space=vmem, size = 0x2000, scoped, tag = 'output window, operand 0']
    %18 = vsyncpa [#allocation3], 0
    %19 = vsyncpa [#allocation4], 0
    %s20 = scalar_lea.sflag [#allocation4], 1
    %21 = vsyncpa %s20, 0
    loop: start=0, step=1, limit=4
    $region2: #{tpu_custom_call.1} parent=1 // loop_pre_header
      _
    $region3: #{tpu_custom_call.1} parent=1 // loop_header
      %s23 = sphi 0, %s27
      %p24 = scmp.ge.s32.totalorder %s23, 4
      %s33 = sphi 0, %s35
      %s36 = sphi 0, %s33
      %s37 = sphi 0, %s36
      %s53 = sphi 0, %s37
      %s57 = sphi 0, %s57
      %s59 = sphi 0, %s57
      %s60 = sphi 0, %s59
      %s74 = sphi 0, %s60
      %s78 = sphi 0, %s78
      %s80 = sphi 0, %s78
      %s81 = sphi 0, %s80
      %s95 = sphi 0, %s81
      %s99 = sphi 0, %s99
      %s101 = sphi 0, %s99
      %s102 = sphi 0, %s101
      %s116 = sphi 0, %s102
      %s120 = sphi 0, %s120
      %s122 = sphi 0, %s120
      %s123 = sphi 0, %s122
      %s137 = sphi 0, %s123
      %s141 = sphi 0, %s141
      %s143 = sphi 0, %s141
      %s144 = sphi 0, %s143
      %s158 = sphi 0, %s144
      %s162 = sphi 0, %s162
      %s164 = sphi 0, %s162
      %s165 = sphi 0, %s164
      %s179 = sphi 0, %s165
      %s183 = sphi 0, %s183
      %s185 = sphi 0, %s183
      %s186 = sphi 0, %s185
      %s200 = sphi 0, %s186
      %s204 = sphi 0, %s204
      %s206 = sphi 0, %s204
      %s207 = sphi 0, %s206
      %s221 = sphi 0, %s207
      %s225 = sphi 0, %s225
      %s227 = sphi 0, %s225
      %s228 = sphi 0, %s227
      %s242 = sphi 0, %s228
      %s246 = sphi 0, %s246
      %s248 = sphi 0, %s246
      %s249 = sphi 0, %s248
      %s263 = sphi 0, %s249
      %s267 = sphi 0, %s267
      %s269 = sphi 0, %s267
      %s270 = sphi 0, %s269
      %s284 = sphi 0, %s270
      %s288 = sphi 0, %s288
      %s290 = sphi 0, %s288
      %s291 = sphi 0, %s290
      %s305 = sphi 0, %s291
      %s311 = sphi 0, %s313
      %s314 = sphi 0, %s311
      %s315 = sphi 0, %s314
      %s331 = sphi 0, %s315
    $region4: #{tpu_custom_call.1} parent=1 // loop_header_branch
      %26 = sbr.rel (%p24) target = $region8
    $region5: #{tpu_custom_call.1} parent=1 // loop_body
      %s28 = ssub.s32 %s23, 1
      %s29 = ssub.s32 %s23, 2
      %s30 = sadd.s32 %s23, 1
      %s31 = ssub.s32 %s23, %s30
      %p32 = scmp.eq.s32.totalorder %s31, 0
      %s34 = sadd.s32 %s33, 1
      %s35 = scalar_select %p32, %s33, %s34
      %p38 = pneg %p32
      %p39 = scmp.eq.s32.totalorder %s23, 1
      %p40 = por %p38, %p39
      %p41 = scmp.ne.s32.totalorder %s33, %s36
      %p42 = scmp.eq.s32.totalorder %s23, 0
      %p43 = por %p41, %p42
      %p44 = scmp.ne.s32.totalorder %s33, %s36
      %p45 = scmp.eq.s32.totalorder %s28, 1
      %p46 = por %p44, %p45
      %p47 = scmp.ne.s32.totalorder %s36, %s37
      %p48 = scmp.eq.s32.totalorder %s28, 0
      %p49 = por %p47, %p48
      %p50 = scmp.ne.s32.totalorder %s36, %s37
      %p51 = scmp.eq.s32.totalorder %s29, 1
      %p52 = por %p50, %p51
      %p54 = scmp.ne.s32.totalorder %s37, %s53
      %p55 = scmp.eq.s32.totalorder %s29, 0
      %p56 = por %p54, %p55
      %s58 = sadd.s32 %s57, 1
      %p61 = scmp.eq.s32.totalorder %s23, 1
      %p62 = scmp.ne.s32.totalorder %s57, %s59
      %p63 = scmp.eq.s32.totalorder %s23, 0
      %p64 = por %p62, %p63
      %p65 = scmp.ne.s32.totalorder %s57, %s59
      %p66 = scmp.eq.s32.totalorder %s28, 1
      %p67 = por %p65, %p66
      %p68 = scmp.ne.s32.totalorder %s59, %s60
      %p69 = scmp.eq.s32.totalorder %s28, 0
      %p70 = por %p68, %p69
      %p71 = scmp.ne.s32.totalorder %s59, %s60
      %p72 = scmp.eq.s32.totalorder %s29, 1
      %p73 = por %p71, %p72
      %p75 = scmp.ne.s32.totalorder %s60, %s74
      %p76 = scmp.eq.s32.totalorder %s29, 0
      %p77 = por %p75, %p76
      %s79 = sadd.s32 %s78, 1
      %p82 = scmp.eq.s32.totalorder %s23, 1
      %p83 = scmp.ne.s32.totalorder %s78, %s80
      %p84 = scmp.eq.s32.totalorder %s23, 0
      %p85 = por %p83, %p84
      %p86 = scmp.ne.s32.totalorder %s78, %s80
      %p87 = scmp.eq.s32.totalorder %s28, 1
      %p88 = por %p86, %p87
      %p89 = scmp.ne.s32.totalorder %s80, %s81
      %p90 = scmp.eq.s32.totalorder %s28, 0
      %p91 = por %p89, %p90
      %p92 = scmp.ne.s32.totalorder %s80, %s81
      %p93 = scmp.eq.s32.totalorder %s29, 1
      %p94 = por %p92, %p93
      %p96 = scmp.ne.s32.totalorder %s81, %s95
      %p97 = scmp.eq.s32.totalorder %s29, 0
      %p98 = por %p96, %p97
      %s100 = sadd.s32 %s99, 1
      %p103 = scmp.eq.s32.totalorder %s23, 1
      %p104 = scmp.ne.s32.totalorder %s99, %s101
      %p105 = scmp.eq.s32.totalorder %s23, 0
      %p106 = por %p104, %p105
      %p107 = scmp.ne.s32.totalorder %s99, %s101
      %p108 = scmp.eq.s32.totalorder %s28, 1
      %p109 = por %p107, %p108
      %p110 = scmp.ne.s32.totalorder %s101, %s102
      %p111 = scmp.eq.s32.totalorder %s28, 0
      %p112 = por %p110, %p111
      %p113 = scmp.ne.s32.totalorder %s101, %s102
      %p114 = scmp.eq.s32.totalorder %s29, 1
      %p115 = por %p113, %p114
      %p117 = scmp.ne.s32.totalorder %s102, %s116
      %p118 = scmp.eq.s32.totalorder %s29, 0
      %p119 = por %p117, %p118
      %s121 = sadd.s32 %s120, 1
      %p124 = scmp.eq.s32.totalorder %s23, 1
      %p125 = scmp.ne.s32.totalorder %s120, %s122
      %p126 = scmp.eq.s32.totalorder %s23, 0
      %p127 = por %p125, %p126
      %p128 = scmp.ne.s32.totalorder %s120, %s122
      %p129 = scmp.eq.s32.totalorder %s28, 1
      %p130 = por %p128, %p129
      %p131 = scmp.ne.s32.totalorder %s122, %s123
      %p132 = scmp.eq.s32.totalorder %s28, 0
      %p133 = por %p131, %p132
      %p134 = scmp.ne.s32.totalorder %s122, %s123
      %p135 = scmp.eq.s32.totalorder %s29, 1
      %p136 = por %p134, %p135
      %p138 = scmp.ne.s32.totalorder %s123, %s137
      %p139 = scmp.eq.s32.totalorder %s29, 0
      %p140 = por %p138, %p139
      %s142 = sadd.s32 %s141, 1
      %p145 = scmp.eq.s32.totalorder %s23, 1
      %p146 = scmp.ne.s32.totalorder %s141, %s143
      %p147 = scmp.eq.s32.totalorder %s23, 0
      %p148 = por %p146, %p147
      %p149 = scmp.ne.s32.totalorder %s141, %s143
      %p150 = scmp.eq.s32.totalorder %s28, 1
      %p151 = por %p149, %p150
      %p152 = scmp.ne.s32.totalorder %s143, %s144
      %p153 = scmp.eq.s32.totalorder %s28, 0
      %p154 = por %p152, %p153
      %p155 = scmp.ne.s32.totalorder %s143, %s144
      %p156 = scmp.eq.s32.totalorder %s29, 1
      %p157 = por %p155, %p156
      %p159 = scmp.ne.s32.totalorder %s144, %s158
      %p160 = scmp.eq.s32.totalorder %s29, 0
      %p161 = por %p159, %p160
      %s163 = sadd.s32 %s162, 1
      %p166 = scmp.eq.s32.totalorder %s23, 1
      %p167 = scmp.ne.s32.totalorder %s162, %s164
      %p168 = scmp.eq.s32.totalorder %s23, 0
      %p169 = por %p167, %p168
      %p170 = scmp.ne.s32.totalorder %s162, %s164
      %p171 = scmp.eq.s32.totalorder %s28, 1
      %p172 = por %p170, %p171
      %p173 = scmp.ne.s32.totalorder %s164, %s165
      %p174 = scmp.eq.s32.totalorder %s28, 0
      %p175 = por %p173, %p174
      %p176 = scmp.ne.s32.totalorder %s164, %s165
      %p177 = scmp.eq.s32.totalorder %s29, 1
      %p178 = por %p176, %p177
      %p180 = scmp.ne.s32.totalorder %s165, %s179
      %p181 = scmp.eq.s32.totalorder %s29, 0
      %p182 = por %p180, %p181
      %s184 = sadd.s32 %s183, 1
      %p187 = scmp.eq.s32.totalorder %s23, 1
      %p188 = scmp.ne.s32.totalorder %s183, %s185
      %p189 = scmp.eq.s32.totalorder %s23, 0
      %p190 = por %p188, %p189
      %p191 = scmp.ne.s32.totalorder %s183, %s185
      %p192 = scmp.eq.s32.totalorder %s28, 1
      %p193 = por %p191, %p192
      %p194 = scmp.ne.s32.totalorder %s185, %s186
      %p195 = scmp.eq.s32.totalorder %s28, 0
      %p196 = por %p194, %p195
      %p197 = scmp.ne.s32.totalorder %s185, %s186
      %p198 = scmp.eq.s32.totalorder %s29, 1
      %p199 = por %p197, %p198
      %p201 = scmp.ne.s32.totalorder %s186, %s200
      %p202 = scmp.eq.s32.totalorder %s29, 0
      %p203 = por %p201, %p202
      %s205 = sadd.s32 %s204, 1
      %p208 = scmp.eq.s32.totalorder %s23, 1
      %p209 = scmp.ne.s32.totalorder %s204, %s206
      %p210 = scmp.eq.s32.totalorder %s23, 0
      %p211 = por %p209, %p210
      %p212 = scmp.ne.s32.totalorder %s204, %s206
      %p213 = scmp.eq.s32.totalorder %s28, 1
      %p214 = por %p212, %p213
      %p215 = scmp.ne.s32.totalorder %s206, %s207
      %p216 = scmp.eq.s32.totalorder %s28, 0
      %p217 = por %p215, %p216
      %p218 = scmp.ne.s32.totalorder %s206, %s207
      %p219 = scmp.eq.s32.totalorder %s29, 1
      %p220 = por %p218, %p219
      %p222 = scmp.ne.s32.totalorder %s207, %s221
      %p223 = scmp.eq.s32.totalorder %s29, 0
      %p224 = por %p222, %p223
      %s226 = sadd.s32 %s225, 1
      %p229 = scmp.eq.s32.totalorder %s23, 1
      %p230 = scmp.ne.s32.totalorder %s225, %s227
      %p231 = scmp.eq.s32.totalorder %s23, 0
      %p232 = por %p230, %p231
      %p233 = scmp.ne.s32.totalorder %s225, %s227
      %p234 = scmp.eq.s32.totalorder %s28, 1
      %p235 = por %p233, %p234
      %p236 = scmp.ne.s32.totalorder %s227, %s228
      %p237 = scmp.eq.s32.totalorder %s28, 0
      %p238 = por %p236, %p237
      %p239 = scmp.ne.s32.totalorder %s227, %s228
      %p240 = scmp.eq.s32.totalorder %s29, 1
      %p241 = por %p239, %p240
      %p243 = scmp.ne.s32.totalorder %s228, %s242
      %p244 = scmp.eq.s32.totalorder %s29, 0
      %p245 = por %p243, %p244
      %s247 = sadd.s32 %s246, 1
      %p250 = scmp.eq.s32.totalorder %s23, 1
      %p251 = scmp.ne.s32.totalorder %s246, %s248
      %p252 = scmp.eq.s32.totalorder %s23, 0
      %p253 = por %p251, %p252
      %p254 = scmp.ne.s32.totalorder %s246, %s248
      %p255 = scmp.eq.s32.totalorder %s28, 1
      %p256 = por %p254, %p255
      %p257 = scmp.ne.s32.totalorder %s248, %s249
      %p258 = scmp.eq.s32.totalorder %s28, 0
      %p259 = por %p257, %p258
      %p260 = scmp.ne.s32.totalorder %s248, %s249
      %p261 = scmp.eq.s32.totalorder %s29, 1
      %p262 = por %p260, %p261
      %p264 = scmp.ne.s32.totalorder %s249, %s263
      %p265 = scmp.eq.s32.totalorder %s29, 0
      %p266 = por %p264, %p265
      %s268 = sadd.s32 %s267, 1
      %p271 = scmp.eq.s32.totalorder %s23, 1
      %p272 = scmp.ne.s32.totalorder %s267, %s269
      %p273 = scmp.eq.s32.totalorder %s23, 0
      %p274 = por %p272, %p273
      %p275 = scmp.ne.s32.totalorder %s267, %s269
      %p276 = scmp.eq.s32.totalorder %s28, 1
      %p277 = por %p275, %p276
      %p278 = scmp.ne.s32.totalorder %s269, %s270
      %p279 = scmp.eq.s32.totalorder %s28, 0
      %p280 = por %p278, %p279
      %p281 = scmp.ne.s32.totalorder %s269, %s270
      %p282 = scmp.eq.s32.totalorder %s29, 1
      %p283 = por %p281, %p282
      %p285 = scmp.ne.s32.totalorder %s270, %s284
      %p286 = scmp.eq.s32.totalorder %s29, 0
      %p287 = por %p285, %p286
      %s289 = sadd.s32 %s288, 1
      %p292 = scmp.eq.s32.totalorder %s23, 1
      %p293 = scmp.ne.s32.totalorder %s288, %s290
      %p294 = scmp.eq.s32.totalorder %s23, 0
      %p295 = por %p293, %p294
      %p296 = scmp.ne.s32.totalorder %s288, %s290
      %p297 = scmp.eq.s32.totalorder %s28, 1
      %p298 = por %p296, %p297
      %p299 = scmp.ne.s32.totalorder %s290, %s291
      %p300 = scmp.eq.s32.totalorder %s28, 0
      %p301 = por %p299, %p300
      %p302 = scmp.ne.s32.totalorder %s290, %s291
      %p303 = scmp.eq.s32.totalorder %s29, 1
      %p304 = por %p302, %p303
      %p306 = scmp.ne.s32.totalorder %s291, %s305
      %p307 = scmp.eq.s32.totalorder %s29, 0
      %p308 = por %p306, %p307
      %s309 = ssub.s32 %s23, %s30
      %p310 = scmp.eq.s32.totalorder %s309, 0
      %s312 = sadd.s32 %s311, 1
      %s313 = scalar_select %p310, %s311, %s312
      %p316 = pneg %p310
      %p317 = scmp.eq.s32.totalorder %s23, 1
      %p318 = por %p316, %p317
      %p319 = scmp.ne.s32.totalorder %s311, %s314
      %p320 = scmp.eq.s32.totalorder %s23, 0
      %p321 = por %p319, %p320
      %p322 = scmp.ne.s32.totalorder %s311, %s314
      %p323 = scmp.eq.s32.totalorder %s28, 1
      %p324 = por %p322, %p323
      %p325 = scmp.ne.s32.totalorder %s314, %s315
      %p326 = scmp.eq.s32.totalorder %s28, 0
      %p327 = por %p325, %p326
      %p328 = scmp.ne.s32.totalorder %s314, %s315
      %p329 = scmp.eq.s32.totalorder %s29, 1
      %p330 = por %p328, %p329
      %p332 = scmp.ne.s32.totalorder %s315, %s331
      %p333 = scmp.eq.s32.totalorder %s29, 0
      %p334 = por %p332, %p333
      %p335 = scmp.le.s32.totalorder 1, %s23
      %p336 = scmp.lt.s32.totalorder %s23, 3
      %p337 = pnand %p335, %p336
      %p338 = pneg %p337
      // Predicated region
      $region9: #{tpu_custom_call.1} parent=5 // pred_check
        _
      $region10: #{tpu_custom_call.1} parent=5 // pred_check_branch
        %340 = sbr.rel (%p337) target = $region12
      $region11: #{tpu_custom_call.1} parent=5 // pred_region
        %s341 = ssub.s32 %s23, 1
        // Predicated region
        $region13: #{tpu_custom_call.1} parent=11 // pred_check
          %p342 = pneg %p70
        $region14: #{tpu_custom_call.1} parent=11 // pred_check_branch
          %344 = sbr.rel (%p342) target = $region16
        $region15: #{tpu_custom_call.1} parent=11 // pred_region
          _
        $region16: #{tpu_custom_call.1} parent=11 // pred_fallthru
          _
        // Predicated region
        $region17: #{tpu_custom_call.1} parent=11 // pred_check
          %p345 = pneg %p91
        $region18: #{tpu_custom_call.1} parent=11 // pred_check_branch
          %347 = sbr.rel (%p345) target = $region20
        $region19: #{tpu_custom_call.1} parent=11 // pred_region
          _
        $region20: #{tpu_custom_call.1} parent=11 // pred_fallthru
          _
        // Predicated region
        $region21: #{tpu_custom_call.1} parent=11 // pred_check
          %p348 = pneg %p112
        $region22: #{tpu_custom_call.1} parent=11 // pred_check_branch
          %350 = sbr.rel (%p348) target = $region24
        $region23: #{tpu_custom_call.1} parent=11 // pred_region
          _
        $region24: #{tpu_custom_call.1} parent=11 // pred_fallthru
          _
        // Predicated region
        $region25: #{tpu_custom_call.1} parent=11 // pred_check
          %p351 = pneg %p133
        $region26: #{tpu_custom_call.1} parent=11 // pred_check_branch
          %353 = sbr.rel (%p351) target = $region28
        $region27: #{tpu_custom_call.1} parent=11 // pred_region
          _
        $region28: #{tpu_custom_call.1} parent=11 // pred_fallthru
          _
        // Predicated region
        $region29: #{tpu_custom_call.1} parent=11 // pred_check
          %p354 = pneg %p154
        $region30: #{tpu_custom_call.1} parent=11 // pred_check_branch
          %356 = sbr.rel (%p354) target = $region32
        $region31: #{tpu_custom_call.1} parent=11 // pred_region
          _
        $region32: #{tpu_custom_call.1} parent=11 // pred_fallthru
          _
        // Predicated region
        $region33: #{tpu_custom_call.1} parent=11 // pred_check
          %p357 = pneg %p175
        $region34: #{tpu_custom_call.1} parent=11 // pred_check_branch
          %359 = sbr.rel (%p357) target = $region36
        $region35: #{tpu_custom_call.1} parent=11 // pred_region
          _
        $region36: #{tpu_custom_call.1} parent=11 // pred_fallthru
          _
        // Predicated region
        $region37: #{tpu_custom_call.1} parent=11 // pred_check
          %p360 = pneg %p196
        $region38: #{tpu_custom_call.1} parent=11 // pred_check_branch
          %362 = sbr.rel (%p360) target = $region40
        $region39: #{tpu_custom_call.1} parent=11 // pred_region
          %s364 = ssub.s32 256, 256
          %365 = vsyncadd [#allocation3], %s364
          %s366 = sshll.u32 [#allocation2], 4
          %s367 = int_to_ptr.vmem [resolvable:$true] %s366
          %372 = dma.hbm_to_vmem [thread:$0]  %s7, 256, %s367, [#allocation3], 64, 64, 4
        $region40: #{tpu_custom_call.1} parent=11 // pred_fallthru
          _
        // Predicated region
        $region41: #{tpu_custom_call.1} parent=11 // pred_check
          %p373 = pneg %p217
        $region42: #{tpu_custom_call.1} parent=11 // pred_check_branch
          %375 = sbr.rel (%p373) target = $region44
        $region43: #{tpu_custom_call.1} parent=11 // pred_region
          _
        $region44: #{tpu_custom_call.1} parent=11 // pred_fallthru
          _
        // Predicated region
        $region45: #{tpu_custom_call.1} parent=11 // pred_check
          %p376 = pneg %p238
        $region46: #{tpu_custom_call.1} parent=11 // pred_check_branch
          %378 = sbr.rel (%p376) target = $region48
        $region47: #{tpu_custom_call.1} parent=11 // pred_region
          _
        $region48: #{tpu_custom_call.1} parent=11 // pred_fallthru
          _
        // Predicated region
        $region49: #{tpu_custom_call.1} parent=11 // pred_check
          %p379 = pneg %p259
        $region50: #{tpu_custom_call.1} parent=11 // pred_check_branch
          %381 = sbr.rel (%p379) target = $region52
        $region51: #{tpu_custom_call.1} parent=11 // pred_region
          _
        $region52: #{tpu_custom_call.1} parent=11 // pred_fallthru
          _
        // Predicated region
        $region53: #{tpu_custom_call.1} parent=11 // pred_check
          %p382 = pneg %p280
        $region54: #{tpu_custom_call.1} parent=11 // pred_check_branch
          %384 = sbr.rel (%p382) target = $region56
        $region55: #{tpu_custom_call.1} parent=11 // pred_region
          _
        $region56: #{tpu_custom_call.1} parent=11 // pred_fallthru
          _
        // Predicated region
        $region57: #{tpu_custom_call.1} parent=11 // pred_check
          %p385 = pneg %p301
        $region58: #{tpu_custom_call.1} parent=11 // pred_check_branch
          %387 = sbr.rel (%p385) target = $region60
        $region59: #{tpu_custom_call.1} parent=11 // pred_region
          _
        $region60: #{tpu_custom_call.1} parent=11 // pred_fallthru
          _
      $region12: #{tpu_custom_call.1} parent=5 // pred_fallthru
        _
      %p388 = scmp.lt.s32.totalorder %s23, 2
      // Predicated region
      $region61: #{tpu_custom_call.1} parent=5 // pred_check
        %p389 = pneg %p388
      $region62: #{tpu_custom_call.1} parent=5 // pred_check_branch
        %391 = sbr.rel (%p389) target = $region64
      $region63: #{tpu_custom_call.1} parent=5 // pred_region
        // Predicated region
        $region65: #{tpu_custom_call.1} parent=63 // pred_check
          %p392 = pneg %p43
        $region66: #{tpu_custom_call.1} parent=63 // pred_check_branch
          %394 = sbr.rel (%p392) target = $region68
        $region67: #{tpu_custom_call.1} parent=63 // pred_region
          %p395 = scmp.lt.s32.totalorder %s23, 1
          %s396 = scalar_select %p395, %s23, 1
          %s397 = smul.addr %s396, 8
          %s398 = scalar_lea.vmem %s0, %s397
        $region68: #{tpu_custom_call.1} parent=63 // pred_fallthru
          _
      $region64: #{tpu_custom_call.1} parent=5 // pred_fallthru
        _
      %p399 = scmp.le.s32.totalorder 1, %s23
      %p400 = scmp.lt.s32.totalorder %s23, 3
      %p401 = pnand %p399, %p400
      %p402 = pneg %p401
      // Predicated region
      $region69: #{tpu_custom_call.1} parent=5 // pred_check
        _
      $region70: #{tpu_custom_call.1} parent=5 // pred_check_branch
        %404 = sbr.rel (%p401) target = $region72
      $region71: #{tpu_custom_call.1} parent=5 // pred_region
        %s405 = ssub.s32 %s23, 1
        // Predicated region
        $region73: #{tpu_custom_call.1} parent=71 // pred_check
          %p406 = pneg %p196
        $region74: #{tpu_custom_call.1} parent=71 // pred_check_branch
          %408 = sbr.rel (%p406) target = $region76
        $region75: #{tpu_custom_call.1} parent=71 // pred_region
          %409 = dma.done [#allocation3], 256
        $region76: #{tpu_custom_call.1} parent=71 // pred_fallthru
          _
        %p410 = scmp.lt.s32.totalorder %s28, 1
        %s411 = scalar_select %p410, %s28, 1
        %s412 = smul.addr %s411, 8
        %s413 = scalar_lea.vmem %s0, %s412
        %p414 = pneg %p49
        %p415 = pneg %p46
        %p416 = pneg %p70
        %p417 = pneg %p67
        %p418 = pneg %p91
        %p419 = pneg %p88
        %p420 = pneg %p112
        %p421 = pneg %p109
        %p422 = pneg %p133
        %p423 = pneg %p130
        %p424 = pneg %p154
        %p425 = pneg %p151
        %p426 = pneg %p175
        %p427 = pneg %p172
        %p428 = pneg %p196
        %p429 = pneg %p193
        %p430 = pneg %p217
        %p431 = pneg %p214
        %p432 = pneg %p238
        %p433 = pneg %p235
        %p434 = pneg %p259
        %p435 = pneg %p256
        %p436 = pneg %p280
        %p437 = pneg %p277
        %p438 = pneg %p301
        %p439 = pneg %p298
        %p440 = pneg %p327
        %p441 = pneg %p324
        %s442 = sand.u32 %s314, 1
        %s443 = scalar_lea.sflag [#allocation4], %s442
        %s444 = sand.u32 %s314, 1
        %s445 = smul.addr %s444, 8
        %s446 = scalar_lea.vmem [#allocation5], %s445
        %p447 = scmp.lt.s32.totalorder %s28, 1
        %s448 = scalar_select %p447, %s28, 1
        %s449 = smul.addr %s448, 8
        %s450 = scalar_lea.vmem %s0, %s449
        %v452 = vld [vmem:[%s450] sm:$0xff]
        %v453 = vpack.c.bf16 %v452, %v452
        %v454 = vld [vmem:[%s1] sm:$0xf]
        %v455 = vld [vmem:[%s1 + $0x4] sm:$0xf]
        %v456 = vld [vmem:[%s1 + $0x8] sm:$0xf]
        %v457 = vld [vmem:[%s1 + $0xc] sm:$0xf]
        %v458 = vld [vmem:[%s2] sm:$0x1]
        %v460 = vlaneseq
        %v461 = vshrl.u32 %v460, 7
        %v462 = vsub.s32 0, %v461
        %v463 = vrot.slane %v458, %v462
        %v469 = vunpack.c.l.b16 %v454
        %v470 = vunpack.c.l.b16 %v455
        %v471 = vunpack.c.l.b16 %v456
        %v472 = vunpack.c.l.b16 %v457
        %v473 = vpack.c.b16 %v470, %v469
        %v474 = vpack.c.b16 %v472, %v471
        %vm477 = vcmask 261120
        %v479 = vsel %vm477, %v453, 0
        %481 = vmatprep.subr.bf16.mxu0 0
        %482 = vmatpush1.bf16.msra.mxu0 %v473
        %483 = vmatprep.subr.bf16.mxu0 0
        %484 = vmatpush1.bf16.msra.mxu0 %v474
        %485 = vmatprep.subr.bf16.mxu0 0
        %486 = vmatpush1.bf16.msra.mxu0 0
        %487 = vmatprep.subr.bf16.mxu0 0
        %488 = vmatpush1.bf16.msra.mxu0 0
        %489 = vmatprep.subr.bf16.mxu0 0
        %490 = vmatpush1.bf16.msra.mxu0 0
        %491 = vmatprep.subr.bf16.mxu0 0
        %492 = vmatpush1.bf16.msra.mxu0 0
        %493 = vmatprep.subr.bf16.mxu0 0
        %494 = vmatpush1.bf16.msra.mxu0 0
        %495 = vmatprep.subr.bf16.mxu0 0
        %496 = vmatpush1.bf16.msra.mxu0 0
        %497 = vmatprep.subr.bf16.mxu0 0
        %498 = vmatpush1.bf16.msra.mxu0 0
        %499 = vmatprep.subr.bf16.mxu0 0
        %500 = vmatpush1.bf16.msra.mxu0 0
        %501 = vmatprep.subr.bf16.mxu0 0
        %502 = vmatpush1.bf16.msra.mxu0 0
        %503 = vmatprep.subr.bf16.mxu0 0
        %504 = vmatpush1.bf16.msra.mxu0 0
        %505 = vmatprep.subr.bf16.mxu0 0
        %506 = vmatpush1.bf16.msra.mxu0 0
        %507 = vmatprep.subr.bf16.mxu0 0
        %508 = vmatpush1.bf16.msra.mxu0 0
        %509 = vmatprep.subr.bf16.mxu0 0
        %510 = vmatpush1.bf16.msra.mxu0 0
        %511 = vmatprep.subr.bf16.mxu0 0
        %512 = vmatpush1.bf16.msra.mxu0 0
        %513 = vmatprep.mubr.bf16.mxu0 0
        %514 = vmatmul.mubr.bf16.gmra.mrb[0].mxu0 %v479
        %v515 = vpop.f32.mrb[0].mxu0
        %v516 = vadd.f32 %v463, %v515
        %v517 = vpop.f32.mrb[0].mxu0
        %v518 = vpop.f32.mrb[0].mxu0
        %v519 = vpop.f32.mrb[0].mxu0
        %520 = vdwg.mxu0
        %v521 = vpack.c.bf16 %v516, %v516
        %523 = vrot.lane.b32.xlu0 %v521, 96
        %v524 = vpop.permute.xlu0 %523
        %vm525 = vcmask 64512
        %v527 = vsel %vm525, %v521, 0
        %v530 = vsel %vm525, %v524, 0
        %532 = vmatprep.subr.bf16.mxu0 0
        %533 = vmatpush1.bf16.xpose.msra.mxu0 %v530
        %534 = vmatprep.subr.bf16.mxu0 0
        %535 = vmatpush1.bf16.xpose.msra.mxu0 0
        %536 = vmatprep.subr.bf16.mxu0 0
        %537 = vmatpush1.bf16.xpose.msra.mxu0 0
        %538 = vmatprep.subr.bf16.mxu0 0
        %539 = vmatpush1.bf16.xpose.msra.mxu0 0
        %540 = vmatprep.subr.bf16.mxu0 0
        %541 = vmatpush1.bf16.xpose.msra.mxu0 0
        %542 = vmatprep.subr.bf16.mxu0 0
        %543 = vmatpush1.bf16.xpose.msra.mxu0 0
        %544 = vmatprep.subr.bf16.mxu0 0
        %545 = vmatpush1.bf16.xpose.msra.mxu0 0
        %546 = vmatprep.subr.bf16.mxu0 0
        %547 = vmatpush1.bf16.xpose.msra.mxu0 0
        %548 = vmatprep.subr.bf16.mxu0 0
        %549 = vmatpush1.bf16.xpose.msra.mxu0 0
        %550 = vmatprep.subr.bf16.mxu0 0
        %551 = vmatpush1.bf16.xpose.msra.mxu0 0
        %552 = vmatprep.subr.bf16.mxu0 0
        %553 = vmatpush1.bf16.xpose.msra.mxu0 0
        %554 = vmatprep.subr.bf16.mxu0 0
        %555 = vmatpush1.bf16.xpose.msra.mxu0 0
        %556 = vmatprep.subr.bf16.mxu0 0
        %557 = vmatpush1.bf16.xpose.msra.mxu0 0
        %558 = vmatprep.subr.bf16.mxu0 0
        %559 = vmatpush1.bf16.xpose.msra.mxu0 0
        %560 = vmatprep.subr.bf16.mxu0 0
        %561 = vmatpush1.bf16.xpose.msra.mxu0 0
        %562 = vmatprep.subr.bf16.mxu0 0
        %563 = vmatpush1.bf16.xpose.msra.mxu0 0
        %564 = vmatprep.mubr.bf16.mxu0 0
        %565 = vmatmul.mubr.bf16.gmra.mrb[0].mxu0 %v527
        %v566 = vpop.f32.mrb[0].mxu0
        %v567 = vadd.f32 0.0, %v566
        %v568 = vpop.f32.mrb[0].mxu0
        %v569 = vpop.f32.mrb[0].mxu0
        %v570 = vpop.f32.mrb[0].mxu0
        %571 = vdwg.mxu0
        %v572 = vsel %vm525, %v567, -inf
        %573 = vmax.xlane.f32.xlu0 %v572
        %v574 = vpop.xlane.xlu0 %573
        %v575 = vsub.f32 %v567, %v574
        %v576 = vmul.f32 %v575, 1.442695
        %v577 = vpow.pop %v576
        %v578 = vsel %vm525, %v577, 0.0
        %579 = vadd.xlane.f32.xlu0 %v578
        %v580 = vpop.xlane.xlu0 %579
        %v581 = vrcp.pop %v580
        %v582 = vmul.f32 %v577, %v581
        %v583 = vpack.c.bf16 %v582, %v582
        %584 = vrot.lane.b32.xlu0 %v521, 64
        %v585 = vpop.permute.xlu0 %584
        %v587 = vsel %vm525, %v583, 0
        %vm589 = vcmask 1043456
        %v591 = vsel %vm589, %v585, 0
        %593 = vmatprep.subr.bf16.mxu0 0
        %594 = vmatpush1.bf16.msra.mxu0 %v591
        %595 = vmatprep.subr.bf16.mxu0 0
        %596 = vmatpush1.bf16.msra.mxu0 0
        %597 = vmatprep.subr.bf16.mxu0 0
        %598 = vmatpush1.bf16.msra.mxu0 0
        %599 = vmatprep.subr.bf16.mxu0 0
        %600 = vmatpush1.bf16.msra.mxu0 0
        %601 = vmatprep.subr.bf16.mxu0 0
        %602 = vmatpush1.bf16.msra.mxu0 0
        %603 = vmatprep.subr.bf16.mxu0 0
        %604 = vmatpush1.bf16.msra.mxu0 0
        %605 = vmatprep.subr.bf16.mxu0 0
        %606 = vmatpush1.bf16.msra.mxu0 0
        %607 = vmatprep.subr.bf16.mxu0 0
        %608 = vmatpush1.bf16.msra.mxu0 0
        %609 = vmatprep.subr.bf16.mxu0 0
        %610 = vmatpush1.bf16.msra.mxu0 0
        %611 = vmatprep.subr.bf16.mxu0 0
        %612 = vmatpush1.bf16.msra.mxu0 0
        %613 = vmatprep.subr.bf16.mxu0 0
        %614 = vmatpush1.bf16.msra.mxu0 0
        %615 = vmatprep.subr.bf16.mxu0 0
        %616 = vmatpush1.bf16.msra.mxu0 0
        %617 = vmatprep.subr.bf16.mxu0 0
        %618 = vmatpush1.bf16.msra.mxu0 0
        %619 = vmatprep.subr.bf16.mxu0 0
        %620 = vmatpush1.bf16.msra.mxu0 0
        %621 = vmatprep.subr.bf16.mxu0 0
        %622 = vmatpush1.bf16.msra.mxu0 0
        %623 = vmatprep.subr.bf16.mxu0 0
        %624 = vmatpush1.bf16.msra.mxu0 0
        %625 = vmatprep.mubr.bf16.mxu0 0
        %626 = vmatmul.mubr.bf16.gmra.mrb[0].mxu0 %v587
        %v627 = vpop.f32.mrb[0].mxu0
        %v628 = vadd.f32 0.0, %v627
        %v629 = vpop.f32.mrb[0].mxu0
        %v630 = vpop.f32.mrb[0].mxu0
        %v631 = vpop.f32.mrb[0].mxu0
        %632 = vdwg.mxu0
        %633 = vrot.lane.b32.xlu0 %v521, 120
        %v634 = vpop.permute.xlu0 %633
        %635 = vrot.lane.b32.xlu0 %v521, 88
        %v636 = vpop.permute.xlu0 %635
        %v638 = vsel %vm525, %v634, 0
        %v641 = vsel %vm525, %v636, 0
        %643 = vmatprep.subr.bf16.mxu0 0
        %644 = vmatpush1.bf16.xpose.msra.mxu0 %v641
        %645 = vmatprep.subr.bf16.mxu0 0
        %646 = vmatpush1.bf16.xpose.msra.mxu0 0
        %647 = vmatprep.subr.bf16.mxu0 0
        %648 = vmatpush1.bf16.xpose.msra.mxu0 0
        %649 = vmatprep.subr.bf16.mxu0 0
        %650 = vmatpush1.bf16.xpose.msra.mxu0 0
        %651 = vmatprep.subr.bf16.mxu0 0
        %652 = vmatpush1.bf16.xpose.msra.mxu0 0
        %653 = vmatprep.subr.bf16.mxu0 0
        %654 = vmatpush1.bf16.xpose.msra.mxu0 0
        %655 = vmatprep.subr.bf16.mxu0 0
        %656 = vmatpush1.bf16.xpose.msra.mxu0 0
        %657 = vmatprep.subr.bf16.mxu0 0
        %658 = vmatpush1.bf16.xpose.msra.mxu0 0
        %659 = vmatprep.subr.bf16.mxu0 0
        %660 = vmatpush1.bf16.xpose.msra.mxu0 0
        %661 = vmatprep.subr.bf16.mxu0 0
        %662 = vmatpush1.bf16.xpose.msra.mxu0 0
        %663 = vmatprep.subr.bf16.mxu0 0
        %664 = vmatpush1.bf16.xpose.msra.mxu0 0
        %665 = vmatprep.subr.bf16.mxu0 0
        %666 = vmatpush1.bf16.xpose.msra.mxu0 0
        %667 = vmatprep.subr.bf16.mxu0 0
        %668 = vmatpush1.bf16.xpose.msra.mxu0 0
        %669 = vmatprep.subr.bf16.mxu0 0
        %670 = vmatpush1.bf16.xpose.msra.mxu0 0
        %671 = vmatprep.subr.bf16.mxu0 0
        %672 = vmatpush1.bf16.xpose.msra.mxu0 0
        %673 = vmatprep.subr.bf16.mxu0 0
        %674 = vmatpush1.bf16.xpose.msra.mxu0 0
        %675 = vmatprep.mubr.bf16.mxu0 0
        %676 = vmatmul.mubr.bf16.gmra.mrb[0].mxu0 %v638
        %v677 = vpop.f32.mrb[0].mxu0
        %v678 = vadd.f32 0.0, %v677
        %v679 = vpop.f32.mrb[0].mxu0
        %v680 = vpop.f32.mrb[0].mxu0
        %v681 = vpop.f32.mrb[0].mxu0
        %682 = vdwg.mxu0
        %v683 = vsel %vm525, %v678, -inf
        %684 = vmax.xlane.f32.xlu0 %v683
        %v685 = vpop.xlane.xlu0 %684
        %v686 = vsub.f32 %v678, %v685
        %v687 = vmul.f32 %v686, 1.442695
        %v688 = vpow.pop %v687
        %v689 = vsel %vm525, %v688, 0.0
        %690 = vadd.xlane.f32.xlu0 %v689
        %v691 = vpop.xlane.xlu0 %690
        %v692 = vrcp.pop %v691
        %v693 = vmul.f32 %v688, %v692
        %v694 = vpack.c.bf16 %v693, %v693
        %695 = vrot.lane.b32.xlu0 %v521, 56
        %v696 = vpop.permute.xlu0 %695
        %v698 = vsel %vm525, %v694, 0
        %v701 = vsel %vm589, %v696, 0
        %703 = vmatprep.subr.bf16.mxu0 0
        %704 = vmatpush1.bf16.msra.mxu0 %v701
        %705 = vmatprep.subr.bf16.mxu0 0
        %706 = vmatpush1.bf16.msra.mxu0 0
        %707 = vmatprep.subr.bf16.mxu0 0
        %708 = vmatpush1.bf16.msra.mxu0 0
        %709 = vmatprep.subr.bf16.mxu0 0
        %710 = vmatpush1.bf16.msra.mxu0 0
        %711 = vmatprep.subr.bf16.mxu0 0
        %712 = vmatpush1.bf16.msra.mxu0 0
        %713 = vmatprep.subr.bf16.mxu0 0
        %714 = vmatpush1.bf16.msra.mxu0 0
        %715 = vmatprep.subr.bf16.mxu0 0
        %716 = vmatpush1.bf16.msra.mxu0 0
        %717 = vmatprep.subr.bf16.mxu0 0
        %718 = vmatpush1.bf16.msra.mxu0 0
        %719 = vmatprep.subr.bf16.mxu0 0
        %720 = vmatpush1.bf16.msra.mxu0 0
        %721 = vmatprep.subr.bf16.mxu0 0
        %722 = vmatpush1.bf16.msra.mxu0 0
        %723 = vmatprep.subr.bf16.mxu0 0
        %724 = vmatpush1.bf16.msra.mxu0 0
        %725 = vmatprep.subr.bf16.mxu0 0
        %726 = vmatpush1.bf16.msra.mxu0 0
        %727 = vmatprep.subr.bf16.mxu0 0
        %728 = vmatpush1.bf16.msra.mxu0 0
        %729 = vmatprep.subr.bf16.mxu0 0
        %730 = vmatpush1.bf16.msra.mxu0 0
        %731 = vmatprep.subr.bf16.mxu0 0
        %732 = vmatpush1.bf16.msra.mxu0 0
        %733 = vmatprep.subr.bf16.mxu0 0
        %734 = vmatpush1.bf16.msra.mxu0 0
        %735 = vmatprep.mubr.bf16.mxu0 0
        %736 = vmatmul.mubr.bf16.gmra.mrb[0].mxu0 %v698
        %v737 = vpop.f32.mrb[0].mxu0
        %v738 = vadd.f32 0.0, %v737
        %v739 = vpop.f32.mrb[0].mxu0
        %v740 = vpop.f32.mrb[0].mxu0
        %v741 = vpop.f32.mrb[0].mxu0
        %742 = vdwg.mxu0
        %743 = vrot.lane.b32.xlu0 %v521, 112
        %v744 = vpop.permute.xlu0 %743
        %745 = vrot.lane.b32.xlu0 %v521, 80
        %v746 = vpop.permute.xlu0 %745
        %v748 = vsel %vm525, %v744, 0
        %v751 = vsel %vm525, %v746, 0
        %753 = vmatprep.subr.bf16.mxu0 0
        %754 = vmatpush1.bf16.xpose.msra.mxu0 %v751
        %755 = vmatprep.subr.bf16.mxu0 0
        %756 = vmatpush1.bf16.xpose.msra.mxu0 0
        %757 = vmatprep.subr.bf16.mxu0 0
        %758 = vmatpush1.bf16.xpose.msra.mxu0 0
        %759 = vmatprep.subr.bf16.mxu0 0
        %760 = vmatpush1.bf16.xpose.msra.mxu0 0
        %761 = vmatprep.subr.bf16.mxu0 0
        %762 = vmatpush1.bf16.xpose.msra.mxu0 0
        %763 = vmatprep.subr.bf16.mxu0 0
        %764 = vmatpush1.bf16.xpose.msra.mxu0 0
        %765 = vmatprep.subr.bf16.mxu0 0
        %766 = vmatpush1.bf16.xpose.msra.mxu0 0
        %767 = vmatprep.subr.bf16.mxu0 0
        %768 = vmatpush1.bf16.xpose.msra.mxu0 0
        %769 = vmatprep.subr.bf16.mxu0 0
        %770 = vmatpush1.bf16.xpose.msra.mxu0 0
        %771 = vmatprep.subr.bf16.mxu0 0
        %772 = vmatpush1.bf16.xpose.msra.mxu0 0
        %773 = vmatprep.subr.bf16.mxu0 0
        %774 = vmatpush1.bf16.xpose.msra.mxu0 0
        %775 = vmatprep.subr.bf16.mxu0 0
        %776 = vmatpush1.bf16.xpose.msra.mxu0 0
        %777 = vmatprep.subr.bf16.mxu0 0
        %778 = vmatpush1.bf16.xpose.msra.mxu0 0
        %779 = vmatprep.subr.bf16.mxu0 0
        %780 = vmatpush1.bf16.xpose.msra.mxu0 0
        %781 = vmatprep.subr.bf16.mxu0 0
        %782 = vmatpush1.bf16.xpose.msra.mxu0 0
        %783 = vmatprep.subr.bf16.mxu0 0
        %784 = vmatpush1.bf16.xpose.msra.mxu0 0
        %785 = vmatprep.mubr.bf16.mxu0 0
        %786 = vmatmul.mubr.bf16.gmra.mrb[0].mxu0 %v748
        %v787 = vpop.f32.mrb[0].mxu0
        %v788 = vadd.f32 0.0, %v787
        %v789 = vpop.f32.mrb[0].mxu0
        %v790 = vpop.f32.mrb[0].mxu0
        %v791 = vpop.f32.mrb[0].mxu0
        %792 = vdwg.mxu0
        %v793 = vsel %vm525, %v788, -inf
        %794 = vmax.xlane.f32.xlu0 %v793
        %v795 = vpop.xlane.xlu0 %794
        %v796 = vsub.f32 %v788, %v795
        %v797 = vmul.f32 %v796, 1.442695
        %v798 = vpow.pop %v797
        %v799 = vsel %vm525, %v798, 0.0
        %800 = vadd.xlane.f32.xlu0 %v799
        %v801 = vpop.xlane.xlu0 %800
        %v802 = vrcp.pop %v801
        %v803 = vmul.f32 %v798, %v802
        %v804 = vpack.c.bf16 %v803, %v803
        %805 = vrot.lane.b32.xlu0 %v521, 48
        %v806 = vpop.permute.xlu0 %805
        %v808 = vsel %vm525, %v804, 0
        %v811 = vsel %vm589, %v806, 0
        %813 = vmatprep.subr.bf16.mxu0 0
        %814 = vmatpush1.bf16.msra.mxu0 %v811
        %815 = vmatprep.subr.bf16.mxu0 0
        %816 = vmatpush1.bf16.msra.mxu0 0
        %817 = vmatprep.subr.bf16.mxu0 0
        %818 = vmatpush1.bf16.msra.mxu0 0
        %819 = vmatprep.subr.bf16.mxu0 0
        %820 = vmatpush1.bf16.msra.mxu0 0
        %821 = vmatprep.subr.bf16.mxu0 0
        %822 = vmatpush1.bf16.msra.mxu0 0
        %823 = vmatprep.subr.bf16.mxu0 0
        %824 = vmatpush1.bf16.msra.mxu0 0
        %825 = vmatprep.subr.bf16.mxu0 0
        %826 = vmatpush1.bf16.msra.mxu0 0
        %827 = vmatprep.subr.bf16.mxu0 0
        %828 = vmatpush1.bf16.msra.mxu0 0
        %829 = vmatprep.subr.bf16.mxu0 0
        %830 = vmatpush1.bf16.msra.mxu0 0
        %831 = vmatprep.subr.bf16.mxu0 0
        %832 = vmatpush1.bf16.msra.mxu0 0
        %833 = vmatprep.subr.bf16.mxu0 0
        %834 = vmatpush1.bf16.msra.mxu0 0
        %835 = vmatprep.subr.bf16.mxu0 0
        %836 = vmatpush1.bf16.msra.mxu0 0
        %837 = vmatprep.subr.bf16.mxu0 0
        %838 = vmatpush1.bf16.msra.mxu0 0
        %839 = vmatprep.subr.bf16.mxu0 0
        %840 = vmatpush1.bf16.msra.mxu0 0
        %841 = vmatprep.subr.bf16.mxu0 0
        %842 = vmatpush1.bf16.msra.mxu0 0
        %843 = vmatprep.subr.bf16.mxu0 0
        %844 = vmatpush1.bf16.msra.mxu0 0
        %845 = vmatprep.mubr.bf16.mxu0 0
        %846 = vmatmul.mubr.bf16.gmra.mrb[0].mxu0 %v808
        %v847 = vpop.f32.mrb[0].mxu0
        %v848 = vadd.f32 0.0, %v847
        %v849 = vpop.f32.mrb[0].mxu0
        %v850 = vpop.f32.mrb[0].mxu0
        %v851 = vpop.f32.mrb[0].mxu0
        %852 = vdwg.mxu0
        %853 = vrot.lane.b32.xlu0 %v521, 104
        %v854 = vpop.permute.xlu0 %853
        %855 = vrot.lane.b32.xlu0 %v521, 72
        %v856 = vpop.permute.xlu0 %855
        %v858 = vsel %vm525, %v854, 0
        %v861 = vsel %vm525, %v856, 0
        %863 = vmatprep.subr.bf16.mxu0 0
        %864 = vmatpush1.bf16.xpose.msra.mxu0 %v861
        %865 = vmatprep.subr.bf16.mxu0 0
        %866 = vmatpush1.bf16.xpose.msra.mxu0 0
        %867 = vmatprep.subr.bf16.mxu0 0
        %868 = vmatpush1.bf16.xpose.msra.mxu0 0
        %869 = vmatprep.subr.bf16.mxu0 0
        %870 = vmatpush1.bf16.xpose.msra.mxu0 0
        %871 = vmatprep.subr.bf16.mxu0 0
        %872 = vmatpush1.bf16.xpose.msra.mxu0 0
        %873 = vmatprep.subr.bf16.mxu0 0
        %874 = vmatpush1.bf16.xpose.msra.mxu0 0
        %875 = vmatprep.subr.bf16.mxu0 0
        %876 = vmatpush1.bf16.xpose.msra.mxu0 0
        %877 = vmatprep.subr.bf16.mxu0 0
        %878 = vmatpush1.bf16.xpose.msra.mxu0 0
        %879 = vmatprep.subr.bf16.mxu0 0
        %880 = vmatpush1.bf16.xpose.msra.mxu0 0
        %881 = vmatprep.subr.bf16.mxu0 0
        %882 = vmatpush1.bf16.xpose.msra.mxu0 0
        %883 = vmatprep.subr.bf16.mxu0 0
        %884 = vmatpush1.bf16.xpose.msra.mxu0 0
        %885 = vmatprep.subr.bf16.mxu0 0
        %886 = vmatpush1.bf16.xpose.msra.mxu0 0
        %887 = vmatprep.subr.bf16.mxu0 0
        %888 = vmatpush1.bf16.xpose.msra.mxu0 0
        %889 = vmatprep.subr.bf16.mxu0 0
        %890 = vmatpush1.bf16.xpose.msra.mxu0 0
        %891 = vmatprep.subr.bf16.mxu0 0
        %892 = vmatpush1.bf16.xpose.msra.mxu0 0
        %893 = vmatprep.subr.bf16.mxu0 0
        %894 = vmatpush1.bf16.xpose.msra.mxu0 0
        %895 = vmatprep.mubr.bf16.mxu0 0
        %896 = vmatmul.mubr.bf16.gmra.mrb[0].mxu0 %v858
        %v897 = vpop.f32.mrb[0].mxu0
        %v898 = vadd.f32 0.0, %v897
        %v899 = vpop.f32.mrb[0].mxu0
        %v900 = vpop.f32.mrb[0].mxu0
        %v901 = vpop.f32.mrb[0].mxu0
        %902 = vdwg.mxu0
        %v903 = vsel %vm525, %v898, -inf
        %904 = vmax.xlane.f32.xlu0 %v903
        %v905 = vpop.xlane.xlu0 %904
        %v906 = vsub.f32 %v898, %v905
        %v907 = vmul.f32 %v906, 1.442695
        %v908 = vpow.pop %v907
        %v909 = vsel %vm525, %v908, 0.0
        %910 = vadd.xlane.f32.xlu0 %v909
        %v911 = vpop.xlane.xlu0 %910
        %v912 = vrcp.pop %v911
        %v913 = vmul.f32 %v908, %v912
        %v914 = vpack.c.bf16 %v913, %v913
        %915 = vrot.lane.b32.xlu0 %v521, 40
        %v916 = vpop.permute.xlu0 %915
        %v918 = vsel %vm525, %v914, 0
        %v921 = vsel %vm589, %v916, 0
        %923 = vmatprep.subr.bf16.mxu0 0
        %924 = vmatpush1.bf16.msra.mxu0 %v921
        %925 = vmatprep.subr.bf16.mxu0 0
        %926 = vmatpush1.bf16.msra.mxu0 0
        %927 = vmatprep.subr.bf16.mxu0 0
        %928 = vmatpush1.bf16.msra.mxu0 0
        %929 = vmatprep.subr.bf16.mxu0 0
        %930 = vmatpush1.bf16.msra.mxu0 0
        %931 = vmatprep.subr.bf16.mxu0 0
        %932 = vmatpush1.bf16.msra.mxu0 0
        %933 = vmatprep.subr.bf16.mxu0 0
        %934 = vmatpush1.bf16.msra.mxu0 0
        %935 = vmatprep.subr.bf16.mxu0 0
        %936 = vmatpush1.bf16.msra.mxu0 0
        %937 = vmatprep.subr.bf16.mxu0 0
        %938 = vmatpush1.bf16.msra.mxu0 0
        %939 = vmatprep.subr.bf16.mxu0 0
        %940 = vmatpush1.bf16.msra.mxu0 0
        %941 = vmatprep.subr.bf16.mxu0 0
        %942 = vmatpush1.bf16.msra.mxu0 0
        %943 = vmatprep.subr.bf16.mxu0 0
        %944 = vmatpush1.bf16.msra.mxu0 0
        %945 = vmatprep.subr.bf16.mxu0 0
        %946 = vmatpush1.bf16.msra.mxu0 0
        %947 = vmatprep.subr.bf16.mxu0 0
        %948 = vmatpush1.bf16.msra.mxu0 0
        %949 = vmatprep.subr.bf16.mxu0 0
        %950 = vmatpush1.bf16.msra.mxu0 0
        %951 = vmatprep.subr.bf16.mxu0 0
        %952 = vmatpush1.bf16.msra.mxu0 0
        %953 = vmatprep.subr.bf16.mxu0 0
        %954 = vmatpush1.bf16.msra.mxu0 0
        %955 = vmatprep.mubr.bf16.mxu0 0
        %956 = vmatmul.mubr.bf16.gmra.mrb[0].mxu0 %v918
        %v957 = vpop.f32.mrb[0].mxu0
        %v958 = vadd.f32 0.0, %v957
        %v959 = vpop.f32.mrb[0].mxu0
        %v960 = vpop.f32.mrb[0].mxu0
        %v961 = vpop.f32.mrb[0].mxu0
        %962 = vdwg.mxu0
        %964 = vrot.lane.b32.xlu0 %v738, 8
        %v965 = vpop.permute.xlu0 %964
        %968 = vrot.lane.b32.xlu0 %v848, 16
        %v969 = vpop.permute.xlu0 %968
        %972 = vrot.lane.b32.xlu0 %v958, 24
        %v973 = vpop.permute.xlu0 %972
        %v975 = vsel %vm525, %v628, %v965
        %vm976 = vcmask 130048
        %v977 = vsel %vm976, %v975, %v969
        %vm978 = vcmask 195584
        %v979 = vsel %vm978, %v977, %v973
        %v980 = vpack.c.bf16 %v979, %v979
        %v981 = vld [vmem:[%s3] sm:$0xf]
        %v982 = vld [vmem:[%s3 + $0x4] sm:$0xf]
        %v983 = vld [vmem:[%s3 + $0x8] sm:$0xf]
        %v984 = vld [vmem:[%s3 + $0xc] sm:$0xf]
        %v985 = vld [vmem:[%s4] sm:$0x1]
        %v987 = vlaneseq
        %v988 = vshrl.u32 %v987, 7
        %v989 = vsub.s32 0, %v988
        %v990 = vrot.slane %v985, %v989
        %v996 = vunpack.c.l.b16 %v981
        %v997 = vunpack.c.l.b16 %v982
        %v998 = vunpack.c.l.b16 %v983
        %v999 = vunpack.c.l.b16 %v984
        %v1000 = vpack.c.b16 %v997, %v996
        %v1001 = vpack.c.b16 %v999, %v998
        %v1005 = vsel %vm477, %v980, 0
        %1007 = vmatprep.subr.bf16.mxu0 0
        %1008 = vmatpush1.bf16.msra.mxu0 %v1000
        %1009 = vmatprep.subr.bf16.mxu0 0
        %1010 = vmatpush1.bf16.msra.mxu0 %v1001
        %1011 = vmatprep.subr.bf16.mxu0 0
        %1012 = vmatpush1.bf16.msra.mxu0 0
        %1013 = vmatprep.subr.bf16.mxu0 0
        %1014 = vmatpush1.bf16.msra.mxu0 0
        %1015 = vmatprep.subr.bf16.mxu0 0
        %1016 = vmatpush1.bf16.msra.mxu0 0
        %1017 = vmatprep.subr.bf16.mxu0 0
        %1018 = vmatpush1.bf16.msra.mxu0 0
        %1019 = vmatprep.subr.bf16.mxu0 0
        %1020 = vmatpush1.bf16.msra.mxu0 0
        %1021 = vmatprep.subr.bf16.mxu0 0
        %1022 = vmatpush1.bf16.msra.mxu0 0
        %1023 = vmatprep.subr.bf16.mxu0 0
        %1024 = vmatpush1.bf16.msra.mxu0 0
        %1025 = vmatprep.subr.bf16.mxu0 0
        %1026 = vmatpush1.bf16.msra.mxu0 0
        %1027 = vmatprep.subr.bf16.mxu0 0
        %1028 = vmatpush1.bf16.msra.mxu0 0
        %1029 = vmatprep.subr.bf16.mxu0 0
        %1030 = vmatpush1.bf16.msra.mxu0 0
        %1031 = vmatprep.subr.bf16.mxu0 0
        %1032 = vmatpush1.bf16.msra.mxu0 0
        %1033 = vmatprep.subr.bf16.mxu0 0
        %1034 = vmatpush1.bf16.msra.mxu0 0
        %1035 = vmatprep.subr.bf16.mxu0 0
        %1036 = vmatpush1.bf16.msra.mxu0 0
        %1037 = vmatprep.subr.bf16.mxu0 0
        %1038 = vmatpush1.bf16.msra.mxu0 0
        %1039 = vmatprep.mubr.bf16.mxu0 0
        %1040 = vmatmul.mubr.bf16.gmra.mrb[0].mxu0 %v1005
        %v1041 = vpop.f32.mrb[0].mxu0
        %v1042 = vadd.f32 %v990, %v1041
        %v1043 = vpop.f32.mrb[0].mxu0
        %v1044 = vpop.f32.mrb[0].mxu0
        %v1045 = vpop.f32.mrb[0].mxu0
        %1046 = vdwg.mxu0
        %v1047 = vadd.f32 %v452, %v1042
        %v1048 = vld [vmem:[%s5] sm:$0x1]
        %v1049 = vld [vmem:[%s6] sm:$0x1]
        %v1050 = vsel %vm477, %v1047, 0.0
        %1051 = vadd.xlane.f32.xlu0 %v1050
        %v1052 = vpop.xlane.xlu0 %1051
        %v1053 = vrcp.pop 32.0
        %v1054 = vmul.f32 %v1052, %v1053
        %v1055 = vsub.f32 %v1047, %v1054
        %v1056 = vmul.f32 %v1055, %v1055
        %v1057 = vsel %vm477, %v1056, 0.0
        %1058 = vadd.xlane.f32.xlu0 %v1057
        %v1059 = vpop.xlane.xlu0 %1058
        %v1060 = vmul.f32 %v1059, %v1053
        %v1061 = vadd.f32 %v1060, 1e-05
        %v1062 = vrsqrt.pop %v1061
        %v1063 = vmul.f32 %v1055, %v1062
        %v1065 = vlaneseq
        %v1066 = vshrl.u32 %v1065, 7
        %v1067 = vsub.s32 0, %v1066
        %v1068 = vrot.slane %v1048, %v1067
        %v1070 = vmul.f32 %v1063, %v1068
        %v1072 = vlaneseq
        %v1073 = vshrl.u32 %v1072, 7
        %v1074 = vsub.s32 0, %v1073
        %v1075 = vrot.slane %v1049, %v1074
        %v1077 = vadd.f32 %v1070, %v1075
        %v1078 = vpack.c.bf16 %v1077, %v1077
        %v1079 = vld [vmem:[#allocation2] sm:$0xf]
        %v1080 = vld [vmem:[#allocation2 + $0x4] sm:$0xf]
        %v1081 = vld [vmem:[#allocation2 + $0x8] sm:$0xf]
        %v1082 = vld [vmem:[#allocation2 + $0xc] sm:$0xf]
        %v1083 = vld [vmem:[%s8] sm:$0x1]
        %v1085 = vlaneseq
        %v1086 = vshrl.u32 %v1085, 7
        %v1087 = vsub.s32 0, %v1086
        %v1088 = vrot.slane %v1083, %v1087
        %v1094 = vunpack.c.l.b16 %v1079
        %v1095 = vunpack.c.l.b16 %v1080
        %v1096 = vunpack.c.l.b16 %v1081
        %v1097 = vunpack.c.l.b16 %v1082
        %v1098 = vpack.c.b16 %v1095, %v1094
        %v1099 = vpack.c.b16 %v1097, %v1096
        %v1103 = vsel %vm477, %v1078, 0
        %1105 = vmatprep.subr.bf16.mxu0 0
        %1106 = vmatpush1.bf16.msra.mxu0 %v1098
        %1107 = vmatprep.subr.bf16.mxu0 0
        %1108 = vmatpush1.bf16.msra.mxu0 %v1099
        %1109 = vmatprep.subr.bf16.mxu0 0
        %1110 = vmatpush1.bf16.msra.mxu0 0
        %1111 = vmatprep.subr.bf16.mxu0 0
        %1112 = vmatpush1.bf16.msra.mxu0 0
        %1113 = vmatprep.subr.bf16.mxu0 0
        %1114 = vmatpush1.bf16.msra.mxu0 0
        %1115 = vmatprep.subr.bf16.mxu0 0
        %1116 = vmatpush1.bf16.msra.mxu0 0
        %1117 = vmatprep.subr.bf16.mxu0 0
        %1118 = vmatpush1.bf16.msra.mxu0 0
        %1119 = vmatprep.subr.bf16.mxu0 0
        %1120 = vmatpush1.bf16.msra.mxu0 0
        %1121 = vmatprep.subr.bf16.mxu0 0
        %1122 = vmatpush1.bf16.msra.mxu0 0
        %1123 = vmatprep.subr.bf16.mxu0 0
        %1124 = vmatpush1.bf16.msra.mxu0 0
        %1125 = vmatprep.subr.bf16.mxu0 0
        %1126 = vmatpush1.bf16.msra.mxu0 0
        %1127 = vmatprep.subr.bf16.mxu0 0
        %1128 = vmatpush1.bf16.msra.mxu0 0
        %1129 = vmatprep.subr.bf16.mxu0 0
        %1130 = vmatpush1.bf16.msra.mxu0 0
        %1131 = vmatprep.subr.bf16.mxu0 0
        %1132 = vmatpush1.bf16.msra.mxu0 0
        %1133 = vmatprep.subr.bf16.mxu0 0
        %1134 = vmatpush1.bf16.msra.mxu0 0
        %1135 = vmatprep.subr.bf16.mxu0 0
        %1136 = vmatpush1.bf16.msra.mxu0 0
        %1137 = vmatprep.mubr.bf16.mxu0 0
        %1138 = vmatmul.mubr.bf16.gmra.mrb[0].mxu0 %v1103
        %v1139 = vpop.f32.mrb[0].mxu0
        %v1140 = vadd.f32 %v1088, %v1139
        %v1141 = vpop.f32.mrb[0].mxu0
        %v1142 = vpop.f32.mrb[0].mxu0
        %v1143 = vpop.f32.mrb[0].mxu0
        %1144 = vdwg.mxu0
        %v1145 = vmax.f32 %v1140, 0.0
        %v1146 = vpack.c.bf16 %v1145, %v1145
        %v1147 = vld [vmem:[%s9] sm:$0xf]
        %v1148 = vld [vmem:[%s9 + $0x4] sm:$0xf]
        %v1149 = vld [vmem:[%s9 + $0x8] sm:$0xf]
        %v1150 = vld [vmem:[%s9 + $0xc] sm:$0xf]
        %v1151 = vld [vmem:[%s9 + $0x10] sm:$0xf]
        %v1152 = vld [vmem:[%s9 + $0x14] sm:$0xf]
        %v1153 = vld [vmem:[%s9 + $0x18] sm:$0xf]
        %v1154 = vld [vmem:[%s9 + $0x1c] sm:$0xf]
        %v1155 = vld [vmem:[%s10] sm:$0x1]
        %v1157 = vlaneseq
        %v1158 = vshrl.u32 %v1157, 7
        %v1159 = vsub.s32 0, %v1158
        %v1160 = vrot.slane %v1155, %v1159
        %v1170 = vunpack.c.l.b16 %v1147
        %v1171 = vunpack.c.l.b16 %v1148
        %v1172 = vunpack.c.l.b16 %v1149
        %v1173 = vunpack.c.l.b16 %v1150
        %v1174 = vunpack.c.l.b16 %v1151
        %v1175 = vunpack.c.l.b16 %v1152
        %v1176 = vunpack.c.l.b16 %v1153
        %v1177 = vunpack.c.l.b16 %v1154
        %v1178 = vpack.c.b16 %v1171, %v1170
        %v1179 = vpack.c.b16 %v1173, %v1172
        %v1180 = vpack.c.b16 %v1175, %v1174
        %v1181 = vpack.c.b16 %v1177, %v1176
        %vm1186 = vcmask 523264
        %v1188 = vsel %vm1186, %v1146, 0
        %1190 = vmatprep.subr.bf16.mxu0 0
        %1191 = vmatpush1.bf16.msra.mxu0 %v1178
        %1192 = vmatprep.subr.bf16.mxu0 0
        %1193 = vmatpush1.bf16.msra.mxu0 %v1179
        %1194 = vmatprep.subr.bf16.mxu0 0
        %1195 = vmatpush1.bf16.msra.mxu0 %v1180
        %1196 = vmatprep.subr.bf16.mxu0 0
        %1197 = vmatpush1.bf16.msra.mxu0 %v1181
        %1198 = vmatprep.subr.bf16.mxu0 0
        %1199 = vmatpush1.bf16.msra.mxu0 0
        %1200 = vmatprep.subr.bf16.mxu0 0
        %1201 = vmatpush1.bf16.msra.mxu0 0
        %1202 = vmatprep.subr.bf16.mxu0 0
        %1203 = vmatpush1.bf16.msra.mxu0 0
        %1204 = vmatprep.subr.bf16.mxu0 0
        %1205 = vmatpush1.bf16.msra.mxu0 0
        %1206 = vmatprep.subr.bf16.mxu0 0
        %1207 = vmatpush1.bf16.msra.mxu0 0
        %1208 = vmatprep.subr.bf16.mxu0 0
        %1209 = vmatpush1.bf16.msra.mxu0 0
        %1210 = vmatprep.subr.bf16.mxu0 0
        %1211 = vmatpush1.bf16.msra.mxu0 0
        %1212 = vmatprep.subr.bf16.mxu0 0
        %1213 = vmatpush1.bf16.msra.mxu0 0
        %1214 = vmatprep.subr.bf16.mxu0 0
        %1215 = vmatpush1.bf16.msra.mxu0 0
        %1216 = vmatprep.subr.bf16.mxu0 0
        %1217 = vmatpush1.bf16.msra.mxu0 0
        %1218 = vmatprep.subr.bf16.mxu0 0
        %1219 = vmatpush1.bf16.msra.mxu0 0
        %1220 = vmatprep.subr.bf16.mxu0 0
        %1221 = vmatpush1.bf16.msra.mxu0 0
        %1222 = vmatprep.mubr.bf16.mxu0 0
        %1223 = vmatmul.mubr.bf16.gmra.mrb[0].mxu0 %v1188
        %v1224 = vpop.f32.mrb[0].mxu0
        %v1225 = vadd.f32 %v1160, %v1224
        %v1226 = vpop.f32.mrb[0].mxu0
        %v1227 = vpop.f32.mrb[0].mxu0
        %v1228 = vpop.f32.mrb[0].mxu0
        %1229 = vdwg.mxu0
        %v1230 = vadd.f32 %v1077, %v1225
        %v1231 = vld [vmem:[%s11] sm:$0x1]
        %v1232 = vld [vmem:[%s12] sm:$0x1]
        %v1233 = vsel %vm477, %v1230, 0.0
        %1234 = vadd.xlane.f32.xlu0 %v1233
        %v1235 = vpop.xlane.xlu0 %1234
        %v1236 = vmul.f32 %v1235, %v1053
        %v1237 = vsub.f32 %v1230, %v1236
        %v1238 = vmul.f32 %v1237, %v1237
        %v1239 = vsel %vm477, %v1238, 0.0
        %1240 = vadd.xlane.f32.xlu0 %v1239
        %v1241 = vpop.xlane.xlu0 %1240
        %v1242 = vmul.f32 %v1241, %v1053
        %v1243 = vadd.f32 %v1242, 1e-05
        %v1244 = vrsqrt.pop %v1243
        %v1245 = vmul.f32 %v1237, %v1244
        %v1247 = vlaneseq
        %v1248 = vshrl.u32 %v1247, 7
        %v1249 = vsub.s32 0, %v1248
        %v1250 = vrot.slane %v1231, %v1249
        %v1252 = vmul.f32 %v1245, %v1250
        %v1254 = vlaneseq
        %v1255 = vshrl.u32 %v1254, 7
        %v1256 = vsub.s32 0, %v1255
        %v1257 = vrot.slane %v1232, %v1256
        %v1259 = vadd.f32 %v1252, %v1257
        %1260 = vst.msk [vmem:[%s446] sm:$0xff] %vm477, %v1259
        %s1261 = sand.u32 %s314, 1
        %s1262 = scalar_lea.sflag [#allocation4], %s1261
        %s1263 = sand.u32 %s314, 1
        %s1264 = smul.addr %s1263, 8
        %s1265 = scalar_lea.vmem [#allocation5], %s1264
        // Predicated region
        $region77: #{tpu_custom_call.1} parent=71 // pred_check
          %p1266 = pneg %p324
        $region78: #{tpu_custom_call.1} parent=71 // pred_check_branch
          %1268 = sbr.rel (%p1266) target = $region80
        $region79: #{tpu_custom_call.1} parent=71 // pred_region
          %s1270 = ssub.s32 128, 128
          %1271 = vsyncadd %s1262, %s1270
          %s1272 = smul.addr %s28, 128
          %s1273 = scalar_lea.hbm %s13, %s1272
          %s1275 = sshll.u32 %s1265, 4
          %s1276 = int_to_ptr.vmem [resolvable:$true] %s1275
          %1278 = dma.vmem_to_hbm [thread:$0]  %s1276, 128, %s1273, %s1262
        $region80: #{tpu_custom_call.1} parent=71 // pred_fallthru
          _
      $region72: #{tpu_custom_call.1} parent=5 // pred_fallthru
        _
      %p1279 = scmp.le.s32.totalorder 2, %s23
      // Predicated region
      $region81: #{tpu_custom_call.1} parent=5 // pred_check
        %p1280 = pneg %p1279
      $region82: #{tpu_custom_call.1} parent=5 // pred_check_branch
        %1282 = sbr.rel (%p1280) target = $region84
      $region83: #{tpu_custom_call.1} parent=5 // pred_region
        %s1283 = ssub.s32 %s23, 2
        // Predicated region
        $region85: #{tpu_custom_call.1} parent=83 // pred_check
          %p1284 = pneg %p330
        $region86: #{tpu_custom_call.1} parent=83 // pred_check_branch
          %1286 = sbr.rel (%p1284) target = $region88
        $region87: #{tpu_custom_call.1} parent=83 // pred_region
          %s1287 = sand.u32 %s315, 1
          %s1288 = scalar_lea.sflag [#allocation4], %s1287
          %s1289 = sand.u32 %s315, 1
          %s1290 = smul.addr %s1289, 8
          %s1291 = scalar_lea.vmem [#allocation5], %s1290
          %1292 = dma.done %s1288, 128
        $region88: #{tpu_custom_call.1} parent=83 // pred_fallthru
          _
      $region84: #{tpu_custom_call.1} parent=5 // pred_fallthru
        _
    $region6: #{tpu_custom_call.1} parent=1 // loop_footer
      %s27 = sadd.s32 1, %s23
    $region7: #{tpu_custom_call.1} parent=1 // loop_footer_branch
      %22 = sbr.rel target = $region3
    $region8: #{tpu_custom_call.1} parent=1 // loop_exit
      _
    %1293 = vsyncpa [#allocation3], 1
    %s1294 = scalar_lea.sflag [#allocation3], 1
    %1295 = vsyncpa %s1294, 1
    %1296 = vsyncpa [#allocation4], 1
    %s1297 = scalar_lea.sflag [#allocation4], 1
    %1298 = vsyncpa %s1297, 1

// kernel: tpu_custom_call.1
$region0: #{tpu_custom_call.1}
  #allocation0 [shape = 'u32[]', space=smem, size = 0x4, offset = 0x4, fixed_abs, tag = 'smem constant byte address 0x4 - core index']
  #allocation1 [shape = 'u32[144,128]{1,0:T(1,128)}', space=vmem, size = 0x12000, scoped, tag = 'internal scratch']
  %s0 = inlined_call_operand.vmem [shape: f32[2,8,32], index: 0, kind: input, shape index: {}]
  %s1 = inlined_call_operand.vmem [shape: bf16[32,96], index: 1, kind: input, shape index: {}]
  %s2 = inlined_call_operand.vmem [shape: f32[1,96], index: 2, kind: input, shape index: {}]
  %s3 = inlined_call_operand.vmem [shape: bf16[32,32], index: 3, kind: input, shape index: {}]
  %s4 = inlined_call_operand.vmem [shape: f32[1,32], index: 4, kind: input, shape index: {}]
  %s5 = inlined_call_operand.vmem [shape: f32[1,32], index: 5, kind: input, shape index: {}]
  %s6 = inlined_call_operand.vmem [shape: f32[1,32], index: 6, kind: input, shape index: {}]
  %s7 = inlined_call_operand.hbm [shape: bf16[32,64], index: 7, kind: input, shape index: {}]
  %s8 = inlined_call_operand.vmem [shape: f32[1,64], index: 8, kind: input, shape index: {}]
  %s9 = inlined_call_operand.vmem [shape: bf16[64,32], index: 9, kind: input, shape index: {}]
  %s10 = inlined_call_operand.vmem [shape: f32[1,32], index: 10, kind: input, shape index: {}]
  %s11 = inlined_call_operand.vmem [shape: f32[1,32], index: 11, kind: input, shape index: {}]
  %s12 = inlined_call_operand.vmem [shape: f32[1,32], index: 12, kind: input, shape index: {}]
  %s13 = inlined_call_operand.hbm [shape: f32[2,8,32], index: 13, kind: output, shape index: {}]
  %s14 = sld [smem:[#allocation0]]
  $region89: #{tpu_custom_call.1} parent=0
    _
  %s16 = ssub.s32 1, %s14
  %s17 = scalar_select 0, %s16, %s14
  $region1: #{tpu_custom_call.1} parent=0
    #allocation2 [shape = 'u8[8192]{0}', space=vmem, size = 0x2000, scoped, tag = 'input window, operand 7, single buffered']
    #allocation3 [shape = 's32[2]{0}', space=sflag, size = 0x8, scoped, tag = 'scoped memory for tpu_custom_call.1']
    #allocation4 [shape = 's32[2]{0}', space=sflag, size = 0x8, scoped, tag = 'scoped memory for tpu_custom_call.1']
    #allocation5 [shape = 'u8[8192]{0}', space=vmem, size = 0x2000, scoped, tag = 'output window, operand 0']
    %18 = vsyncpa [#allocation3], 0
    %19 = vsyncpa [#allocation4], 0
    %s20 = scalar_lea.sflag [#allocation4], 1
    %21 = vsyncpa %s20, 0
    loop: start=0, step=1, limit=4
    $region2: #{tpu_custom_call.1} parent=1 // loop_pre_header
      _
    $region3: #{tpu_custom_call.1} parent=1 // loop_header
      %s23 = sphi 0, %s27
      %p24 = scmp.ge.s32.totalorder %s23, 4
      %s33 = sphi 0, %s35
      %s36 = sphi 0, %s33
      %s37 = sphi 0, %s36
      %s53 = sphi 0, %s37
      %s57 = sphi 0, %s57
      %s59 = sphi 0, %s57
      %s60 = sphi 0, %s59
      %s74 = sphi 0, %s60
      %s78 = sphi 0, %s78
      %s80 = sphi 0, %s78
      %s81 = sphi 0, %s80
      %s95 = sphi 0, %s81
      %s99 = sphi 0, %s99
      %s101 = sphi 0, %s99
      %s102 = sphi 0, %s101
      %s116 = sphi 0, %s102
      %s120 = sphi 0, %s120
      %s122 = sphi 0, %s120
      %s123 = sphi 0, %s122
      %s137 = sphi 0, %s123
      %s141 = sphi 0, %s141
      %s143 = sphi 0, %s141
      %s144 = sphi 0, %s143
      %s158 = sphi 0, %s144
      %s162 = sphi 0, %s162
      %s164 = sphi 0, %s162
      %s165 = sphi 0, %s164
      %s179 = sphi 0, %s165
      %s183 = sphi 0, %s183
      %s185 = sphi 0, %s183
      %s186 = sphi 0, %s185
      %s200 = sphi 0, %s186
      %s204 = sphi 0, %s204
      %s206 = sphi 0, %s204
      %s207 = sphi 0, %s206
      %s221 = sphi 0, %s207
      %s225 = sphi 0, %s225
      %s227 = sphi 0, %s225
      %s228 = sphi 0, %s227
      %s242 = sphi 0, %s228
      %s246 = sphi 0, %s246
      %s248 = sphi 0, %s246
      %s249 = sphi 0, %s248
      %s263 = sphi 0, %s249
      %s267 = sphi 0, %s267
      %s269 = sphi 0, %s267
      %s270 = sphi 0, %s269
      %s284 = sphi 0, %s270
      %s288 = sphi 0, %s288
      %s290 = sphi 0, %s288
      %s291 = sphi 0, %s290
      %s305 = sphi 0, %s291
      %s311 = sphi 0, %s313
      %s314 = sphi 0, %s311
      %s315 = sphi 0, %s314
      %s331 = sphi 0, %s315
    $region4: #{tpu_custom_call.1} parent=1 // loop_header_branch
      %26 = sbr.rel (%p24) target = $region8
    $region5: #{tpu_custom_call.1} parent=1 // loop_body
      %s28 = ssub.s32 %s23, 1
      %s29 = ssub.s32 %s23, 2
      %s30 = sadd.s32 %s23, 1
      %s31 = ssub.s32 %s23, %s30
      %p32 = scmp.eq.s32.totalorder %s31, 0
      %s34 = sadd.s32 %s33, 1
      %s35 = scalar_select %p32, %s33, %s34
      %p38 = pneg %p32
      %p39 = scmp.eq.s32.totalorder %s23, 1
      %p40 = por %p38, %p39
      %p41 = scmp.ne.s32.totalorder %s33, %s36
      %p42 = scmp.eq.s32.totalorder %s23, 0
      %p43 = por %p41, %p42
      %p44 = scmp.ne.s32.totalorder %s33, %s36
      %p45 = scmp.eq.s32.totalorder %s28, 1
      %p46 = por %p44, %p45
      %p47 = scmp.ne.s32.totalorder %s36, %s37
      %p48 = scmp.eq.s32.totalorder %s28, 0
      %p49 = por %p47, %p48
      %p50 = scmp.ne.s32.totalorder %s36, %s37
      %p51 = scmp.eq.s32.totalorder %s29, 1
      %p52 = por %p50, %p51
      %p54 = scmp.ne.s32.totalorder %s37, %s53
      %p55 = scmp.eq.s32.totalorder %s29, 0
      %p56 = por %p54, %p55
      %s58 = sadd.s32 %s57, 1
      %p61 = scmp.eq.s32.totalorder %s23, 1
      %p62 = scmp.ne.s32.totalorder %s57, %s59
      %p63 = scmp.eq.s32.totalorder %s23, 0
      %p64 = por %p62, %p63
      %p65 = scmp.ne.s32.totalorder %s57, %s59
      %p66 = scmp.eq.s32.totalorder %s28, 1
      %p67 = por %p65, %p66
      %p68 = scmp.ne.s32.totalorder %s59, %s60
      %p69 = scmp.eq.s32.totalorder %s28, 0
      %p70 = por %p68, %p69
      %p71 = scmp.ne.s32.totalorder %s59, %s60
      %p72 = scmp.eq.s32.totalorder %s29, 1
      %p73 = por %p71, %p72
      %p75 = scmp.ne.s32.totalorder %s60, %s74
      %p76 = scmp.eq.s32.totalorder %s29, 0
      %p77 = por %p75, %p76
      %s79 = sadd.s32 %s78, 1
      %p82 = scmp.eq.s32.totalorder %s23, 1
      %p83 = scmp.ne.s32.totalorder %s78, %s80
      %p84 = scmp.eq.s32.totalorder %s23, 0
      %p85 = por %p83, %p84
      %p86 = scmp.ne.s32.totalorder %s78, %s80
      %p87 = scmp.eq.s32.totalorder %s28, 1
      %p88 = por %p86, %p87
      %p89 = scmp.ne.s32.totalorder %s80, %s81
      %p90 = scmp.eq.s32.totalorder %s28, 0
      %p91 = por %p89, %p90
      %p92 = scmp.ne.s32.totalorder %s80, %s81
      %p93 = scmp.eq.s32.totalorder %s29, 1
      %p94 = por %p92, %p93
      %p96 = scmp.ne.s32.totalorder %s81, %s95
      %p97 = scmp.eq.s32.totalorder %s29, 0
      %p98 = por %p96, %p97
      %s100 = sadd.s32 %s99, 1
      %p103 = scmp.eq.s32.totalorder %s23, 1
      %p104 = scmp.ne.s32.totalorder %s99, %s101
      %p105 = scmp.eq.s32.totalorder %s23, 0
      %p106 = por %p104, %p105
      %p107 = scmp.ne.s32.totalorder %s99, %s101
      %p108 = scmp.eq.s32.totalorder %s28, 1
      %p109 = por %p107, %p108
      %p110 = scmp.ne.s32.totalorder %s101, %s102
      %p111 = scmp.eq.s32.totalorder %s28, 0
      %p112 = por %p110, %p111
      %p113 = scmp.ne.s32.totalorder %s101, %s102
      %p114 = scmp.eq.s32.totalorder %s29, 1
      %p115 = por %p113, %p114
      %p117 = scmp.ne.s32.totalorder %s102, %s116
      %p118 = scmp.eq.s32.totalorder %s29, 0
      %p119 = por %p117, %p118
      %s121 = sadd.s32 %s120, 1
      %p124 = scmp.eq.s32.totalorder %s23, 1
      %p125 = scmp.ne.s32.totalorder %s120, %s122
      %p126 = scmp.eq.s32.totalorder %s23, 0
      %p127 = por %p125, %p126
      %p128 = scmp.ne.s32.totalorder %s120, %s122
      %p129 = scmp.eq.s32.totalorder %s28, 1
      %p130 = por %p128, %p129
      %p131 = scmp.ne.s32.totalorder %s122, %s123
      %p132 = scmp.eq.s32.totalorder %s28, 0
      %p133 = por %p131, %p132
      %p134 = scmp.ne.s32.totalorder %s122, %s123
      %p135 = scmp.eq.s32.totalorder %s29, 1
      %p136 = por %p134, %p135
      %p138 = scmp.ne.s32.totalorder %s123, %s137
      %p139 = scmp.eq.s32.totalorder %s29, 0
      %p140 = por %p138, %p139
      %s142 = sadd.s32 %s141, 1
      %p145 = scmp.eq.s32.totalorder %s23, 1
      %p146 = scmp.ne.s32.totalorder %s141, %s143
      %p147 = scmp.eq.s32.totalorder %s23, 0
      %p148 = por %p146, %p147
      %p149 = scmp.ne.s32.totalorder %s141, %s143
      %p150 = scmp.eq.s32.totalorder %s28, 1
      %p151 = por %p149, %p150
      %p152 = scmp.ne.s32.totalorder %s143, %s144
      %p153 = scmp.eq.s32.totalorder %s28, 0
      %p154 = por %p152, %p153
      %p155 = scmp.ne.s32.totalorder %s143, %s144
      %p156 = scmp.eq.s32.totalorder %s29, 1
      %p157 = por %p155, %p156
      %p159 = scmp.ne.s32.totalorder %s144, %s158
      %p160 = scmp.eq.s32.totalorder %s29, 0
      %p161 = por %p159, %p160
      %s163 = sadd.s32 %s162, 1
      %p166 = scmp.eq.s32.totalorder %s23, 1
      %p167 = scmp.ne.s32.totalorder %s162, %s164
      %p168 = scmp.eq.s32.totalorder %s23, 0
      %p169 = por %p167, %p168
      %p170 = scmp.ne.s32.totalorder %s162, %s164
      %p171 = scmp.eq.s32.totalorder %s28, 1
      %p172 = por %p170, %p171
      %p173 = scmp.ne.s32.totalorder %s164, %s165
      %p174 = scmp.eq.s32.totalorder %s28, 0
      %p175 = por %p173, %p174
      %p176 = scmp.ne.s32.totalorder %s164, %s165
      %p177 = scmp.eq.s32.totalorder %s29, 1
      %p178 = por %p176, %p177
      %p180 = scmp.ne.s32.totalorder %s165, %s179
      %p181 = scmp.eq.s32.totalorder %s29, 0
      %p182 = por %p180, %p181
      %s184 = sadd.s32 %s183, 1
      %p187 = scmp.eq.s32.totalorder %s23, 1
      %p188 = scmp.ne.s32.totalorder %s183, %s185
      %p189 = scmp.eq.s32.totalorder %s23, 0
      %p190 = por %p188, %p189
      %p191 = scmp.ne.s32.totalorder %s183, %s185
      %p192 = scmp.eq.s32.totalorder %s28, 1
      %p193 = por %p191, %p192
      %p194 = scmp.ne.s32.totalorder %s185, %s186
      %p195 = scmp.eq.s32.totalorder %s28, 0
      %p196 = por %p194, %p195
      %p197 = scmp.ne.s32.totalorder %s185, %s186
      %p198 = scmp.eq.s32.totalorder %s29, 1
      %p199 = por %p197, %p198
      %p201 = scmp.ne.s32.totalorder %s186, %s200
      %p202 = scmp.eq.s32.totalorder %s29, 0
      %p203 = por %p201, %p202
      %s205 = sadd.s32 %s204, 1
      %p208 = scmp.eq.s32.totalorder %s23, 1
      %p209 = scmp.ne.s32.totalorder %s204, %s206
      %p210 = scmp.eq.s32.totalorder %s23, 0
      %p211 = por %p209, %p210
      %p212 = scmp.ne.s32.totalorder %s204, %s206
      %p213 = scmp.eq.s32.totalorder %s28, 1
      %p214 = por %p212, %p213
      %p215 = scmp.ne.s32.totalorder %s206, %s207
      %p216 = scmp.eq.s32.totalorder %s28, 0
      %p217 = por %p215, %p216
      %p218 = scmp.ne.s32.totalorder %s206, %s207
      %p219 = scmp.eq.s32.totalorder %s29, 1
      %p220 = por %p218, %p219
      %p222 = scmp.ne.s32.totalorder %s207, %s221
      %p223 = scmp.eq.s32.totalorder %s29, 0
      %p224 = por %p222, %p223
      %s226 = sadd.s32 %s225, 1
      %p229 = scmp.eq.s32.totalorder %s23, 1
      %p230 = scmp.ne.s32.totalorder %s225, %s227
      %p231 = scmp.eq.s32.totalorder %s23, 0
      %p232 = por %p230, %p231
      %p233 = scmp.ne.s32.totalorder %s225, %s227
      %p234 = scmp.eq.s32.totalorder %s28, 1
      %p235 = por %p233, %p234
      %p236 = scmp.ne.s32.totalorder %s227, %s228
      %p237 = scmp.eq.s32.totalorder %s28, 0
      %p238 = por %p236, %p237
      %p239 = scmp.ne.s32.totalorder %s227, %s228
      %p240 = scmp.eq.s32.totalorder %s29, 1
      %p241 = por %p239, %p240
      %p243 = scmp.ne.s32.totalorder %s228, %s242
      %p244 = scmp.eq.s32.totalorder %s29, 0
      %p245 = por %p243, %p244
      %s247 = sadd.s32 %s246, 1
      %p250 = scmp.eq.s32.totalorder %s23, 1
      %p251 = scmp.ne.s32.totalorder %s246, %s248
      %p252 = scmp.eq.s32.totalorder %s23, 0
      %p253 = por %p251, %p252
      %p254 = scmp.ne.s32.totalorder %s246, %s248
      %p255 = scmp.eq.s32.totalorder %s28, 1
      %p256 = por %p254, %p255
      %p257 = scmp.ne.s32.totalorder %s248, %s249
      %p258 = scmp.eq.s32.totalorder %s28, 0
      %p259 = por %p257, %p258
      %p260 = scmp.ne.s32.totalorder %s248, %s249
      %p261 = scmp.eq.s32.totalorder %s29, 1
      %p262 = por %p260, %p261
      %p264 = scmp.ne.s32.totalorder %s249, %s263
      %p265 = scmp.eq.s32.totalorder %s29, 0
      %p266 = por %p264, %p265
      %s268 = sadd.s32 %s267, 1
      %p271 = scmp.eq.s32.totalorder %s23, 1
      %p272 = scmp.ne.s32.totalorder %s267, %s269
      %p273 = scmp.eq.s32.totalorder %s23, 0
      %p274 = por %p272, %p273
      %p275 = scmp.ne.s32.totalorder %s267, %s269
      %p276 = scmp.eq.s32.totalorder %s28, 1
      %p277 = por %p275, %p276
      %p278 = scmp.ne.s32.totalorder %s269, %s270
      %p279 = scmp.eq.s32.totalorder %s28, 0
      %p280 = por %p278, %p279
      %p281 = scmp.ne.s32.totalorder %s269, %s270
      %p282 = scmp.eq.s32.totalorder %s29, 1
      %p283 = por %p281, %p282
      %p285 = scmp.ne.s32.totalorder %s270, %s284
      %p286 = scmp.eq.s32.totalorder %s29, 0
      %p287 = por %p285, %p286
      %s289 = sadd.s32 %s288, 1
      %p292 = scmp.eq.s32.totalorder %s23, 1
      %p293 = scmp.ne.s32.totalorder %s288, %s290
      %p294 = scmp.eq.s32.totalorder %s23, 0
      %p295 = por %p293, %p294
      %p296 = scmp.ne.s32.totalorder %s288, %s290
      %p297 = scmp.eq.s32.totalorder %s28, 1
      %p298 = por %p296, %p297
      %p299 = scmp.ne.s32.totalorder %s290, %s291
      %p300 = scmp.eq.s32.totalorder %s28, 0
      %p301 = por %p299, %p300
      %p302 = scmp.ne.s32.totalorder %s290, %s291
      %p303 = scmp.eq.s32.totalorder %s29, 1
      %p304 = por %p302, %p303
      %p306 = scmp.ne.s32.totalorder %s291, %s305
      %p307 = scmp.eq.s32.totalorder %s29, 0
      %p308 = por %p306, %p307
      %s309 = ssub.s32 %s23, %s30
      %p310 = scmp.eq.s32.totalorder %s309, 0
      %s312 = sadd.s32 %s311, 1
      %s313 = scalar_select %p310, %s311, %s312
      %p316 = pneg %p310
      %p317 = scmp.eq.s32.totalorder %s23, 1
      %p318 = por %p316, %p317
      %p319 = scmp.ne.s32.totalorder %s311, %s314
      %p320 = scmp.eq.s32.totalorder %s23, 0
      %p321 = por %p319, %p320
      %p322 = scmp.ne.s32.totalorder %s311, %s314
      %p323 = scmp.eq.s32.totalorder %s28, 1
      %p324 = por %p322, %p323
      %p325 = scmp.ne.s32.totalorder %s314, %s315
      %p326 = scmp.eq.s32.totalorder %s28, 0
      %p327 = por %p325, %p326
      %p328 = scmp.ne.s32.totalorder %s314, %s315
      %p329 = scmp.eq.s32.totalorder %s29, 1
      %p330 = por %p328, %p329
      %p332 = scmp.ne.s32.totalorder %s315, %s331
      %p333 = scmp.eq.s32.totalorder %s29, 0
      %p334 = por %p332, %p333
      %p335 = scmp.le.s32.totalorder 1, %s23
      %p336 = scmp.lt.s32.totalorder %s23, 3
      %p337 = pnand %p335, %p336
      %p338 = pneg %p337
      // Predicated region
      $region9: #{tpu_custom_call.1} parent=5 // pred_check
        _
      $region10: #{tpu_custom_call.1} parent=5 // pred_check_branch
        %340 = sbr.rel (%p337) target = $region12
      $region11: #{tpu_custom_call.1} parent=5 // pred_region
        %s341 = ssub.s32 %s23, 1
        // Predicated region
        $region13: #{tpu_custom_call.1} parent=11 // pred_check
          %p342 = pneg %p70
        $region14: #{tpu_custom_call.1} parent=11 // pred_check_branch
          %344 = sbr.rel (%p342) target = $region16
        $region15: #{tpu_custom_call.1} parent=11 // pred_region
          _
        $region16: #{tpu_custom_call.1} parent=11 // pred_fallthru
          _
        // Predicated region
        $region17: #{tpu_custom_call.1} parent=11 // pred_check
          %p345 = pneg %p91
        $region18: #{tpu_custom_call.1} parent=11 // pred_check_branch
          %347 = sbr.rel (%p345) target = $region20
        $region19: #{tpu_custom_call.1} parent=11 // pred_region
          _
        $region20: #{tpu_custom_call.1} parent=11 // pred_fallthru
          _
        // Predicated region
        $region21: #{tpu_custom_call.1} parent=11 // pred_check
          %p348 = pneg %p112
        $region22: #{tpu_custom_call.1} parent=11 // pred_check_branch
          %350 = sbr.rel (%p348) target = $region24
        $region23: #{tpu_custom_call.1} parent=11 // pred_region
          _
        $region24: #{tpu_custom_call.1} parent=11 // pred_fallthru
          _
        // Predicated region
        $region25: #{tpu_custom_call.1} parent=11 // pred_check
          %p351 = pneg %p133
        $region26: #{tpu_custom_call.1} parent=11 // pred_check_branch
          %353 = sbr.rel (%p351) target = $region28
        $region27: #{tpu_custom_call.1} parent=11 // pred_region
          _
        $region28: #{tpu_custom_call.1} parent=11 // pred_fallthru
          _
        // Predicated region
        $region29: #{tpu_custom_call.1} parent=11 // pred_check
          %p354 = pneg %p154
        $region30: #{tpu_custom_call.1} parent=11 // pred_check_branch
          %356 = sbr.rel (%p354) target = $region32
        $region31: #{tpu_custom_call.1} parent=11 // pred_region
          _
        $region32: #{tpu_custom_call.1} parent=11 // pred_fallthru
          _
        // Predicated region
        $region33: #{tpu_custom_call.1} parent=11 // pred_check
          %p357 = pneg %p175
        $region34: #{tpu_custom_call.1} parent=11 // pred_check_branch
          %359 = sbr.rel (%p357) target = $region36
        $region35: #{tpu_custom_call.1} parent=11 // pred_region
          _
        $region36: #{tpu_custom_call.1} parent=11 // pred_fallthru
          _
        // Predicated region
        $region37: #{tpu_custom_call.1} parent=11 // pred_check
          %p360 = pneg %p196
        $region38: #{tpu_custom_call.1} parent=11 // pred_check_branch
          %362 = sbr.rel (%p360) target = $region40
        $region39: #{tpu_custom_call.1} parent=11 // pred_region
          %s364 = ssub.s32 256, 256
          %365 = vsyncadd [#allocation3], %s364
          %s366 = sshll.u32 [#allocation2], 4
          %s367 = int_to_ptr.vmem [resolvable:$true] %s366
          %372 = dma.hbm_to_vmem [thread:$0]  %s7, 256, %s367, [#allocation3], 64, 64, 4
        $region40: #{tpu_custom_call.1} parent=11 // pred_fallthru
          _
        // Predicated region
        $region41: #{tpu_custom_call.1} parent=11 // pred_check
          %p373 = pneg %p217
        $region42: #{tpu_custom_call.1} parent=11 // pred_check_branch
          %375 = sbr.rel (%p373) target = $region44
        $region43: #{tpu_custom_call.1} parent=11 // pred_region
          _
        $region44: #{tpu_custom_call.1} parent=11 // pred_fallthru
          _
        // Predicated region
        $region45: #{tpu_custom_call.1} parent=11 // pred_check
          %p376 = pneg %p238
        $region46: #{tpu_custom_call.1} parent=11 // pred_check_branch
          %378 = sbr.rel (%p376) target = $region48
        $region47: #{tpu_custom_call.1} parent=11 // pred_region
          _
        $region48: #{tpu_custom_call.1} parent=11 // pred_fallthru
          _
        // Predicated region
        $region49: #{tpu_custom_call.1} parent=11 // pred_check
          %p379 = pneg %p259
        $region50: #{tpu_custom_call.1} parent=11 // pred_check_branch
          %381 = sbr.rel (%p379) target = $region52
        $region51: #{tpu_custom_call.1} parent=11 // pred_region
          _
        $region52: #{tpu_custom_call.1} parent=11 // pred_fallthru
          _
        // Predicated region
        $region53: #{tpu_custom_call.1} parent=11 // pred_check
          %p382 = pneg %p280
        $region54: #{tpu_custom_call.1} parent=11 // pred_check_branch
          %384 = sbr.rel (%p382) target = $region56
        $region55: #{tpu_custom_call.1} parent=11 // pred_region
          _
        $region56: #{tpu_custom_call.1} parent=11 // pred_fallthru
          _
        // Predicated region
        $region57: #{tpu_custom_call.1} parent=11 // pred_check
          %p385 = pneg %p301
        $region58: #{tpu_custom_call.1} parent=11 // pred_check_branch
          %387 = sbr.rel (%p385) target = $region60
        $region59: #{tpu_custom_call.1} parent=11 // pred_region
          _
        $region60: #{tpu_custom_call.1} parent=11 // pred_fallthru
          _
      $region12: #{tpu_custom_call.1} parent=5 // pred_fallthru
        _
      %p388 = scmp.lt.s32.totalorder %s23, 2
      // Predicated region
      $region61: #{tpu_custom_call.1} parent=5 // pred_check
        %p389 = pneg %p388
      $region62: #{tpu_custom_call.1} parent=5 // pred_check_branch
        %391 = sbr.rel (%p389) target = $region64
      $region63: #{tpu_custom_call.1} parent=5 // pred_region
        // Predicated region
        $region65: #{tpu_custom_call.1} parent=63 // pred_check
          %p392 = pneg %p43
        $region66: #{tpu_custom_call.1} parent=63 // pred_check_branch
          %394 = sbr.rel (%p392) target = $region68
        $region67: #{tpu_custom_call.1} parent=63 // pred_region
          %p395 = scmp.lt.s32.totalorder %s23, 1
          %s396 = scalar_select %p395, %s23, 1
          %s397 = smul.addr %s396, 8
          %s398 = scalar_lea.vmem %s0, %s397
        $region68: #{tpu_custom_call.1} parent=63 // pred_fallthru
          _
      $region64: #{tpu_custom_call.1} parent=5 // pred_fallthru
        _
      %p399 = scmp.le.s32.totalorder 1, %s23
      %p400 = scmp.lt.s32.totalorder %s23, 3
      %p401 = pnand %p399, %p400
      %p402 = pneg %p401
      // Predicated region
      $region69: #{tpu_custom_call.1} parent=5 // pred_check
        _
      $region70: #{tpu_custom_call.1} parent=5 // pred_check_branch
        %404 = sbr.rel (%p401) target = $region72
      $region71: #{tpu_custom_call.1} parent=5 // pred_region
        %s405 = ssub.s32 %s23, 1
        // Predicated region
        $region73: #{tpu_custom_call.1} parent=71 // pred_check
          %p406 = pneg %p196
        $region74: #{tpu_custom_call.1} parent=71 // pred_check_branch
          %408 = sbr.rel (%p406) target = $region76
        $region75: #{tpu_custom_call.1} parent=71 // pred_region
          %409 = dma.done [#allocation3], 256
        $region76: #{tpu_custom_call.1} parent=71 // pred_fallthru
          _
        %p410 = scmp.lt.s32.totalorder %s28, 1
        %s411 = scalar_select %p410, %s28, 1
        %s412 = smul.addr %s411, 8
        %s413 = scalar_lea.vmem %s0, %s412
        %p414 = pneg %p49
        %p415 = pneg %p46
        %p416 = pneg %p70
        %p417 = pneg %p67
        %p418 = pneg %p91
        %p419 = pneg %p88
        %p420 = pneg %p112
        %p421 = pneg %p109
        %p422 = pneg %p133
        %p423 = pneg %p130
        %p424 = pneg %p154
        %p425 = pneg %p151
        %p426 = pneg %p175
        %p427 = pneg %p172
        %p428 = pneg %p196
        %p429 = pneg %p193
        %p430 = pneg %p217
        %p431 = pneg %p214
        %p432 = pneg %p238
        %p433 = pneg %p235
        %p434 = pneg %p259
        %p435 = pneg %p256
        %p436 = pneg %p280
        %p437 = pneg %p277
        %p438 = pneg %p301
        %p439 = pneg %p298
        %p440 = pneg %p327
        %p441 = pneg %p324
        %s442 = sand.u32 %s314, 1
        %s443 = scalar_lea.sflag [#allocation4], %s442
        %s444 = sand.u32 %s314, 1
        %s445 = smul.addr %s444, 8
        %s446 = scalar_lea.vmem [#allocation5], %s445
        %p447 = scmp.lt.s32.totalorder %s28, 1
        %s448 = scalar_select %p447, %s28, 1
        %s449 = smul.addr %s448, 8
        %s450 = scalar_lea.vmem %s0, %s449
        %v452 = vld [vmem:[%s450] sm:$0xff]
        %v453 = vpack.c.bf16 %v452, %v452
        %v454 = vld [vmem:[%s1] sm:$0xf]
        %v455 = vld [vmem:[%s1 + $0x4] sm:$0xf]
        %v456 = vld [vmem:[%s1 + $0x8] sm:$0xf]
        %v457 = vld [vmem:[%s1 + $0xc] sm:$0xf]
        %v458 = vld [vmem:[%s2] sm:$0x1]
        %v460 = vlaneseq
        %v461 = vshrl.u32 %v460, 7
        %v462 = vsub.s32 0, %v461
        %v463 = vrot.slane %v458, %v462
        %v469 = vunpack.c.l.b16 %v454
        %v470 = vunpack.c.l.b16 %v455
        %v471 = vunpack.c.l.b16 %v456
        %v472 = vunpack.c.l.b16 %v457
        %v473 = vpack.c.b16 %v470, %v469
        %v474 = vpack.c.b16 %v472, %v471
        %vm477 = vcmask 261120
        %v479 = vsel %vm477, %v453, 0
        %481 = vmatprep.subr.bf16.mxu0 0
        %482 = vmatpush1.bf16.msra.mxu0 %v473
        %483 = vmatprep.subr.bf16.mxu0 0
        %484 = vmatpush1.bf16.msra.mxu0 %v474
        %485 = vmatprep.subr.bf16.mxu0 0
        %486 = vmatpush1.bf16.msra.mxu0 0
        %487 = vmatprep.subr.bf16.mxu0 0
        %488 = vmatpush1.bf16.msra.mxu0 0
        %489 = vmatprep.subr.bf16.mxu0 0
        %490 = vmatpush1.bf16.msra.mxu0 0
        %491 = vmatprep.subr.bf16.mxu0 0
        %492 = vmatpush1.bf16.msra.mxu0 0
        %493 = vmatprep.subr.bf16.mxu0 0
        %494 = vmatpush1.bf16.msra.mxu0 0
        %495 = vmatprep.subr.bf16.mxu0 0
        %496 = vmatpush1.bf16.msra.mxu0 0
        %497 = vmatprep.subr.bf16.mxu0 0
        %498 = vmatpush1.bf16.msra.mxu0 0
        %499 = vmatprep.subr.bf16.mxu0 0
        %500 = vmatpush1.bf16.msra.mxu0 0
        %501 = vmatprep.subr.bf16.mxu0 0
        %502 = vmatpush1.bf16.msra.mxu0 0
        %503 = vmatprep.subr.bf16.mxu0 0
        %504 = vmatpush1.bf16.msra.mxu0 0
        %505 = vmatprep.subr.bf16.mxu0 0
        %506 = vmatpush1.bf16.msra.mxu0 0
        %507 = vmatprep.subr.bf16.mxu0 0
        %508 = vmatpush1.bf16.msra.mxu0 0
        %509 = vmatprep.subr.bf16.mxu0 0
        %510 = vmatpush1.bf16.msra.mxu0 0
        %511 = vmatprep.subr.bf16.mxu0 0
        %512 = vmatpush1.bf16.msra.mxu0 0
        %513 = vmatprep.mubr.bf16.mxu0 0
        %514 = vmatmul.mubr.bf16.gmra.mrb[0].mxu0 %v479
        %v515 = vpop.f32.mrb[0].mxu0
        %v516 = vadd.f32 %v463, %v515
        %v517 = vpop.f32.mrb[0].mxu0
        %v518 = vpop.f32.mrb[0].mxu0
        %v519 = vpop.f32.mrb[0].mxu0
        %520 = vdwg.mxu0
        %v521 = vpack.c.bf16 %v516, %v516
        %523 = vrot.lane.b32.xlu0 %v521, 96
        %v524 = vpop.permute.xlu0 %523
        %vm525 = vcmask 64512
        %v527 = vsel %vm525, %v521, 0
        %v530 = vsel %vm525, %v524, 0
        %532 = vmatprep.subr.bf16.mxu0 0
        %533 = vmatpush1.bf16.xpose.msra.mxu0 %v530
        %534 = vmatprep.subr.bf16.mxu0 0
        %535 = vmatpush1.bf16.xpose.msra.mxu0 0
        %536 = vmatprep.subr.bf16.mxu0 0
        %537 = vmatpush1.bf16.xpose.msra.mxu0 0
        %538 = vmatprep.subr.bf16.mxu0 0
        %539 = vmatpush1.bf16.xpose.msra.mxu0 0
        %540 = vmatprep.subr.bf16.mxu0 0
        %541 = vmatpush1.bf16.xpose.msra.mxu0 0
        %542 = vmatprep.subr.bf16.mxu0 0
        %543 = vmatpush1.bf16.xpose.msra.mxu0 0
        %544 = vmatprep.subr.bf16.mxu0 0
        %545 = vmatpush1.bf16.xpose.msra.mxu0 0
        %546 = vmatprep.subr.bf16.mxu0 0
        %547 = vmatpush1.bf16.xpose.msra.mxu0 0
        %548 = vmatprep.subr.bf16.mxu0 0
        %549 = vmatpush1.bf16.xpose.msra.mxu0 0
        %550 = vmatprep.subr.bf16.mxu0 0
        %551 = vmatpush1.bf16.xpose.msra.mxu0 0
        %552 = vmatprep.subr.bf16.mxu0 0
        %553 = vmatpush1.bf16.xpose.msra.mxu0 0
        %554 = vmatprep.subr.bf16.mxu0 0
        %555 = vmatpush1.bf16.xpose.msra.mxu0 0
        %556 = vmatprep.subr.bf16.mxu0 0
        %557 = vmatpush1.bf16.xpose.msra.mxu0 0
        %558 = vmatprep.subr.bf16.mxu0 0
        %559 = vmatpush1.bf16.xpose.msra.mxu0 0
        %560 = vmatprep.subr.bf16.mxu0 0
        %561 = vmatpush1.bf16.xpose.msra.mxu0 0
        %562 = vmatprep.subr.bf16.mxu0 0
        %563 = vmatpush1.bf16.xpose.msra.mxu0 0
        %564 = vmatprep.mubr.bf16.mxu0 0
        %565 = vmatmul.mubr.bf16.gmra.mrb[0].mxu0 %v527
        %v566 = vpop.f32.mrb[0].mxu0
        %v567 = vadd.f32 0.0, %v566
        %v568 = vpop.f32.mrb[0].mxu0
        %v569 = vpop.f32.mrb[0].mxu0
        %v570 = vpop.f32.mrb[0].mxu0
        %571 = vdwg.mxu0
        %v572 = vsel %vm525, %v567, -inf
        %573 = vmax.xlane.f32.xlu0 %v572
        %v574 = vpop.xlane.xlu0 %573
        %v575 = vsub.f32 %v567, %v574
        %v576 = vmul.f32 %v575, 1.442695
        %v577 = vpow.pop %v576
        %v578 = vsel %vm525, %v577, 0.0
        %579 = vadd.xlane.f32.xlu0 %v578
        %v580 = vpop.xlane.xlu0 %579
        %v581 = vrcp.pop %v580
        %v582 = vmul.f32 %v577, %v581
        %v583 = vpack.c.bf16 %v582, %v582
        %584 = vrot.lane.b32.xlu0 %v521, 64
        %v585 = vpop.permute.xlu0 %584
        %v587 = vsel %vm525, %v583, 0
        %vm589 = vcmask 1043456
        %v591 = vsel %vm589, %v585, 0
        %593 = vmatprep.subr.bf16.mxu0 0
        %594 = vmatpush1.bf16.msra.mxu0 %v591
        %595 = vmatprep.subr.bf16.mxu0 0
        %596 = vmatpush1.bf16.msra.mxu0 0
        %597 = vmatprep.subr.bf16.mxu0 0
        %598 = vmatpush1.bf16.msra.mxu0 0
        %599 = vmatprep.subr.bf16.mxu0 0
        %600 = vmatpush1.bf16.msra.mxu0 0
        %601 = vmatprep.subr.bf16.mxu0 0
        %602 = vmatpush1.bf16.msra.mxu0 0
        %603 = vmatprep.subr.bf16.mxu0 0
        %604 = vmatpush1.bf16.msra.mxu0 0
        %605 = vmatprep.subr.bf16.mxu0 0
        %606 = vmatpush1.bf16.msra.mxu0 0
        %607 = vmatprep.subr.bf16.mxu0 0
        %608 = vmatpush1.bf16.msra.mxu0 0
        %609 = vmatprep.subr.bf16.mxu0 0
        %610 = vmatpush1.bf16.msra.mxu0 0
        %611 = vmatprep.subr.bf16.mxu0 0
        %612 = vmatpush1.bf16.msra.mxu0 0
        %613 = vmatprep.subr.bf16.mxu0 0
        %614 = vmatpush1.bf16.msra.mxu0 0
        %615 = vmatprep.subr.bf16.mxu0 0
        %616 = vmatpush1.bf16.msra.mxu0 0
        %617 = vmatprep.subr.bf16.mxu0 0
        %618 = vmatpush1.bf16.msra.mxu0 0
        %619 = vmatprep.subr.bf16.mxu0 0
        %620 = vmatpush1.bf16.msra.mxu0 0
        %621 = vmatprep.subr.bf16.mxu0 0
        %622 = vmatpush1.bf16.msra.mxu0 0
        %623 = vmatprep.subr.bf16.mxu0 0
        %624 = vmatpush1.bf16.msra.mxu0 0
        %625 = vmatprep.mubr.bf16.mxu0 0
        %626 = vmatmul.mubr.bf16.gmra.mrb[0].mxu0 %v587
        %v627 = vpop.f32.mrb[0].mxu0
        %v628 = vadd.f32 0.0, %v627
        %v629 = vpop.f32.mrb[0].mxu0
        %v630 = vpop.f32.mrb[0].mxu0
        %v631 = vpop.f32.mrb[0].mxu0
        %632 = vdwg.mxu0
        %633 = vrot.lane.b32.xlu0 %v521, 120
        %v634 = vpop.permute.xlu0 %633
        %635 = vrot.lane.b32.xlu0 %v521, 88
        %v636 = vpop.permute.xlu0 %635
        %v638 = vsel %vm525, %v634, 0
        %v641 = vsel %vm525, %v636, 0
        %643 = vmatprep.subr.bf16.mxu0 0
        %644 = vmatpush1.bf16.xpose.msra.mxu0 %v641
        %645 = vmatprep.subr.bf16.mxu0 0
        %646 = vmatpush1.bf16.xpose.msra.mxu0 0
        %647 = vmatprep.subr.bf16.mxu0 0
        %648 = vmatpush1.bf16.xpose.msra.mxu0 0
        %649 = vmatprep.subr.bf16.mxu0 0
        %650 = vmatpush1.bf16.xpose.msra.mxu0 0
        %651 = vmatprep.subr.bf16.mxu0 0
        %652 = vmatpush1.bf16.xpose.msra.mxu0 0
        %653 = vmatprep.subr.bf16.mxu0 0
        %654 = vmatpush1.bf16.xpose.msra.mxu0 0
        %655 = vmatprep.subr.bf16.mxu0 0
        %656 = vmatpush1.bf16.xpose.msra.mxu0 0
        %657 = vmatprep.subr.bf16.mxu0 0
        %658 = vmatpush1.bf16.xpose.msra.mxu0 0
        %659 = vmatprep.subr.bf16.mxu0 0
        %660 = vmatpush1.bf16.xpose.msra.mxu0 0
        %661 = vmatprep.subr.bf16.mxu0 0
        %662 = vmatpush1.bf16.xpose.msra.mxu0 0
        %663 = vmatprep.subr.bf16.mxu0 0
        %664 = vmatpush1.bf16.xpose.msra.mxu0 0
        %665 = vmatprep.subr.bf16.mxu0 0
        %666 = vmatpush1.bf16.xpose.msra.mxu0 0
        %667 = vmatprep.subr.bf16.mxu0 0
        %668 = vmatpush1.bf16.xpose.msra.mxu0 0
        %669 = vmatprep.subr.bf16.mxu0 0
        %670 = vmatpush1.bf16.xpose.msra.mxu0 0
        %671 = vmatprep.subr.bf16.mxu0 0
        %672 = vmatpush1.bf16.xpose.msra.mxu0 0
        %673 = vmatprep.subr.bf16.mxu0 0
        %674 = vmatpush1.bf16.xpose.msra.mxu0 0
        %675 = vmatprep.mubr.bf16.mxu0 0
        %676 = vmatmul.mubr.bf16.gmra.mrb[0].mxu0 %v638
        %v677 = vpop.f32.mrb[0].mxu0
        %v678 = vadd.f32 0.0, %v677
        %v679 = vpop.f32.mrb[0].mxu0
        %v680 = vpop.f32.mrb[0].mxu0
        %v681 = vpop.f32.mrb[0].mxu0
        %682 = vdwg.mxu0
        %v683 = vsel %vm525, %v678, -inf
        %684 = vmax.xlane.f32.xlu0 %v683
        %v685 = vpop.xlane.xlu0 %684
        %v686 = vsub.f32 %v678, %v685
        %v687 = vmul.f32 %v686, 1.442695
        %v688 = vpow.pop %v687
        %v689 = vsel %vm525, %v688, 0.0
        %690 = vadd.xlane.f32.xlu0 %v689
        %v691 = vpop.xlane.xlu0 %690
        %v692 = vrcp.pop %v691
        %v693 = vmul.f32 %v688, %v692
        %v694 = vpack.c.bf16 %v693, %v693
        %695 = vrot.lane.b32.xlu0 %v521, 56
        %v696 = vpop.permute.xlu0 %695
        %v698 = vsel %vm525, %v694, 0
        %v701 = vsel %vm589, %v696, 0
        %703 = vmatprep.subr.bf16.mxu0 0
        %704 = vmatpush1.bf16.msra.mxu0 %v701
        %705 = vmatprep.subr.bf16.mxu0 0
        %706 = vmatpush1.bf16.msra.mxu0 0
        %707 = vmatprep.subr.bf16.mxu0 0
        %708 = vmatpush1.bf16.msra.mxu0 0
        %709 = vmatprep.subr.bf16.mxu0 0
        %710 = vmatpush1.bf16.msra.mxu0 0
        %711 = vmatprep.subr.bf16.mxu0 0
        %712 = vmatpush1.bf16.msra.mxu0 0
        %713 = vmatprep.subr.bf16.mxu0 0
        %714 = vmatpush1.bf16.msra.mxu0 0
        %715 = vmatprep.subr.bf16.mxu0 0
        %716 = vmatpush1.bf16.msra.mxu0 0
        %717 = vmatprep.subr.bf16.mxu0 0
        %718 = vmatpush1.bf16.msra.mxu0 0
        %719 = vmatprep.subr.bf16.mxu0 0
        %720 = vmatpush1.bf16.msra.mxu0 0
        %721 = vmatprep.subr.bf16.mxu0 0
        %722 = vmatpush1.bf16.msra.mxu0 0
        %723 = vmatprep.subr.bf16.mxu0 0
        %724 = vmatpush1.bf16.msra.mxu0 0
        %725 = vmatprep.subr.bf16.mxu0 0
        %726 = vmatpush1.bf16.msra.mxu0 0
        %727 = vmatprep.subr.bf16.mxu0 0
        %728 = vmatpush1.bf16.msra.mxu0 0
        %729 = vmatprep.subr.bf16.mxu0 0
        %730 = vmatpush1.bf16.msra.mxu0 0
        %731 = vmatprep.subr.bf16.mxu0 0
        %732 = vmatpush1.bf16.msra.mxu0 0
        %733 = vmatprep.subr.bf16.mxu0 0
        %734 = vmatpush1.bf16.msra.mxu0 0
        %735 = vmatprep.mubr.bf16.mxu0 0
        %736 = vmatmul.mubr.bf16.gmra.mrb[0].mxu0 %v698
        %v737 = vpop.f32.mrb[0].mxu0
        %v738 = vadd.f32 0.0, %v737
        %v739 = vpop.f32.mrb[0].mxu0
        %v740 = vpop.f32.mrb[0].mxu0
        %v741 = vpop.f32.mrb[0].mxu0
        %742 = vdwg.mxu0
        %743 = vrot.lane.b32.xlu0 %v521, 112
        %v744 = vpop.permute.xlu0 %743
        %745 = vrot.lane.b32.xlu0 %v521, 80
        %v746 = vpop.permute.xlu0 %745
        %v748 = vsel %vm525, %v744, 0
        %v751 = vsel %vm525, %v746, 0
        %753 = vmatprep.subr.bf16.mxu0 0
        %754 = vmatpush1.bf16.xpose.msra.mxu0 %v751
        %755 = vmatprep.subr.bf16.mxu0 0
        %756 = vmatpush1.bf16.xpose.msra.mxu0 0
        %757 = vmatprep.subr.bf16.mxu0 0
        %758 = vmatpush1.bf16.xpose.msra.mxu0 0
        %759 = vmatprep.subr.bf16.mxu0 0
        %760 = vmatpush1.bf16.xpose.msra.mxu0 0
        %761 = vmatprep.subr.bf16.mxu0 0
        %762 = vmatpush1.bf16.xpose.msra.mxu0 0
        %763 = vmatprep.subr.bf16.mxu0 0
        %764 = vmatpush1.bf16.xpose.msra.mxu0 0
        %765 = vmatprep.subr.bf16.mxu0 0
        %766 = vmatpush1.bf16.xpose.msra.mxu0 0
        %767 = vmatprep.subr.bf16.mxu0 0
        %768 = vmatpush1.bf16.xpose.msra.mxu0 0
        %769 = vmatprep.subr.bf16.mxu0 0
        %770 = vmatpush1.bf16.xpose.msra.mxu0 0
        %771 = vmatprep.subr.bf16.mxu0 0
        %772 = vmatpush1.bf16.xpose.msra.mxu0 0
        %773 = vmatprep.subr.bf16.mxu0 0
        %774 = vmatpush1.bf16.xpose.msra.mxu0 0
        %775 = vmatprep.subr.bf16.mxu0 0
        %776 = vmatpush1.bf16.xpose.msra.mxu0 0
        %777 = vmatprep.subr.bf16.mxu0 0
        %778 = vmatpush1.bf16.xpose.msra.mxu0 0
        %779 = vmatprep.subr.bf16.mxu0 0
        %780 = vmatpush1.bf16.xpose.msra.mxu0 0
        %781 = vmatprep.subr.bf16.mxu0 0
        %782 = vmatpush1.bf16.xpose.msra.mxu0 0
        %783 = vmatprep.subr.bf16.mxu0 0
        %784 = vmatpush1.bf16.xpose.msra.mxu0 0
        %785 = vmatprep.mubr.bf16.mxu0 0
        %786 = vmatmul.mubr.bf16.gmra.mrb[0].mxu0 %v748
        %v787 = vpop.f32.mrb[0].mxu0
        %v788 = vadd.f32 0.0, %v787
        %v789 = vpop.f32.mrb[0].mxu0
        %v790 = vpop.f32.mrb[0].mxu0
        %v791 = vpop.f32.mrb[0].mxu0
        %792 = vdwg.mxu0
        %v793 = vsel %vm525, %v788, -inf
        %794 = vmax.xlane.f32.xlu0 %v793
        %v795 = vpop.xlane.xlu0 %794
        %v796 = vsub.f32 %v788, %v795
        %v797 = vmul.f32 %v796, 1.442695
        %v798 = vpow.pop %v797
        %v799 = vsel %vm525, %v798, 0.0
        %800 = vadd.xlane.f32.xlu0 %v799
        %v801 = vpop.xlane.xlu0 %800
        %v802 = vrcp.pop %v801
        %v803 = vmul.f32 %v798, %v802
        %v804 = vpack.c.bf16 %v803, %v803
        %805 = vrot.lane.b32.xlu0 %v521, 48
        %v806 = vpop.permute.xlu0 %805
        %v808 = vsel %vm525, %v804, 0
        %v811 = vsel %vm589, %v806, 0
        %813 = vmatprep.subr.bf16.mxu0 0
        %814 = vmatpush1.bf16.msra.mxu0 %v811
        %815 = vmatprep.subr.bf16.mxu0 0
        %816 = vmatpush1.bf16.msra.mxu0 0
        %817 = vmatprep.subr.bf16.mxu0 0
        %818 = vmatpush1.bf16.msra.mxu0 0
        %819 = vmatprep.subr.bf16.mxu0 0
        %820 = vmatpush1.bf16.msra.mxu0 0
        %821 = vmatprep.subr.bf16.mxu0 0
        %822 = vmatpush1.bf16.msra.mxu0 0
        %823 = vmatprep.subr.bf16.mxu0 0
        %824 = vmatpush1.bf16.msra.mxu0 0
        %825 = vmatprep.subr.bf16.mxu0 0
        %826 = vmatpush1.bf16.msra.mxu0 0
        %827 = vmatprep.subr.bf16.mxu0 0
        %828 = vmatpush1.bf16.msra.mxu0 0
        %829 = vmatprep.subr.bf16.mxu0 0
        %830 = vmatpush1.bf16.msra.mxu0 0
        %831 = vmatprep.subr.bf16.mxu0 0
        %832 = vmatpush1.bf16.msra.mxu0 0
        %833 = vmatprep.subr.bf16.mxu0 0
        %834 = vmatpush1.bf16.msra.mxu0 0
        %835 = vmatprep.subr.bf16.mxu0 0
        %836 = vmatpush1.bf16.msra.mxu0 0
        %837 = vmatprep.subr.bf16.mxu0 0
        %838 = vmatpush1.bf16.msra.mxu0 0
        %839 = vmatprep.subr.bf16.mxu0 0
        %840 = vmatpush1.bf16.msra.mxu0 0
        %841 = vmatprep.subr.bf16.mxu0 0
        %842 = vmatpush1.bf16.msra.mxu0 0
        %843 = vmatprep.subr.bf16.mxu0 0
        %844 = vmatpush1.bf16.msra.mxu0 0
        %845 = vmatprep.mubr.bf16.mxu0 0
        %846 = vmatmul.mubr.bf16.gmra.mrb[0].mxu0 %v808
        %v847 = vpop.f32.mrb[0].mxu0
        %v848 = vadd.f32 0.0, %v847
        %v849 = vpop.f32.mrb[0].mxu0
        %v850 = vpop.f32.mrb[0].mxu0
        %v851 = vpop.f32.mrb[0].mxu0
        %852 = vdwg.mxu0
        %853 = vrot.lane.b32.xlu0 %v521, 104
        %v854 = vpop.permute.xlu0 %853
        %855 = vrot.lane.b32.xlu0 %v521, 72
        %v856 = vpop.permute.xlu0 %855
        %v858 = vsel %vm525, %v854, 0
        %v861 = vsel %vm525, %v856, 0
        %863 = vmatprep.subr.bf16.mxu0 0
        %864 = vmatpush1.bf16.xpose.msra.mxu0 %v861
        %865 = vmatprep.subr.bf16.mxu0 0
        %866 = vmatpush1.bf16.xpose.msra.mxu0 0
        %867 = vmatprep.subr.bf16.mxu0 0
        %868 = vmatpush1.bf16.xpose.msra.mxu0 0
        %869 = vmatprep.subr.bf16.mxu0 0
        %870 = vmatpush1.bf16.xpose.msra.mxu0 0
        %871 = vmatprep.subr.bf16.mxu0 0
        %872 = vmatpush1.bf16.xpose.msra.mxu0 0
        %873 = vmatprep.subr.bf16.mxu0 0
        %874 = vmatpush1.bf16.xpose.msra.mxu0 0
        %875 = vmatprep.subr.bf16.mxu0 0
        %876 = vmatpush1.bf16.xpose.msra.mxu0 0
        %877 = vmatprep.subr.bf16.mxu0 0
        %878 = vmatpush1.bf16.xpose.msra.mxu0 0
        %879 = vmatprep.subr.bf16.mxu0 0
        %880 = vmatpush1.bf16.xpose.msra.mxu0 0
        %881 = vmatprep.subr.bf16.mxu0 0
        %882 = vmatpush1.bf16.xpose.msra.mxu0 0
        %883 = vmatprep.subr.bf16.mxu0 0
        %884 = vmatpush1.bf16.xpose.msra.mxu0 0
        %885 = vmatprep.subr.bf16.mxu0 0
        %886 = vmatpush1.bf16.xpose.msra.mxu0 0
        %887 = vmatprep.subr.bf16.mxu0 0
        %888 = vmatpush1.bf16.xpose.msra.mxu0 0
        %889 = vmatprep.subr.bf16.mxu0 0
        %890 = vmatpush1.bf16.xpose.msra.mxu0 0
        %891 = vmatprep.subr.bf16.mxu0 0
        %892 = vmatpush1.bf16.xpose.msra.mxu0 0
        %893 = vmatprep.subr.bf16.mxu0 0
        %894 = vmatpush1.bf16.xpose.msra.mxu0 0
        %895 = vmatprep.mubr.bf16.mxu0 0
        %896 = vmatmul.mubr.bf16.gmra.mrb[0].mxu0 %v858
        %v897 = vpop.f32.mrb[0].mxu0
        %v898 = vadd.f32 0.0, %v897
        %v899 = vpop.f32.mrb[0].mxu0
        %v900 = vpop.f32.mrb[0].mxu0
        %v901 = vpop.f32.mrb[0].mxu0
        %902 = vdwg.mxu0
        %v903 = vsel %vm525, %v898, -inf
        %904 = vmax.xlane.f32.xlu0 %v903
        %v905 = vpop.xlane.xlu0 %904
        %v906 = vsub.f32 %v898, %v905
        %v907 = vmul.f32 %v906, 1.442695
        %v908 = vpow.pop %v907
        %v909 = vsel %vm525, %v908, 0.0
        %910 = vadd.xlane.f32.xlu0 %v909
        %v911 = vpop.xlane.xlu0 %910
        %v912 = vrcp.pop %v911
        %v913 = vmul.f32 %v908, %v912
        %v914 = vpack.c.bf16 %v913, %v913
        %915 = vrot.lane.b32.xlu0 %v521, 40
        %v916 = vpop.permute.xlu0 %915
        %v918 = vsel %vm525, %v914, 0
        %v921 = vsel %vm589, %v916, 0
        %923 = vmatprep.subr.bf16.mxu0 0
        %924 = vmatpush1.bf16.msra.mxu0 %v921
        %925 = vmatprep.subr.bf16.mxu0 0
        %926 = vmatpush1.bf16.msra.mxu0 0
        %927 = vmatprep.subr.bf16.mxu0 0
        %928 = vmatpush1.bf16.msra.mxu0 0
        %929 = vmatprep.subr.bf16.mxu0 0
        %930 = vmatpush1.bf16.msra.mxu0 0
        %931 = vmatprep.subr.bf16.mxu0 0
        %932 = vmatpush1.bf16.msra.mxu0 0
        %933 = vmatprep.subr.bf16.mxu0 0
        %934 = vmatpush1.bf16.msra.mxu0 0
        %935 = vmatprep.subr.bf16.mxu0 0
        %936 = vmatpush1.bf16.msra.mxu0 0
        %937 = vmatprep.subr.bf16.mxu0 0
        %938 = vmatpush1.bf16.msra.mxu0 0
        %939 = vmatprep.subr.bf16.mxu0 0
        %940 = vmatpush1.bf16.msra.mxu0 0
        %941 = vmatprep.subr.bf16.mxu0 0
        %942 = vmatpush1.bf16.msra.mxu0 0
        %943 = vmatprep.subr.bf16.mxu0 0
        %944 = vmatpush1.bf16.msra.mxu0 0
        %945 = vmatprep.subr.bf16.mxu0 0
        %946 = vmatpush1.bf16.msra.mxu0 0
        %947 = vmatprep.subr.bf16.mxu0 0
        %948 = vmatpush1.bf16.msra.mxu0 0
        %949 = vmatprep.subr.bf16.mxu0 0
        %950 = vmatpush1.bf16.msra.mxu0 0
        %951 = vmatprep.subr.bf16.mxu0 0
        %952 = vmatpush1.bf16.msra.mxu0 0
        %953 = vmatprep.subr.bf16.mxu0 0
        %954 = vmatpush1.bf16.msra.mxu0 0
        %955 = vmatprep.mubr.bf16.mxu0 0
        %956 = vmatmul.mubr.bf16.gmra.mrb[0].mxu0 %v918
        %v957 = vpop.f32.mrb[0].mxu0
        %v958 = vadd.f32 0.0, %v957
        %v959 = vpop.f32.mrb[0].mxu0
        %v960 = vpop.f32.mrb[0].mxu0
        %v961 = vpop.f32.mrb[0].mxu0
        %962 = vdwg.mxu0
        %964 = vrot.lane.b32.xlu0 %v738, 8
        %v965 = vpop.permute.xlu0 %964
        %968 = vrot.lane.b32.xlu0 %v848, 16
        %v969 = vpop.permute.xlu0 %968
        %972 = vrot.lane.b32.xlu0 %v958, 24
        %v973 = vpop.permute.xlu0 %972
        %v975 = vsel %vm525, %v628, %v965
        %vm976 = vcmask 130048
        %v977 = vsel %vm976, %v975, %v969
        %vm978 = vcmask 195584
        %v979 = vsel %vm978, %v977, %v973
        %v980 = vpack.c.bf16 %v979, %v979
        %v981 = vld [vmem:[%s3] sm:$0xf]
        %v982 = vld [vmem:[%s3 + $0x4] sm:$0xf]
        %v983 = vld [vmem:[%s3 + $0x8] sm:$0xf]
        %v984 = vld [vmem:[%s3 + $0xc] sm:$0xf]
        %v985 = vld [vmem:[%s4] sm:$0x1]
        %v987 = vlaneseq
        %v988 = vshrl.u32 %v987, 7
        %v989 = vsub.s32 0, %v988
        %v990 = vrot.slane %v985, %v989
        %v996 = vunpack.c.l.b16 %v981
        %v997 = vunpack.c.l.b16 %v982
        %v998 = vunpack.c.l.b16 %v983
        %v999 = vunpack.c.l.b16 %v984
        %v1000 = vpack.c.b16 %v997, %v996
        %v1001 = vpack.c.b16 %v999, %v998
        %v1005 = vsel %vm477, %v980, 0
        %1007 = vmatprep.subr.bf16.mxu0 0
        %1008 = vmatpush1.bf16.msra.mxu0 %v1000
        %1009 = vmatprep.subr.bf16.mxu0 0
        %1010 = vmatpush1.bf16.msra.mxu0 %v1001
        %1011 = vmatprep.subr.bf16.mxu0 0
        %1012 = vmatpush1.bf16.msra.mxu0 0
        %1013 = vmatprep.subr.bf16.mxu0 0
        %1014 = vmatpush1.bf16.msra.mxu0 0
        %1015 = vmatprep.subr.bf16.mxu0 0
        %1016 = vmatpush1.bf16.msra.mxu0 0
        %1017 = vmatprep.subr.bf16.mxu0 0
        %1018 = vmatpush1.bf16.msra.mxu0 0
        %1019 = vmatprep.subr.bf16.mxu0 0
        %1020 = vmatpush1.bf16.msra.mxu0 0
        %1021 = vmatprep.subr.bf16.mxu0 0
        %1022 = vmatpush1.bf16.msra.mxu0 0
        %1023 = vmatprep.subr.bf16.mxu0 0
        %1024 = vmatpush1.bf16.msra.mxu0 0
        %1025 = vmatprep.subr.bf16.mxu0 0
        %1026 = vmatpush1.bf16.msra.mxu0 0
        %1027 = vmatprep.subr.bf16.mxu0 0
        %1028 = vmatpush1.bf16.msra.mxu0 0
        %1029 = vmatprep.subr.bf16.mxu0 0
        %1030 = vmatpush1.bf16.msra.mxu0 0
        %1031 = vmatprep.subr.bf16.mxu0 0
        %1032 = vmatpush1.bf16.msra.mxu0 0
        %1033 = vmatprep.subr.bf16.mxu0 0
        %1034 = vmatpush1.bf16.msra.mxu0 0
        %1035 = vmatprep.subr.bf16.mxu0 0
        %1036 = vmatpush1.bf16.msra.mxu0 0
        %1037 = vmatprep.subr.bf16.mxu0 0
        %1038 = vmatpush1.bf16.msra.mxu0 0
        %1039 = vmatprep.mubr.bf16.mxu0 0
        %1040 = vmatmul.mubr.bf16.gmra.mrb[0].mxu0 %v1005
        %v1041 = vpop.f32.mrb[0].mxu0
        %v1042 = vadd.f32 %v990, %v1041
        %v1043 = vpop.f32.mrb[0].mxu0
        %v1044 = vpop.f32.mrb[0].mxu0
        %v1045 = vpop.f32.mrb[0].mxu0
        %1046 = vdwg.mxu0
        %v1047 = vadd.f32 %v452, %v1042
        %v1048 = vld [vmem:[%s5] sm:$0x1]
        %v1049 = vld [vmem:[%s6] sm:$0x1]
        %v1050 = vsel %vm477, %v1047, 0.0
        %1051 = vadd.xlane.f32.xlu0 %v1050
        %v1052 = vpop.xlane.xlu0 %1051
        %v1053 = vrcp.pop 32.0
        %v1054 = vmul.f32 %v1052, %v1053
        %v1055 = vsub.f32 %v1047, %v1054
        %v1056 = vmul.f32 %v1055, %v1055
        %v1057 = vsel %vm477, %v1056, 0.0
        %1058 = vadd.xlane.f32.xlu0 %v1057
        %v1059 = vpop.xlane.xlu0 %1058
        %v1060 = vmul.f32 %v1059, %v1053
        %v1061 = vadd.f32 %v1060, 1e-05
        %v1062 = vrsqrt.pop %v1061
        %v1063 = vmul.f32 %v1055, %v1062
        %v1065 = vlaneseq
        %v1066 = vshrl.u32 %v1065, 7
        %v1067 = vsub.s32 0, %v1066
        %v1068 = vrot.slane %v1048, %v1067
        %v1070 = vmul.f32 %v1063, %v1068
        %v1072 = vlaneseq
        %v1073 = vshrl.u32 %v1072, 7
        %v1074 = vsub.s32 0, %v1073
        %v1075 = vrot.slane %v1049, %v1074
        %v1077 = vadd.f32 %v1070, %v1075
        %v1078 = vpack.c.bf16 %v1077, %v1077
        %v1079 = vld [vmem:[#allocation2] sm:$0xf]
        %v1080 = vld [vmem:[#allocation2 + $0x4] sm:$0xf]
        %v1081 = vld [vmem:[#allocation2 + $0x8] sm:$0xf]
        %v1082 = vld [vmem:[#allocation2 + $0xc] sm:$0xf]
        %v1083 = vld [vmem:[%s8] sm:$0x1]
        %v1085 = vlaneseq
        %v1086 = vshrl.u32 %v1085, 7
        %v1087 = vsub.s32 0, %v1086
        %v1088 = vrot.slane %v1083, %v1087
        %v1094 = vunpack.c.l.b16 %v1079
        %v1095 = vunpack.c.l.b16 %v1080
        %v1096 = vunpack.c.l.b16 %v1081
        %v1097 = vunpack.c.l.b16 %v1082
        %v1098 = vpack.c.b16 %v1095, %v1094
        %v1099 = vpack.c.b16 %v1097, %v1096
        %v1103 = vsel %vm477, %v1078, 0
        %1105 = vmatprep.subr.bf16.mxu0 0
        %1106 = vmatpush1.bf16.msra.mxu0 %v1098
        %1107 = vmatprep.subr.bf16.mxu0 0
        %1108 = vmatpush1.bf16.msra.mxu0 %v1099
        %1109 = vmatprep.subr.bf16.mxu0 0
        %1110 = vmatpush1.bf16.msra.mxu0 0
        %1111 = vmatprep.subr.bf16.mxu0 0
        %1112 = vmatpush1.bf16.msra.mxu0 0
        %1113 = vmatprep.subr.bf16.mxu0 0
        %1114 = vmatpush1.bf16.msra.mxu0 0
        %1115 = vmatprep.subr.bf16.mxu0 0
        %1116 = vmatpush1.bf16.msra.mxu0 0
        %1117 = vmatprep.subr.bf16.mxu0 0
        %1118 = vmatpush1.bf16.msra.mxu0 0
        %1119 = vmatprep.subr.bf16.mxu0 0
        %1120 = vmatpush1.bf16.msra.mxu0 0
        %1121 = vmatprep.subr.bf16.mxu0 0
        %1122 = vmatpush1.bf16.msra.mxu0 0
        %1123 = vmatprep.subr.bf16.mxu0 0
        %1124 = vmatpush1.bf16.msra.mxu0 0
        %1125 = vmatprep.subr.bf16.mxu0 0
        %1126 = vmatpush1.bf16.msra.mxu0 0
        %1127 = vmatprep.subr.bf16.mxu0 0
        %1128 = vmatpush1.bf16.msra.mxu0 0
        %1129 = vmatprep.subr.bf16.mxu0 0
        %1130 = vmatpush1.bf16.msra.mxu0 0
        %1131 = vmatprep.subr.bf16.mxu0 0
        %1132 = vmatpush1.bf16.msra.mxu0 0
        %1133 = vmatprep.subr.bf16.mxu0 0
        %1134 = vmatpush1.bf16.msra.mxu0 0
        %1135 = vmatprep.subr.bf16.mxu0 0
        %1136 = vmatpush1.bf16.msra.mxu0 0
        %1137 = vmatprep.mubr.bf16.mxu0 0
        %1138 = vmatmul.mubr.bf16.gmra.mrb[0].mxu0 %v1103
        %v1139 = vpop.f32.mrb[0].mxu0
        %v1140 = vadd.f32 %v1088, %v1139
        %v1141 = vpop.f32.mrb[0].mxu0
        %v1142 = vpop.f32.mrb[0].mxu0
        %v1143 = vpop.f32.mrb[0].mxu0
        %1144 = vdwg.mxu0
        %v1145 = vmax.f32 %v1140, 0.0
        %v1146 = vpack.c.bf16 %v1145, %v1145
        %v1147 = vld [vmem:[%s9] sm:$0xf]
        %v1148 = vld [vmem:[%s9 + $0x4] sm:$0xf]
        %v1149 = vld [vmem:[%s9 + $0x8] sm:$0xf]
        %v1150 = vld [vmem:[%s9 + $0xc] sm:$0xf]
        %v1151 = vld [vmem:[%s9 + $0x10] sm:$0xf]
        %v1152 = vld [vmem:[%s9 + $0x14] sm:$0xf]
        %v1153 = vld [vmem:[%s9 + $0x18] sm:$0xf]
        %v1154 = vld [vmem:[%s9 + $0x1c] sm:$0xf]
        %v1155 = vld [vmem:[%s10] sm:$0x1]
        %v1157 = vlaneseq
        %v1158 = vshrl.u32 %v1157, 7
        %v1159 = vsub.s32 0, %v1158
        %v1160 = vrot.slane %v1155, %v1159
        %v1170 = vunpack.c.l.b16 %v1147
        %v1171 = vunpack.c.l.b16 %v1148
        %v1172 = vunpack.c.l.b16 %v1149
        %v1173 = vunpack.c.l.b16 %v1150
        %v1174 = vunpack.c.l.b16 %v1151
        %v1175 = vunpack.c.l.b16 %v1152
        %v1176 = vunpack.c.l.b16 %v1153
        %v1177 = vunpack.c.l.b16 %v1154
        %v1178 = vpack.c.b16 %v1171, %v1170
        %v1179 = vpack.c.b16 %v1173, %v1172
        %v1180 = vpack.c.b16 %v1175, %v1174
        %v1181 = vpack.c.b16 %v1177, %v1176
        %vm1186 = vcmask 523264
        %v1188 = vsel %vm1186, %v1146, 0
        %1190 = vmatprep.subr.bf16.mxu0 0
        %1191 = vmatpush1.bf16.msra.mxu0 %v1178
        %1192 = vmatprep.subr.bf16.mxu0 0
        %1193 = vmatpush1.bf16.msra.mxu0 %v1179
        %1194 = vmatprep.subr.bf16.mxu0 0
        %1195 = vmatpush1.bf16.msra.mxu0 %v1180
        %1196 = vmatprep.subr.bf16.mxu0 0
        %1197 = vmatpush1.bf16.msra.mxu0 %v1181
        %1198 = vmatprep.subr.bf16.mxu0 0
        %1199 = vmatpush1.bf16.msra.mxu0 0
        %1200 = vmatprep.subr.bf16.mxu0 0
        %1201 = vmatpush1.bf16.msra.mxu0 0
        %1202 = vmatprep.subr.bf16.mxu0 0
        %1203 = vmatpush1.bf16.msra.mxu0 0
        %1204 = vmatprep.subr.bf16.mxu0 0
        %1205 = vmatpush1.bf16.msra.mxu0 0
        %1206 = vmatprep.subr.bf16.mxu0 0
        %1207 = vmatpush1.bf16.msra.mxu0 0
        %1208 = vmatprep.subr.bf16.mxu0 0
        %1209 = vmatpush1.bf16.msra.mxu0 0
        %1210 = vmatprep.subr.bf16.mxu0 0
        %1211 = vmatpush1.bf16.msra.mxu0 0
        %1212 = vmatprep.subr.bf16.mxu0 0
        %1213 = vmatpush1.bf16.msra.mxu0 0
        %1214 = vmatprep.subr.bf16.mxu0 0
        %1215 = vmatpush1.bf16.msra.mxu0 0
        %1216 = vmatprep.subr.bf16.mxu0 0
        %1217 = vmatpush1.bf16.msra.mxu0 0
        %1218 = vmatprep.subr.bf16.mxu0 0
        %1219 = vmatpush1.bf16.msra.mxu0 0
        %1220 = vmatprep.subr.bf16.mxu0 0
        %1221 = vmatpush1.bf16.msra.mxu0 0
        %1222 = vmatprep.mubr.bf16.mxu0 0
        %1223 = vmatmul.mubr.bf16.gmra.mrb[0].mxu0 %v1188
        %v1224 = vpop.f32.mrb[0].mxu0
        %v1225 = vadd.f32 %v1160, %v1224
        %v1226 = vpop.f32.mrb[0].mxu0
        %v1227 = vpop.f32.mrb[0].mxu0
        %v1228 = vpop.f32.mrb[0].mxu0
        %1229 = vdwg.mxu0
        %v1230 = vadd.f32 %v1077, %v1225
        %v1231 = vld [vmem:[%s11] sm:$0x1]
        %v1232 = vld [vmem:[%s12] sm:$0x1]
        %v1233 = vsel %vm477, %v1230, 0.0
        %1234 = vadd.xlane.f32.xlu0 %v1233
        %v1235 = vpop.xlane.xlu0 %1234
        %v1236 = vmul.f32 %v1235, %v1053
        %v1237 = vsub.f32 %v1230, %v1236
        %v1238 = vmul.f32 %v1237, %v1237
        %v1239 = vsel %vm477, %v1238, 0.0
        %1240 = vadd.xlane.f32.xlu0 %v1239
        %v1241 = vpop.xlane.xlu0 %1240
        %v1242 = vmul.f32 %v1241, %v1053
        %v1243 = vadd.f32 %v1242, 1e-05
        %v1244 = vrsqrt.pop %v1243
        %v1245 = vmul.f32 %v1237, %v1244
        %v1247 = vlaneseq
        %v1248 = vshrl.u32 %v1247, 7
        %v1249 = vsub.s32 0, %v1248
        %v1250 = vrot.slane %v1231, %v1249
        %v1252 = vmul.f32 %v1245, %v1250
        %v1254 = vlaneseq
        %v1255 = vshrl.u32 %v1254, 7
        %v1256 = vsub.s32 0, %v1255
        %v1257 = vrot.slane %v1232, %v1256
        %v1259 = vadd.f32 %v1252, %v1257
        %1260 = vst.msk [vmem:[%s446] sm:$0xff] %vm477, %v1259
        %s1261 = sand.u32 %s314, 1
        %s1262 = scalar_lea.sflag [#allocation4], %s1261
        %s1263 = sand.u32 %s314, 1
        %s1264 = smul.addr %s1263, 8
        %s1265 = scalar_lea.vmem [#allocation5], %s1264
        // Predicated region
        $region77: #{tpu_custom_call.1} parent=71 // pred_check
          %p1266 = pneg %p324
        $region78: #{tpu_custom_call.1} parent=71 // pred_check_branch
          %1268 = sbr.rel (%p1266) target = $region80
        $region79: #{tpu_custom_call.1} parent=71 // pred_region
          %s1270 = ssub.s32 128, 128
          %1271 = vsyncadd %s1262, %s1270
          %s1272 = smul.addr %s28, 128
          %s1273 = scalar_lea.hbm %s13, %s1272
          %s1275 = sshll.u32 %s1265, 4
          %s1276 = int_to_ptr.vmem [resolvable:$true] %s1275
          %1278 = dma.vmem_to_hbm [thread:$0]  %s1276, 128, %s1273, %s1262
        $region80: #{tpu_custom_call.1} parent=71 // pred_fallthru
          _
      $region72: #{tpu_custom_call.1} parent=5 // pred_fallthru
        _
      %p1279 = scmp.le.s32.totalorder 2, %s23
      // Predicated region
      $region81: #{tpu_custom_call.1} parent=5 // pred_check
        %p1280 = pneg %p1279
      $region82: #{tpu_custom_call.1} parent=5 // pred_check_branch
        %1282 = sbr.rel (%p1280) target = $region84
      $region83: #{tpu_custom_call.1} parent=5 // pred_region
        %s1283 = ssub.s32 %s23, 2
        // Predicated region
        $region85: #{tpu_custom_call.1} parent=83 // pred_check
          %p1284 = pneg %p330
        $region86: #{tpu_custom_call.1} parent=83 // pred_check_branch
          %1286 = sbr.rel (%p1284) target = $region88
        $region87: #{tpu_custom_call.1} parent=83 // pred_region
          %s1287 = sand.u32 %s315, 1
          %s1288 = scalar_lea.sflag [#allocation4], %s1287
          %s1289 = sand.u32 %s315, 1
          %s1290 = smul.addr %s1289, 8
          %s1291 = scalar_lea.vmem [#allocation5], %s1290
          %1292 = dma.done %s1288, 128
        $region88: #{tpu_custom_call.1} parent=83 // pred_fallthru
          _
      $region84: #{tpu_custom_call.1} parent=5 // pred_fallthru
        _
    $region6: #{tpu_custom_call.1} parent=1 // loop_footer
      %s27 = sadd.s32 1, %s23
    $region7: #{tpu_custom_call.1} parent=1 // loop_footer_branch
      %22 = sbr.rel target = $region3
    $region8: #{tpu_custom_call.1} parent=1 // loop_exit
      _
    %1293 = vsyncpa [#allocation3], 1
    %s1294 = scalar_lea.sflag [#allocation3], 1
    %1295 = vsyncpa %s1294, 1
    %1296 = vsyncpa [#allocation4], 1
    %s1297 = scalar_lea.sflag [#allocation4], 1
    %1298 = vsyncpa %s1297, 1

</llo_original>
